<compile_context>
chip_gen: v5e
topology: v5e:2x2
jax: 0.10.0
libtpu: 0.0.40
codegen_flags: <defaults>
</compile_context>

<pallas_src>
import jax
import jax.numpy as jnp
from jax.experimental import pallas as pl
from jax.experimental.pallas import tpu as pltpu


def _round_up(x, n):
    return (x + n - 1) // n * n


def _act_kernel(x_ref, e_ref, f_ref, phi_ref, scale_ref, w_ref, b_ref, out_ref):
    # x_ref     : (TB, d_pad)        f32   batch tile
    # e_ref     : (d_pad, k_dense)   f32   0/1 selection matrix        (resident)
    # f_ref     : (1, k_dense)       f32   frequencies, layout [i*N+j] (resident)
    # phi_ref   : (1, k_dense)       f32   phases,      same layout    (resident)
    # scale_ref : (1, k_dense)       f32   inv_std,     same layout    (resident)
    # w_ref     : (k_dense, m_pad)   bf16  betas[k,j]*lambdas[k,i]     (resident)
    # b_ref     : (1, m_pad)         f32   folded bias                 (resident)
    # out_ref   : (TB, m_pad)        f32
    #
    # Lane-dense expansion: x[b,i] lands at lane i*N+j for all j via an exact
    # f32 matmul against the 0/1 selection matrix (MXU, tiny K).
    xe = jnp.dot(x_ref[...], e_ref[...], preferred_element_type=jnp.float32)
    # f32 EUP sin, f32 inv_std scaling, then a single bf16 cast for the MXU.
    s = (jnp.sin(xe * f_ref[...] + phi_ref[...]) * scale_ref[...]).astype(jnp.bfloat16)
    # One MXU matmul with f32 accumulation; padded lanes contribute exactly 0
    # (f = phi = scale = 0 there and the corresponding W rows are 0).
    acc = jnp.dot(s, w_ref[...], preferred_element_type=jnp.float32)
    out_ref[...] = acc + b_ref[...]


def act_layer_forward(x, betas, lambdas, frequencies, phases, bias=None,
                      eps=1e-8, block_b=1024):
    """Pallas TPU implementation of ActLayer.forward."""
    x = x.astype(jnp.float32)
    B, d = x.shape
    m, N = betas.shape

    f = frequencies.astype(jnp.float32)
    phi = phases.astype(jnp.float32)
    betas = betas.astype(jnp.float32)
    lambdas = lambdas.astype(jnp.float32)

    # ---- data-independent constants, computed ONCE in the wrapper ----
    mean = jnp.exp(-f ** 2 / 2) * jnp.sin(phi)
    var = 0.5 - jnp.exp(-2 * f ** 2) * jnp.cos(2 * phi) / 2 - mean ** 2
    var = jnp.maximum(var, 0.0)                       # guard tiny negative from rounding
    inv_std = 1.0 / (jnp.sqrt(var) + eps)             # matches (std + eps) denominator

    # ---- dense-K packing: K = round_up(d*N, 128) ----
    k_dense = _round_up(max(d * N, 1), 128)
    m_pad = _round_up(max(m, 1), 128)
    d_pad = _round_up(d, 8)

    # W[i*N+j, k] = lambdas[k,i] * betas[k,j]   (inv_std applied in-kernel, f32)
    W = (lambdas.T[:, None, :] * betas.T[None, :, :]).reshape(d * N, m)   # (d*N, m)
    w_p = (jnp.zeros((k_dense, m_pad), jnp.float32)
           .at[:d * N, :m].set(W)
           .astype(jnp.bfloat16))

    # Fold the -mean_j*inv_std_j term (and optional bias) into bias'.
    bias_adj = (bias.astype(jnp.float32) if bias is not None
                else jnp.zeros((m,), jnp.float32))
    bias_adj = bias_adj - (betas @ (mean * inv_std)) * jnp.sum(lambdas, axis=1)
    b_p = jnp.zeros((1, m_pad), jnp.float32).at[0, :m].set(bias_adj)

    # Dense per-lane constant slabs, layout [i*N + j]; padded lanes are 0.
    f_p = jnp.zeros((1, k_dense), jnp.float32).at[0, :d * N].set(jnp.tile(f, d))
    phi_p = jnp.zeros((1, k_dense), jnp.float32).at[0, :d * N].set(jnp.tile(phi, d))
    scale_p = jnp.zeros((1, k_dense), jnp.float32).at[0, :d * N].set(jnp.tile(inv_std, d))

    # 0/1 selection matrix E[i, i*N+j] = 1 (rows >= d and padded lanes are 0).
    cols = jnp.arange(k_dense)
    e_p = ((cols[None, :] // N == jnp.arange(d_pad)[:, None])
           & (cols[None, :] < d * N)).astype(jnp.float32)

    # ---- batch tiling: ensure >=2 grid steps when B > 128 (v7x dual TC) ----
    tb = max(128, min(block_b, _round_up(pl.cdiv(B, 2), 128)))
    b_pad = _round_up(B, tb)
    x_p = jnp.zeros((b_pad, d_pad), jnp.float32).at[:B, :d].set(x)

    grid = (b_pad // tb,)

    cost = pl.CostEstimate(
        flops=2 * b_pad * (k_dense * m_pad + d_pad * k_dense),
        transcendentals=b_pad * k_dense,
        bytes_accessed=(b_pad * d_pad * 4 + b_pad * m_pad * 4
                        + k_dense * m_pad * 2 + (d_pad + 3) * k_dense * 4
                        + m_pad * 4),
    )

    # VMEM budget: double-buffered x/out tiles, 2-deep resident constants, and
    # ~4 slab-sized f32 intermediates; 2x headroom, clipped to v7x's 64 MiB.
    vmem_bytes = (2 * tb * d_pad * 4 + 2 * tb * m_pad * 4
                  + 2 * ((d_pad + 3) * k_dense * 4 + k_dense * m_pad * 2 + m_pad * 4)
                  + 4 * tb * k_dense * 4)
    vmem_limit = int(min(max(2 * vmem_bytes, 16 << 20), 64 << 20))

    out = pl.pallas_call(
        _act_kernel,
        out_shape=jax.ShapeDtypeStruct((b_pad, m_pad), jnp.float32),
        grid_spec=pltpu.PrefetchScalarGridSpec(
            num_scalar_prefetch=0,
            grid=grid,
            in_specs=[
                pl.BlockSpec((tb, d_pad), lambda b: (b, 0)),          # x: tiled over batch
                pl.BlockSpec((d_pad, k_dense), lambda b: (0, 0)),     # E: resident
                pl.BlockSpec((1, k_dense), lambda b: (0, 0)),         # f: resident
                pl.BlockSpec((1, k_dense), lambda b: (0, 0)),         # phi: resident
                pl.BlockSpec((1, k_dense), lambda b: (0, 0)),         # inv_std: resident
                pl.BlockSpec((k_dense, m_pad), lambda b: (0, 0)),     # W: resident
                pl.BlockSpec((1, m_pad), lambda b: (0, 0)),           # bias': resident
            ],
            out_specs=pl.BlockSpec((tb, m_pad), lambda b: (b, 0)),
        ),
        compiler_params=pltpu.CompilerParams(
            dimension_semantics=("parallel",),                        # shard batch over TCs
            vmem_limit_bytes=vmem_limit),
        cost_estimate=cost,
    )(x_p, e_p, f_p, phi_p, scale_p, w_p, b_p)

    return out[:B, :m]


def act_layer_ref(x, betas, lambdas, frequencies, phases, bias=None, eps=1e-8):
    """Pure-JAX reference matching the PyTorch module."""
    f, phi = frequencies, phases
    mean = jnp.exp(-f ** 2 / 2) * jnp.sin(phi)
    var = 0.5 - jnp.exp(-2 * f ** 2) * jnp.cos(2 * phi) / 2 - mean ** 2
    std = jnp.sqrt(var)
    bx = (jnp.sin(jnp.einsum('i,bj->bij', f, x) + phi[:, None]) - mean[:, None]) \
         / (std[:, None] + eps)
    out = jnp.einsum('bji,kj,ki->bk', bx, betas, lambdas)
    if bias is not None:
        out = out + bias
    return out


if __name__ == "__main__":
    key = jax.random.PRNGKey(0)
    B, d, m, N = 300, 5, 48, 20           # deliberately non-128-aligned to test padding
    eps = 1e-8

    ks = jax.random.split(key, 6)
    x = jax.random.normal(ks[0], (B, d), jnp.float32)
    betas = jax.random.uniform(ks[1], (m, N), jnp.float32,
                               -(3.0 * N) ** 0.5, (3.0 * N) ** 0.5)
    lambdas = jax.random.uniform(ks[2], (m, d), jnp.float32,
                                 -(3.0 * d) ** 0.5, (3.0 * d) ** 0.5)
    frequencies = jax.random.normal(ks[3], (N,), jnp.float32)
    phases = 0.3 * jax.random.normal(ks[4], (N,), jnp.float32)
    bias = 0.1 * jax.random.normal(ks[5], (m,), jnp.float32)

    out = act_layer_forward(x, betas, lambdas, frequencies, phases, bias, eps)
    out = jax.block_until_ready(out)

    ref = act_layer_ref(x, betas, lambdas, frequencies, phases, bias, eps)
    err = float(jnp.max(jnp.abs(out - ref)) / (jnp.max(jnp.abs(ref)) + 1e-6))
    assert out.shape == (B, m), out.shape
    assert err < 2e-2, f"relative error too large: {err}"   # bf16 MXU operands, f32 accum
    print("KERNEL_OK")
</pallas_src>

<mosaic_0001>
module attributes {stable_mosaic.version = 11 : i64} {
  func.func @_act_kernel(%arg0: i32, %arg1: memref<256x8xf32, #tpu.memory_space<vmem>>, %arg2: memref<8x128xf32, #tpu.memory_space<vmem>>, %arg3: memref<1x128xf32, #tpu.memory_space<vmem>>, %arg4: memref<1x128xf32, #tpu.memory_space<vmem>>, %arg5: memref<1x128xf32, #tpu.memory_space<vmem>>, %arg6: memref<128x128xbf16, #tpu.memory_space<vmem>>, %arg7: memref<1x128xf32, #tpu.memory_space<vmem>>, %arg8: memref<256x128xf32, #tpu.memory_space<vmem>>) attributes {dimension_semantics = [#tpu.dimension_semantics<parallel>], iteration_bounds = array<i64: 2>, scalar_prefetch = 0 : i64, scratch_operands = 0 : i64, tpu.core_type = #tpu.core_type<tc>, window_params = [{transform_indices = @transform_0, window_bounds = array<i64: 256, 8>}, {pipeline_mode = #tpu.pipeline_mode<synchronous>, transform_indices = @transform_1, window_bounds = array<i64: 8, 128>}, {pipeline_mode = #tpu.pipeline_mode<synchronous>, transform_indices = @transform_2, window_bounds = array<i64: 1, 128>}, {pipeline_mode = #tpu.pipeline_mode<synchronous>, transform_indices = @transform_3, window_bounds = array<i64: 1, 128>}, {pipeline_mode = #tpu.pipeline_mode<synchronous>, transform_indices = @transform_4, window_bounds = array<i64: 1, 128>}, {pipeline_mode = #tpu.pipeline_mode<synchronous>, transform_indices = @transform_5, window_bounds = array<i64: 128, 128>}, {pipeline_mode = #tpu.pipeline_mode<synchronous>, transform_indices = @transform_6, window_bounds = array<i64: 1, 128>}, {transform_indices = @transform_7, window_bounds = array<i64: 256, 128>}]} {
    %c0 = arith.constant 0 : index
    %c0_0 = arith.constant 0 : index
    %0 = vector.load %arg1[%c0, %c0_0] : memref<256x8xf32, #tpu.memory_space<vmem>>, vector<256x8xf32>
    %c0_1 = arith.constant 0 : index
    %c0_2 = arith.constant 0 : index
    %1 = vector.load %arg2[%c0_1, %c0_2] : memref<8x128xf32, #tpu.memory_space<vmem>>, vector<8x128xf32>
    %cst = arith.constant dense<0.000000e+00> : vector<256x128xf32>
    %2 = tpu.matmul %0, %1, %cst {dimension_numbers = #tpu.dot_dimension_numbers<[1], [0], [0], [1], [0, 0, 1, 1], [], []>} : vector<256x8xf32>, vector<8x128xf32>, vector<256x128xf32> -> vector<256x128xf32>
    %c0_3 = arith.constant 0 : index
    %c0_4 = arith.constant 0 : index
    %3 = vector.load %arg3[%c0_3, %c0_4] : memref<1x128xf32, #tpu.memory_space<vmem>>, vector<1x128xf32>
    %4 = vector.broadcast %3 : vector<1x128xf32> to vector<256x128xf32>
    %5 = arith.mulf %2, %4 : vector<256x128xf32>
    %c0_5 = arith.constant 0 : index
    %c0_6 = arith.constant 0 : index
    %6 = vector.load %arg4[%c0_5, %c0_6] : memref<1x128xf32, #tpu.memory_space<vmem>>, vector<1x128xf32>
    %7 = vector.broadcast %6 : vector<1x128xf32> to vector<256x128xf32>
    %8 = arith.addf %5, %7 : vector<256x128xf32>
    %9 = math.sin %8 : vector<256x128xf32>
    %c0_7 = arith.constant 0 : index
    %c0_8 = arith.constant 0 : index
    %10 = vector.load %arg5[%c0_7, %c0_8] : memref<1x128xf32, #tpu.memory_space<vmem>>, vector<1x128xf32>
    %11 = vector.broadcast %10 : vector<1x128xf32> to vector<256x128xf32>
    %12 = arith.mulf %9, %11 : vector<256x128xf32>
    %13 = arith.truncf %12 : vector<256x128xf32> to vector<256x128xbf16>
    %c0_9 = arith.constant 0 : index
    %c0_10 = arith.constant 0 : index
    %14 = vector.load %arg6[%c0_9, %c0_10] : memref<128x128xbf16, #tpu.memory_space<vmem>>, vector<128x128xbf16>
    %cst_11 = arith.constant dense<0.000000e+00> : vector<256x128xf32>
    %15 = tpu.matmul %13, %14, %cst_11 {dimension_numbers = #tpu.dot_dimension_numbers<[1], [0], [0], [1], [0, 0, 1, 1], [], []>} : vector<256x128xbf16>, vector<128x128xbf16>, vector<256x128xf32> -> vector<256x128xf32>
    %c0_12 = arith.constant 0 : index
    %c0_13 = arith.constant 0 : index
    %16 = vector.load %arg7[%c0_12, %c0_13] : memref<1x128xf32, #tpu.memory_space<vmem>>, vector<1x128xf32>
    %17 = vector.broadcast %16 : vector<1x128xf32> to vector<256x128xf32>
    %18 = arith.addf %15, %17 : vector<256x128xf32>
    %c0_14 = arith.constant 0 : index
    %c0_15 = arith.constant 0 : index
    %19 = vector.load %arg8[%c0_14, %c0_15] : memref<256x128xf32, #tpu.memory_space<vmem>>, vector<256x128xf32>
    tpu.vector_store %arg8[%c0_14, %c0_15], %18 {strides = array<i32>} : memref<256x128xf32, #tpu.memory_space<vmem>>, vector<256x128xf32>,
    return
  }
  func.func @transform_0(%arg0: i32) -> (i32, i32) {
    %c0_i32 = arith.constant 0 : i32
    %c0_i32_0 = arith.constant 0 : i32
    return %arg0, %c0_i32 : i32, i32
  }
  func.func @transform_1(%arg0: i32) -> (i32, i32) {
    %c0_i32 = arith.constant 0 : i32
    %c0_i32_0 = arith.constant 0 : i32
    %c0_i32_1 = arith.constant 0 : i32
    return %c0_i32, %c0_i32_0 : i32, i32
  }
  func.func @transform_2(%arg0: i32) -> (i32, i32) {
    %c0_i32 = arith.constant 0 : i32
    %c0_i32_0 = arith.constant 0 : i32
    %c0_i32_1 = arith.constant 0 : i32
    return %c0_i32, %c0_i32_0 : i32, i32
  }
  func.func @transform_3(%arg0: i32) -> (i32, i32) {
    %c0_i32 = arith.constant 0 : i32
    %c0_i32_0 = arith.constant 0 : i32
    %c0_i32_1 = arith.constant 0 : i32
    return %c0_i32, %c0_i32_0 : i32, i32
  }
  func.func @transform_4(%arg0: i32) -> (i32, i32) {
    %c0_i32 = arith.constant 0 : i32
    %c0_i32_0 = arith.constant 0 : i32
    %c0_i32_1 = arith.constant 0 : i32
    return %c0_i32, %c0_i32_0 : i32, i32
  }
  func.func @transform_5(%arg0: i32) -> (i32, i32) {
    %c0_i32 = arith.constant 0 : i32
    %c0_i32_0 = arith.constant 0 : i32
    %c0_i32_1 = arith.constant 0 : i32
    return %c0_i32, %c0_i32_0 : i32, i32
  }
  func.func @transform_6(%arg0: i32) -> (i32, i32) {
    %c0_i32 = arith.constant 0 : i32
    %c0_i32_0 = arith.constant 0 : i32
    %c0_i32_1 = arith.constant 0 : i32
    return %c0_i32, %c0_i32_0 : i32, i32
  }
  func.func @transform_7(%arg0: i32) -> (i32, i32) {
    %c0_i32 = arith.constant 0 : i32
    %c0_i32_0 = arith.constant 0 : i32
    return %arg0, %c0_i32 : i32, i32
  }
}

</mosaic_0001>

<llo_original>
// kernel: tpu_custom_call.1
$region0: #{tpu_custom_call.1}
  #allocation0 [shape = 'u32[]', space=smem, size = 0x4, offset = 0x4, fixed_abs, tag = 'smem constant byte address 0x4 - core index']
  #allocation1 [shape = 'u32[72,128]{1,0:T(1,128)}', space=vmem, size = 0x9000, scoped, tag = 'internal scratch']
  %s0 = inlined_call_operand.vmem [shape: f32[512,8], index: 0, kind: input, shape index: {}]
  %s1 = inlined_call_operand.vmem [shape: f32[8,128], index: 1, kind: input, shape index: {}]
  %s2 = inlined_call_operand.vmem [shape: f32[1,128], index: 2, kind: input, shape index: {}]
  %s3 = inlined_call_operand.vmem [shape: f32[1,128], index: 3, kind: input, shape index: {}]
  %s4 = inlined_call_operand.vmem [shape: f32[1,128], index: 4, kind: input, shape index: {}]
  %s5 = inlined_call_operand.vmem [shape: bf16[128,128], index: 5, kind: input, shape index: {}]
  %s6 = inlined_call_operand.vmem [shape: f32[1,128], index: 6, kind: input, shape index: {}]
  %s7 = inlined_call_operand.hbm [shape: f32[512,128], index: 7, kind: output, shape index: {}]
  %s8 = sld [smem:[#allocation0]]
  $region61: #{tpu_custom_call.1} parent=0
    _
  %s10 = ssub.s32 1, %s8
  %s11 = scalar_select 0, %s10, %s8
  $region1: #{tpu_custom_call.1} parent=0
    #allocation2 [shape = 'u8[262144]{0}', space=vmem, size = 0x40000, scoped, tag = 'output window, operand 0']
    #allocation3 [shape = 's32[2]{0}', space=sflag, size = 0x8, scoped, tag = 'scoped memory for tpu_custom_call.1']
    %12 = vsyncpa [#allocation3], 0
    %s13 = scalar_lea.sflag [#allocation3], 1
    %14 = vsyncpa %s13, 0
    loop: start=0, step=1, limit=4
    $region2: #{tpu_custom_call.1} parent=1 // loop_pre_header
      _
    $region3: #{tpu_custom_call.1} parent=1 // loop_header
      %s16 = sphi 0, %s20
      %p17 = scmp.ge.s32.totalorder %s16, 4
      %s26 = sphi 0, %s28
      %s29 = sphi 0, %s26
      %s30 = sphi 0, %s29
      %s46 = sphi 0, %s30
      %s50 = sphi 0, %s50
      %s52 = sphi 0, %s50
      %s53 = sphi 0, %s52
      %s67 = sphi 0, %s53
      %s71 = sphi 0, %s71
      %s73 = sphi 0, %s71
      %s74 = sphi 0, %s73
      %s88 = sphi 0, %s74
      %s92 = sphi 0, %s92
      %s94 = sphi 0, %s92
      %s95 = sphi 0, %s94
      %s109 = sphi 0, %s95
      %s113 = sphi 0, %s113
      %s115 = sphi 0, %s113
      %s116 = sphi 0, %s115
      %s130 = sphi 0, %s116
      %s134 = sphi 0, %s134
      %s136 = sphi 0, %s134
      %s137 = sphi 0, %s136
      %s151 = sphi 0, %s137
      %s155 = sphi 0, %s155
      %s157 = sphi 0, %s155
      %s158 = sphi 0, %s157
      %s172 = sphi 0, %s158
      %s178 = sphi 0, %s180
      %s181 = sphi 0, %s178
      %s182 = sphi 0, %s181
      %s198 = sphi 0, %s182
    $region4: #{tpu_custom_call.1} parent=1 // loop_header_branch
      %19 = sbr.rel (%p17) target = $region8
    $region5: #{tpu_custom_call.1} parent=1 // loop_body
      %s21 = ssub.s32 %s16, 1
      %s22 = ssub.s32 %s16, 2
      %s23 = sadd.s32 %s16, 1
      %s24 = ssub.s32 %s16, %s23
      %p25 = scmp.eq.s32.totalorder %s24, 0
      %s27 = sadd.s32 %s26, 1
      %s28 = scalar_select %p25, %s26, %s27
      %p31 = pneg %p25
      %p32 = scmp.eq.s32.totalorder %s16, 1
      %p33 = por %p31, %p32
      %p34 = scmp.ne.s32.totalorder %s26, %s29
      %p35 = scmp.eq.s32.totalorder %s16, 0
      %p36 = por %p34, %p35
      %p37 = scmp.ne.s32.totalorder %s26, %s29
      %p38 = scmp.eq.s32.totalorder %s21, 1
      %p39 = por %p37, %p38
      %p40 = scmp.ne.s32.totalorder %s29, %s30
      %p41 = scmp.eq.s32.totalorder %s21, 0
      %p42 = por %p40, %p41
      %p43 = scmp.ne.s32.totalorder %s29, %s30
      %p44 = scmp.eq.s32.totalorder %s22, 1
      %p45 = por %p43, %p44
      %p47 = scmp.ne.s32.totalorder %s30, %s46
      %p48 = scmp.eq.s32.totalorder %s22, 0
      %p49 = por %p47, %p48
      %s51 = sadd.s32 %s50, 1
      %p54 = scmp.eq.s32.totalorder %s16, 1
      %p55 = scmp.ne.s32.totalorder %s50, %s52
      %p56 = scmp.eq.s32.totalorder %s16, 0
      %p57 = por %p55, %p56
      %p58 = scmp.ne.s32.totalorder %s50, %s52
      %p59 = scmp.eq.s32.totalorder %s21, 1
      %p60 = por %p58, %p59
      %p61 = scmp.ne.s32.totalorder %s52, %s53
      %p62 = scmp.eq.s32.totalorder %s21, 0
      %p63 = por %p61, %p62
      %p64 = scmp.ne.s32.totalorder %s52, %s53
      %p65 = scmp.eq.s32.totalorder %s22, 1
      %p66 = por %p64, %p65
      %p68 = scmp.ne.s32.totalorder %s53, %s67
      %p69 = scmp.eq.s32.totalorder %s22, 0
      %p70 = por %p68, %p69
      %s72 = sadd.s32 %s71, 1
      %p75 = scmp.eq.s32.totalorder %s16, 1
      %p76 = scmp.ne.s32.totalorder %s71, %s73
      %p77 = scmp.eq.s32.totalorder %s16, 0
      %p78 = por %p76, %p77
      %p79 = scmp.ne.s32.totalorder %s71, %s73
      %p80 = scmp.eq.s32.totalorder %s21, 1
      %p81 = por %p79, %p80
      %p82 = scmp.ne.s32.totalorder %s73, %s74
      %p83 = scmp.eq.s32.totalorder %s21, 0
      %p84 = por %p82, %p83
      %p85 = scmp.ne.s32.totalorder %s73, %s74
      %p86 = scmp.eq.s32.totalorder %s22, 1
      %p87 = por %p85, %p86
      %p89 = scmp.ne.s32.totalorder %s74, %s88
      %p90 = scmp.eq.s32.totalorder %s22, 0
      %p91 = por %p89, %p90
      %s93 = sadd.s32 %s92, 1
      %p96 = scmp.eq.s32.totalorder %s16, 1
      %p97 = scmp.ne.s32.totalorder %s92, %s94
      %p98 = scmp.eq.s32.totalorder %s16, 0
      %p99 = por %p97, %p98
      %p100 = scmp.ne.s32.totalorder %s92, %s94
      %p101 = scmp.eq.s32.totalorder %s21, 1
      %p102 = por %p100, %p101
      %p103 = scmp.ne.s32.totalorder %s94, %s95
      %p104 = scmp.eq.s32.totalorder %s21, 0
      %p105 = por %p103, %p104
      %p106 = scmp.ne.s32.totalorder %s94, %s95
      %p107 = scmp.eq.s32.totalorder %s22, 1
      %p108 = por %p106, %p107
      %p110 = scmp.ne.s32.totalorder %s95, %s109
      %p111 = scmp.eq.s32.totalorder %s22, 0
      %p112 = por %p110, %p111
      %s114 = sadd.s32 %s113, 1
      %p117 = scmp.eq.s32.totalorder %s16, 1
      %p118 = scmp.ne.s32.totalorder %s113, %s115
      %p119 = scmp.eq.s32.totalorder %s16, 0
      %p120 = por %p118, %p119
      %p121 = scmp.ne.s32.totalorder %s113, %s115
      %p122 = scmp.eq.s32.totalorder %s21, 1
      %p123 = por %p121, %p122
      %p124 = scmp.ne.s32.totalorder %s115, %s116
      %p125 = scmp.eq.s32.totalorder %s21, 0
      %p126 = por %p124, %p125
      %p127 = scmp.ne.s32.totalorder %s115, %s116
      %p128 = scmp.eq.s32.totalorder %s22, 1
      %p129 = por %p127, %p128
      %p131 = scmp.ne.s32.totalorder %s116, %s130
      %p132 = scmp.eq.s32.totalorder %s22, 0
      %p133 = por %p131, %p132
      %s135 = sadd.s32 %s134, 1
      %p138 = scmp.eq.s32.totalorder %s16, 1
      %p139 = scmp.ne.s32.totalorder %s134, %s136
      %p140 = scmp.eq.s32.totalorder %s16, 0
      %p141 = por %p139, %p140
      %p142 = scmp.ne.s32.totalorder %s134, %s136
      %p143 = scmp.eq.s32.totalorder %s21, 1
      %p144 = por %p142, %p143
      %p145 = scmp.ne.s32.totalorder %s136, %s137
      %p146 = scmp.eq.s32.totalorder %s21, 0
      %p147 = por %p145, %p146
      %p148 = scmp.ne.s32.totalorder %s136, %s137
      %p149 = scmp.eq.s32.totalorder %s22, 1
      %p150 = por %p148, %p149
      %p152 = scmp.ne.s32.totalorder %s137, %s151
      %p153 = scmp.eq.s32.totalorder %s22, 0
      %p154 = por %p152, %p153
      %s156 = sadd.s32 %s155, 1
      %p159 = scmp.eq.s32.totalorder %s16, 1
      %p160 = scmp.ne.s32.totalorder %s155, %s157
      %p161 = scmp.eq.s32.totalorder %s16, 0
      %p162 = por %p160, %p161
      %p163 = scmp.ne.s32.totalorder %s155, %s157
      %p164 = scmp.eq.s32.totalorder %s21, 1
      %p165 = por %p163, %p164
      %p166 = scmp.ne.s32.totalorder %s157, %s158
      %p167 = scmp.eq.s32.totalorder %s21, 0
      %p168 = por %p166, %p167
      %p169 = scmp.ne.s32.totalorder %s157, %s158
      %p170 = scmp.eq.s32.totalorder %s22, 1
      %p171 = por %p169, %p170
      %p173 = scmp.ne.s32.totalorder %s158, %s172
      %p174 = scmp.eq.s32.totalorder %s22, 0
      %p175 = por %p173, %p174
      %s176 = ssub.s32 %s16, %s23
      %p177 = scmp.eq.s32.totalorder %s176, 0
      %s179 = sadd.s32 %s178, 1
      %s180 = scalar_select %p177, %s178, %s179
      %p183 = pneg %p177
      %p184 = scmp.eq.s32.totalorder %s16, 1
      %p185 = por %p183, %p184
      %p186 = scmp.ne.s32.totalorder %s178, %s181
      %p187 = scmp.eq.s32.totalorder %s16, 0
      %p188 = por %p186, %p187
      %p189 = scmp.ne.s32.totalorder %s178, %s181
      %p190 = scmp.eq.s32.totalorder %s21, 1
      %p191 = por %p189, %p190
      %p192 = scmp.ne.s32.totalorder %s181, %s182
      %p193 = scmp.eq.s32.totalorder %s21, 0
      %p194 = por %p192, %p193
      %p195 = scmp.ne.s32.totalorder %s181, %s182
      %p196 = scmp.eq.s32.totalorder %s22, 1
      %p197 = por %p195, %p196
      %p199 = scmp.ne.s32.totalorder %s182, %s198
      %p200 = scmp.eq.s32.totalorder %s22, 0
      %p201 = por %p199, %p200
      %p202 = scmp.le.s32.totalorder 1, %s16
      %p203 = scmp.lt.s32.totalorder %s16, 3
      %p204 = pnand %p202, %p203
      %p205 = pneg %p204
      // Predicated region
      $region9: #{tpu_custom_call.1} parent=5 // pred_check
        _
      $region10: #{tpu_custom_call.1} parent=5 // pred_check_branch
        %207 = sbr.rel (%p204) target = $region12
      $region11: #{tpu_custom_call.1} parent=5 // pred_region
        %s208 = ssub.s32 %s16, 1
        // Predicated region
        $region13: #{tpu_custom_call.1} parent=11 // pred_check
          %p209 = pneg %p63
        $region14: #{tpu_custom_call.1} parent=11 // pred_check_branch
          %211 = sbr.rel (%p209) target = $region16
        $region15: #{tpu_custom_call.1} parent=11 // pred_region
          _
        $region16: #{tpu_custom_call.1} parent=11 // pred_fallthru
          _
        // Predicated region
        $region17: #{tpu_custom_call.1} parent=11 // pred_check
          %p212 = pneg %p84
        $region18: #{tpu_custom_call.1} parent=11 // pred_check_branch
          %214 = sbr.rel (%p212) target = $region20
        $region19: #{tpu_custom_call.1} parent=11 // pred_region
          _
        $region20: #{tpu_custom_call.1} parent=11 // pred_fallthru
          _
        // Predicated region
        $region21: #{tpu_custom_call.1} parent=11 // pred_check
          %p215 = pneg %p105
        $region22: #{tpu_custom_call.1} parent=11 // pred_check_branch
          %217 = sbr.rel (%p215) target = $region24
        $region23: #{tpu_custom_call.1} parent=11 // pred_region
          _
        $region24: #{tpu_custom_call.1} parent=11 // pred_fallthru
          _
        // Predicated region
        $region25: #{tpu_custom_call.1} parent=11 // pred_check
          %p218 = pneg %p126
        $region26: #{tpu_custom_call.1} parent=11 // pred_check_branch
          %220 = sbr.rel (%p218) target = $region28
        $region27: #{tpu_custom_call.1} parent=11 // pred_region
          _
        $region28: #{tpu_custom_call.1} parent=11 // pred_fallthru
          _
        // Predicated region
        $region29: #{tpu_custom_call.1} parent=11 // pred_check
          %p221 = pneg %p147
        $region30: #{tpu_custom_call.1} parent=11 // pred_check_branch
          %223 = sbr.rel (%p221) target = $region32
        $region31: #{tpu_custom_call.1} parent=11 // pred_region
          _
        $region32: #{tpu_custom_call.1} parent=11 // pred_fallthru
          _
        // Predicated region
        $region33: #{tpu_custom_call.1} parent=11 // pred_check
          %p224 = pneg %p168
        $region34: #{tpu_custom_call.1} parent=11 // pred_check_branch
          %226 = sbr.rel (%p224) target = $region36
        $region35: #{tpu_custom_call.1} parent=11 // pred_region
          _
        $region36: #{tpu_custom_call.1} parent=11 // pred_fallthru
          _
      $region12: #{tpu_custom_call.1} parent=5 // pred_fallthru
        _
      %p227 = scmp.lt.s32.totalorder %s16, 2
      // Predicated region
      $region37: #{tpu_custom_call.1} parent=5 // pred_check
        %p228 = pneg %p227
      $region38: #{tpu_custom_call.1} parent=5 // pred_check_branch
        %230 = sbr.rel (%p228) target = $region40
      $region39: #{tpu_custom_call.1} parent=5 // pred_region
        // Predicated region
        $region41: #{tpu_custom_call.1} parent=39 // pred_check
          %p231 = pneg %p36
        $region42: #{tpu_custom_call.1} parent=39 // pred_check_branch
          %233 = sbr.rel (%p231) target = $region44
        $region43: #{tpu_custom_call.1} parent=39 // pred_region
          %s234 = smul.u32 32, %s16
          %p235 = scmp.lt.s32.totalorder %s234, 63
          %s236 = scalar_select %p235, %s234, 63
          %s237 = smul.addr %s236, 8
          %s238 = scalar_lea.vmem %s0, %s237
          %s239 = smul.u32 32, %s16
        $region44: #{tpu_custom_call.1} parent=39 // pred_fallthru
          _
      $region40: #{tpu_custom_call.1} parent=5 // pred_fallthru
        _
      %p240 = scmp.le.s32.totalorder 1, %s16
      %p241 = scmp.lt.s32.totalorder %s16, 3
      %p242 = pnand %p240, %p241
      %p243 = pneg %p242
      // Predicated region
      $region45: #{tpu_custom_call.1} parent=5 // pred_check
        _
      $region46: #{tpu_custom_call.1} parent=5 // pred_check_branch
        %245 = sbr.rel (%p242) target = $region48
      $region47: #{tpu_custom_call.1} parent=5 // pred_region
        %s246 = ssub.s32 %s16, 1
        %s247 = smul.u32 32, %s21
        %p248 = scmp.lt.s32.totalorder %s247, 63
        %s249 = scalar_select %p248, %s247, 63
        %s250 = smul.addr %s249, 8
        %s251 = scalar_lea.vmem %s0, %s250
        %p252 = pneg %p42
        %p253 = pneg %p39
        %p254 = pneg %p63
        %p255 = pneg %p60
        %p256 = pneg %p84
        %p257 = pneg %p81
        %p258 = pneg %p105
        %p259 = pneg %p102
        %p260 = pneg %p126
        %p261 = pneg %p123
        %p262 = pneg %p147
        %p263 = pneg %p144
        %p264 = pneg %p168
        %p265 = pneg %p165
        %p266 = pneg %p194
        %p267 = pneg %p191
        %s268 = sand.u32 %s181, 1
        %s269 = scalar_lea.sflag [#allocation3], %s268
        %s270 = sand.u32 %s181, 1
        %s271 = smul.addr %s270, 256
        %s272 = scalar_lea.vmem [#allocation2], %s271
        %s273 = smul.u32 32, %s21
        %p274 = scmp.lt.s32.totalorder %s273, 63
        %s275 = scalar_select %p274, %s273, 63
        %s276 = smul.addr %s275, 8
        %s277 = scalar_lea.vmem %s0, %s276
        %s278 = smul.u32 32, %s21
        %s279 = smul.u32 32, %s21
        %v280 = vld [vmem:[%s277] sm:$0xff]
        %v281 = vld [vmem:[%s277 + $0x8] sm:$0xff]
        %v282 = vld [vmem:[%s277 + $0x10] sm:$0xff]
        %v283 = vld [vmem:[%s277 + $0x18] sm:$0xff]
        %v284 = vld [vmem:[%s277 + $0x20] sm:$0xff]
        %v285 = vld [vmem:[%s277 + $0x28] sm:$0xff]
        %v286 = vld [vmem:[%s277 + $0x30] sm:$0xff]
        %v287 = vld [vmem:[%s277 + $0x38] sm:$0xff]
        %v288 = vld [vmem:[%s277 + $0x40] sm:$0xff]
        %v289 = vld [vmem:[%s277 + $0x48] sm:$0xff]
        %v290 = vld [vmem:[%s277 + $0x50] sm:$0xff]
        %v291 = vld [vmem:[%s277 + $0x58] sm:$0xff]
        %v292 = vld [vmem:[%s277 + $0x60] sm:$0xff]
        %v293 = vld [vmem:[%s277 + $0x68] sm:$0xff]
        %v294 = vld [vmem:[%s277 + $0x70] sm:$0xff]
        %v295 = vld [vmem:[%s277 + $0x78] sm:$0xff]
        %v296 = vld [vmem:[%s277 + $0x80] sm:$0xff]
        %v297 = vld [vmem:[%s277 + $0x88] sm:$0xff]
        %v298 = vld [vmem:[%s277 + $0x90] sm:$0xff]
        %v299 = vld [vmem:[%s277 + $0x98] sm:$0xff]
        %v300 = vld [vmem:[%s277 + $0xa0] sm:$0xff]
        %v301 = vld [vmem:[%s277 + $0xa8] sm:$0xff]
        %v302 = vld [vmem:[%s277 + $0xb0] sm:$0xff]
        %v303 = vld [vmem:[%s277 + $0xb8] sm:$0xff]
        %v304 = vld [vmem:[%s277 + $0xc0] sm:$0xff]
        %v305 = vld [vmem:[%s277 + $0xc8] sm:$0xff]
        %v306 = vld [vmem:[%s277 + $0xd0] sm:$0xff]
        %v307 = vld [vmem:[%s277 + $0xd8] sm:$0xff]
        %v308 = vld [vmem:[%s277 + $0xe0] sm:$0xff]
        %v309 = vld [vmem:[%s277 + $0xe8] sm:$0xff]
        %v310 = vld [vmem:[%s277 + $0xf0] sm:$0xff]
        %v311 = vld [vmem:[%s277 + $0xf8] sm:$0xff]
        %v312 = vld [vmem:[%s1] sm:$0xff]
        %vm313 = vcmask 64512
        %v315 = vsel %vm313, %v280, 0
        %v318 = vsel %vm313, %v281, 0
        %v321 = vsel %vm313, %v282, 0
        %v324 = vsel %vm313, %v283, 0
        %v327 = vsel %vm313, %v284, 0
        %v330 = vsel %vm313, %v285, 0
        %v333 = vsel %vm313, %v286, 0
        %v336 = vsel %vm313, %v287, 0
        %v339 = vsel %vm313, %v288, 0
        %v342 = vsel %vm313, %v289, 0
        %v345 = vsel %vm313, %v290, 0
        %v348 = vsel %vm313, %v291, 0
        %v351 = vsel %vm313, %v292, 0
        %v354 = vsel %vm313, %v293, 0
        %v357 = vsel %vm313, %v294, 0
        %v360 = vsel %vm313, %v295, 0
        %v363 = vsel %vm313, %v296, 0
        %v366 = vsel %vm313, %v297, 0
        %v369 = vsel %vm313, %v298, 0
        %v372 = vsel %vm313, %v299, 0
        %v375 = vsel %vm313, %v300, 0
        %v378 = vsel %vm313, %v301, 0
        %v381 = vsel %vm313, %v302, 0
        %v384 = vsel %vm313, %v303, 0
        %v387 = vsel %vm313, %v304, 0
        %v390 = vsel %vm313, %v305, 0
        %v393 = vsel %vm313, %v306, 0
        %v396 = vsel %vm313, %v307, 0
        %v399 = vsel %vm313, %v308, 0
        %v402 = vsel %vm313, %v309, 0
        %v405 = vsel %vm313, %v310, 0
        %v408 = vsel %vm313, %v311, 0
        %410 = vmatpush.msra.mxu0 0.0
        %411 = vmatpush.msra.mxu0 0.0
        %412 = vmatpush.msra.mxu0 0.0
        %413 = vmatpush.msra.mxu0 0.0
        %414 = vmatpush.msra.mxu0 0.0
        %415 = vmatpush.msra.mxu0 0.0
        %416 = vmatpush.msra.mxu0 0.0
        %417 = vmatpush.msra.mxu0 0.0
        %418 = vmatpush.msra.mxu0 0.0
        %419 = vmatpush.msra.mxu0 0.0
        %420 = vmatpush.msra.mxu0 0.0
        %421 = vmatpush.msra.mxu0 0.0
        %422 = vmatpush.msra.mxu0 0.0
        %423 = vmatpush.msra.mxu0 0.0
        %424 = vmatpush.msra.mxu0 0.0
        %425 = vmatpush.msra.mxu0 %v312
        %426 = vmatmul.f32.gmra.mxu0 %v315
        %v427 = vpop.f32.mrf.mxu0
        %v428 = vadd.f32 0.0, %v427
        %429 = vmatmul.f32.gmra.mxu0 %v318
        %v430 = vpop.f32.mrf.mxu0
        %v431 = vadd.f32 0.0, %v430
        %432 = vmatmul.f32.gmra.mxu0 %v321
        %v433 = vpop.f32.mrf.mxu0
        %v434 = vadd.f32 0.0, %v433
        %435 = vmatmul.f32.gmra.mxu0 %v324
        %v436 = vpop.f32.mrf.mxu0
        %v437 = vadd.f32 0.0, %v436
        %438 = vmatmul.f32.gmra.mxu0 %v327
        %v439 = vpop.f32.mrf.mxu0
        %v440 = vadd.f32 0.0, %v439
        %441 = vmatmul.f32.gmra.mxu0 %v330
        %v442 = vpop.f32.mrf.mxu0
        %v443 = vadd.f32 0.0, %v442
        %444 = vmatmul.f32.gmra.mxu0 %v333
        %v445 = vpop.f32.mrf.mxu0
        %v446 = vadd.f32 0.0, %v445
        %447 = vmatmul.f32.gmra.mxu0 %v336
        %v448 = vpop.f32.mrf.mxu0
        %v449 = vadd.f32 0.0, %v448
        %450 = vmatmul.f32.gmra.mxu0 %v339
        %v451 = vpop.f32.mrf.mxu0
        %v452 = vadd.f32 0.0, %v451
        %453 = vmatmul.f32.gmra.mxu0 %v342
        %v454 = vpop.f32.mrf.mxu0
        %v455 = vadd.f32 0.0, %v454
        %456 = vmatmul.f32.gmra.mxu0 %v345
        %v457 = vpop.f32.mrf.mxu0
        %v458 = vadd.f32 0.0, %v457
        %459 = vmatmul.f32.gmra.mxu0 %v348
        %v460 = vpop.f32.mrf.mxu0
        %v461 = vadd.f32 0.0, %v460
        %462 = vmatmul.f32.gmra.mxu0 %v351
        %v463 = vpop.f32.mrf.mxu0
        %v464 = vadd.f32 0.0, %v463
        %465 = vmatmul.f32.gmra.mxu0 %v354
        %v466 = vpop.f32.mrf.mxu0
        %v467 = vadd.f32 0.0, %v466
        %468 = vmatmul.f32.gmra.mxu0 %v357
        %v469 = vpop.f32.mrf.mxu0
        %v470 = vadd.f32 0.0, %v469
        %471 = vmatmul.f32.gmra.mxu0 %v360
        %v472 = vpop.f32.mrf.mxu0
        %v473 = vadd.f32 0.0, %v472
        %474 = vmatmul.f32.gmra.mxu0 %v363
        %v475 = vpop.f32.mrf.mxu0
        %v476 = vadd.f32 0.0, %v475
        %477 = vmatmul.f32.gmra.mxu0 %v366
        %v478 = vpop.f32.mrf.mxu0
        %v479 = vadd.f32 0.0, %v478
        %480 = vmatmul.f32.gmra.mxu0 %v369
        %v481 = vpop.f32.mrf.mxu0
        %v482 = vadd.f32 0.0, %v481
        %483 = vmatmul.f32.gmra.mxu0 %v372
        %v484 = vpop.f32.mrf.mxu0
        %v485 = vadd.f32 0.0, %v484
        %486 = vmatmul.f32.gmra.mxu0 %v375
        %v487 = vpop.f32.mrf.mxu0
        %v488 = vadd.f32 0.0, %v487
        %489 = vmatmul.f32.gmra.mxu0 %v378
        %v490 = vpop.f32.mrf.mxu0
        %v491 = vadd.f32 0.0, %v490
        %492 = vmatmul.f32.gmra.mxu0 %v381
        %v493 = vpop.f32.mrf.mxu0
        %v494 = vadd.f32 0.0, %v493
        %495 = vmatmul.f32.gmra.mxu0 %v384
        %v496 = vpop.f32.mrf.mxu0
        %v497 = vadd.f32 0.0, %v496
        %498 = vmatmul.f32.gmra.mxu0 %v387
        %v499 = vpop.f32.mrf.mxu0
        %v500 = vadd.f32 0.0, %v499
        %501 = vmatmul.f32.gmra.mxu0 %v390
        %v502 = vpop.f32.mrf.mxu0
        %v503 = vadd.f32 0.0, %v502
        %504 = vmatmul.f32.gmra.mxu0 %v393
        %v505 = vpop.f32.mrf.mxu0
        %v506 = vadd.f32 0.0, %v505
        %507 = vmatmul.f32.gmra.mxu0 %v396
        %v508 = vpop.f32.mrf.mxu0
        %v509 = vadd.f32 0.0, %v508
        %510 = vmatmul.f32.gmra.mxu0 %v399
        %v511 = vpop.f32.mrf.mxu0
        %v512 = vadd.f32 0.0, %v511
        %513 = vmatmul.f32.gmra.mxu0 %v402
        %v514 = vpop.f32.mrf.mxu0
        %v515 = vadd.f32 0.0, %v514
        %516 = vmatmul.f32.gmra.mxu0 %v405
        %v517 = vpop.f32.mrf.mxu0
        %v518 = vadd.f32 0.0, %v517
        %519 = vmatmul.f32.gmra.mxu0 %v408
        %v520 = vpop.f32.mrf.mxu0
        %v521 = vadd.f32 0.0, %v520
        %522 = vdwg.mxu0
        %v523 = vld [vmem:[%s2] sm:$0x1]
        %v525 = vperm.slane %v523, 0
        %v527 = vmul.f32 %v428, %v525
        %v528 = vmul.f32 %v431, %v525
        %v529 = vmul.f32 %v434, %v525
        %v530 = vmul.f32 %v437, %v525
        %v531 = vmul.f32 %v440, %v525
        %v532 = vmul.f32 %v443, %v525
        %v533 = vmul.f32 %v446, %v525
        %v534 = vmul.f32 %v449, %v525
        %v535 = vmul.f32 %v452, %v525
        %v536 = vmul.f32 %v455, %v525
        %v537 = vmul.f32 %v458, %v525
        %v538 = vmul.f32 %v461, %v525
        %v539 = vmul.f32 %v464, %v525
        %v540 = vmul.f32 %v467, %v525
        %v541 = vmul.f32 %v470, %v525
        %v542 = vmul.f32 %v473, %v525
        %v543 = vmul.f32 %v476, %v525
        %v544 = vmul.f32 %v479, %v525
        %v545 = vmul.f32 %v482, %v525
        %v546 = vmul.f32 %v485, %v525
        %v547 = vmul.f32 %v488, %v525
        %v548 = vmul.f32 %v491, %v525
        %v549 = vmul.f32 %v494, %v525
        %v550 = vmul.f32 %v497, %v525
        %v551 = vmul.f32 %v500, %v525
        %v552 = vmul.f32 %v503, %v525
        %v553 = vmul.f32 %v506, %v525
        %v554 = vmul.f32 %v509, %v525
        %v555 = vmul.f32 %v512, %v525
        %v556 = vmul.f32 %v515, %v525
        %v557 = vmul.f32 %v518, %v525
        %v558 = vmul.f32 %v521, %v525
        %v559 = vld [vmem:[%s3] sm:$0x1]
        %v561 = vperm.slane %v559, 0
        %v563 = vadd.f32 %v527, %v561
        %v564 = vadd.f32 %v528, %v561
        %v565 = vadd.f32 %v529, %v561
        %v566 = vadd.f32 %v530, %v561
        %v567 = vadd.f32 %v531, %v561
        %v568 = vadd.f32 %v532, %v561
        %v569 = vadd.f32 %v533, %v561
        %v570 = vadd.f32 %v534, %v561
        %v571 = vadd.f32 %v535, %v561
        %v572 = vadd.f32 %v536, %v561
        %v573 = vadd.f32 %v537, %v561
        %v574 = vadd.f32 %v538, %v561
        %v575 = vadd.f32 %v539, %v561
        %v576 = vadd.f32 %v540, %v561
        %v577 = vadd.f32 %v541, %v561
        %v578 = vadd.f32 %v542, %v561
        %v579 = vadd.f32 %v543, %v561
        %v580 = vadd.f32 %v544, %v561
        %v581 = vadd.f32 %v545, %v561
        %v582 = vadd.f32 %v546, %v561
        %v583 = vadd.f32 %v547, %v561
        %v584 = vadd.f32 %v548, %v561
        %v585 = vadd.f32 %v549, %v561
        %v586 = vadd.f32 %v550, %v561
        %v587 = vadd.f32 %v551, %v561
        %v588 = vadd.f32 %v552, %v561
        %v589 = vadd.f32 %v553, %v561
        %v590 = vadd.f32 %v554, %v561
        %v591 = vadd.f32 %v555, %v561
        %v592 = vadd.f32 %v556, %v561
        %v593 = vadd.f32 %v557, %v561
        %v594 = vadd.f32 %v558, %v561
        %v595 = vand.u32 2147483647, %v563
        %vm596 = vcmp.le.f32.partialorder %v595, 0.7853982
        %vm597 = vcmp.lt.s32.totalorder %v563, 0
        %v598 = vand.u32 %v563, 2139095040
        %v599 = vshrl.u32 %v598, 23
        %v600 = vsub.s32 %v599, 127
        %v601 = vand.u32 2147483647, %v563
        %v602 = vand.u32 %v601, 8388607
        %v603 = vor.u32 %v602, 8388608
        %v604 = vsub.s32 0, %v603
        %v605 = vadd.s32 %v600, 1
        %vm606 = vcmp.gt.s32.totalorder %v605, 0
        %v607 = vsel %vm606, %v605, 0
        %v608 = vshrl.u32 %v607, 5
        %v609 = vand.u32 %v607, 31
        %v610 = vsub.s32 32, %v609
        %v611 = vshrl.u32 683565275, %v610
        %v612 = vshll.u32 683565275, %v609
        %v613 = vshrl.u32 2475754826, %v610
        %v614 = vor.u32 %v612, %v613
        %v615 = vshll.u32 2475754826, %v609
        %v616 = vshrl.u32 2131351028, %v610
        %v617 = vor.u32 %v615, %v616
        %v618 = vshll.u32 2131351028, %v609
        %v619 = vshrl.u32 2102212464, %v610
        %v620 = vor.u32 %v618, %v619
        %v621 = vshll.u32 2102212464, %v609
        %v622 = vshrl.u32 920167782, %v610
        %v623 = vor.u32 %v621, %v622
        %v624 = vshll.u32 920167782, %v609
        %v625 = vshrl.u32 1326507024, %v610
        %v626 = vor.u32 %v624, %v625
        %vm627 = vcmp.lt.s32.totalorder %v608, 1
        %vm628 = vcmp.lt.s32.totalorder %v608, 2
        %vm629 = vcmp.lt.s32.totalorder %v608, 3
        %vm630 = vcmp.lt.s32.totalorder %v608, 4
        %v631 = vsel %vm627, %v611, %v614
        %v632 = vsel %vm630, %v620, 2102212464
        %v633 = vsel %vm629, %v617, %v632
        %v634 = vsel %vm628, %v631, %v633
        %v635 = vsel %vm627, %v614, %v617
        %v636 = vsel %vm630, %v623, 920167782
        %v637 = vsel %vm629, %v620, %v636
        %v638 = vsel %vm628, %v635, %v637
        %v639 = vsel %vm627, %v617, %v620
        %v640 = vsel %vm630, %v626, 1326507024
        %v641 = vsel %vm629, %v623, %v640
        %v642 = vsel %vm628, %v639, %v641
        %v643 = vshll.u32 %v603, 8
        %v644 = vand.u32 %v643, 65535
        %v645 = vshrl.u32 %v643, 16
        %v646 = vand.u32 %v642, 65535
        %v647 = vshrl.u32 %v642, 16
        %v648 = vmul.u32 %v644, %v646
        %v649 = vmul.u32 %v644, %v647
        %v650 = vmul.u32 %v645, %v646
        %v651 = vmul.u32 %v645, %v647
        %v652 = vshll.u32 %v649, 16
        %v653 = vshrl.u32 %v649, 16
        %v654 = vshll.u32 %v650, 16
        %v655 = vshrl.u32 %v650, 16
        %vm656 = vc.u32 %v648, %v652
        %v657 = vsel %vm656, 1, 0
        %v658 = vadd.s32 %v648, %v652
        %v659 = vadd.s32 %v651, %v657
        %vm660 = vc.u32 %v658, %v654
        %v661 = vsel %vm660, 1, 0
        %v662 = vadd.s32 %v658, %v654
        %v663 = vadd.s32 %v659, %v661
        %v664 = vadd.s32 %v663, %v653
        %v665 = vadd.s32 %v664, %v655
        %v666 = vand.u32 %v643, 65535
        %v667 = vshrl.u32 %v643, 16
        %v668 = vand.u32 %v638, 65535
        %v669 = vshrl.u32 %v638, 16
        %v670 = vmul.u32 %v666, %v668
        %v671 = vmul.u32 %v666, %v669
        %v672 = vmul.u32 %v667, %v668
        %v673 = vmul.u32 %v667, %v669
        %v674 = vshll.u32 %v671, 16
        %v675 = vshrl.u32 %v671, 16
        %v676 = vshll.u32 %v672, 16
        %v677 = vshrl.u32 %v672, 16
        %vm678 = vc.u32 %v670, %v674
        %v679 = vsel %vm678, 1, 0
        %v680 = vadd.s32 %v670, %v674
        %v681 = vadd.s32 %v673, %v679
        %vm682 = vc.u32 %v680, %v676
        %v683 = vsel %vm682, 1, 0
        %v684 = vadd.s32 %v680, %v676
        %v685 = vadd.s32 %v681, %v683
        %v686 = vadd.s32 %v685, %v675
        %v687 = vadd.s32 %v686, %v677
        %v688 = vmul.u32 %v643, %v634
        %v689 = vadd.s32 %v665, %v684
        %vm690 = vc.u32 %v665, %v684
        %v691 = vadd.s32 %v687, 1
        %v692 = vsel %vm690, %v691, %v687
        %v693 = vadd.s32 %v688, %v692
        %v694 = vadd.s32 %v693, 536870912
        %v695 = vshrl.u32 %v694, 30
        %v696 = vshll.u32 %v695, 30
        %v697 = vsub.s32 %v693, %v696
        %vm698 = vcmp.lt.s32.totalorder %v697, 0
        %v699 = vsub.s32 0, %v697
        %v700 = vsel %vm698, %v699, %v697
        %v701 = vclz %v700
        %v702 = vsub.s32 %v701, 2
        %vm703 = vcmp.gt.s32.totalorder 0, %v702
        %v704 = vsel %vm703, 0, %v702
        %v705 = vsub.s32 32, %v704
        %v706 = vshll.u32 %v697, %v704
        %v707 = vshrl.u32 %v689, %v705
        %v708 = vor.u32 %v706, %v707
        %v709 = vsub.s32 4294967266, %v704
        %v710 = vadd.s32 %v709, 127
        %v711 = vshll.u32 %v710, 23
        %v712 = vor.u32 4788187, %v711
        %v713 = vand.u32 2147483647, %v712
        %v715 = vcvt.s32.f32 %v708
        %v716 = vmul.f32 %v715, %v713
        %v717 = vxor.u32 %v716, 2147483648
        %v718 = vsel %vm597, %v717, %v716
        %v719 = vsub.s32 4, %v695
        %v720 = vsel %vm597, %v719, %v695
        %v721 = vsel %vm596, %v563, %v718
        %v722 = vsel %vm596, 0, %v720
        %v723 = vmul.f32 %v721, %v721
        %v724 = vmul.f32 %v723, -0.001358992
        %v725 = vadd.f32 %v724, 0.041655596
        %v726 = vmul.f32 %v723, %v725
        %v727 = vadd.f32 %v726, -0.4999988
        %v728 = vmul.f32 %v723, %v727
        %v729 = vadd.f32 1.0, %v728
        %v730 = vmul.f32 %v721, %v721
        %v731 = vmul.f32 %v730, -0.00019511016
        %v732 = vadd.f32 %v731, 0.008332121
        %v733 = vmul.f32 %v730, %v732
        %v734 = vadd.f32 %v733, -0.16666654
        %v735 = vmul.f32 %v730, %v734
        %v736 = vadd.f32 %v735, 1.0
        %v737 = vmul.f32 %v736, %v721
        %vm738 = vweird.f32 %v563
        %v739 = vadd.s32 %v722, 3
        %v740 = vand.u32 %v739, 3
        %vm741 = vcmp.lt.s32.totalorder %v740, 2
        %vm742 = vcmp.eq.s32.totalorder %v740, 0
        %v743 = vxor.u32 %v737, 2147483648
        %v744 = vsel %vm742, %v729, %v743
        %vm745 = vcmp.eq.s32.totalorder %v740, 2
        %v746 = vxor.u32 %v729, 2147483648
        %v747 = vsel %vm745, %v746, %v737
        %v748 = vsel %vm741, %v744, %v747
        %v749 = vsel %vm738, nan, %v748
        %v750 = vand.u32 2147483647, %v564
        %vm751 = vcmp.le.f32.partialorder %v750, 0.7853982
        %vm752 = vcmp.lt.s32.totalorder %v564, 0
        %v753 = vand.u32 %v564, 2139095040
        %v754 = vshrl.u32 %v753, 23
        %v755 = vsub.s32 %v754, 127
        %v756 = vand.u32 2147483647, %v564
        %v757 = vand.u32 %v756, 8388607
        %v758 = vor.u32 %v757, 8388608
        %v759 = vsub.s32 0, %v758
        %v760 = vadd.s32 %v755, 1
        %vm761 = vcmp.gt.s32.totalorder %v760, 0
        %v762 = vsel %vm761, %v760, 0
        %v763 = vshrl.u32 %v762, 5
        %v764 = vand.u32 %v762, 31
        %v765 = vsub.s32 32, %v764
        %v766 = vshrl.u32 683565275, %v765
        %v767 = vshll.u32 683565275, %v764
        %v768 = vshrl.u32 2475754826, %v765
        %v769 = vor.u32 %v767, %v768
        %v770 = vshll.u32 2475754826, %v764
        %v771 = vshrl.u32 2131351028, %v765
        %v772 = vor.u32 %v770, %v771
        %v773 = vshll.u32 2131351028, %v764
        %v774 = vshrl.u32 2102212464, %v765
        %v775 = vor.u32 %v773, %v774
        %v776 = vshll.u32 2102212464, %v764
        %v777 = vshrl.u32 920167782, %v765
        %v778 = vor.u32 %v776, %v777
        %v779 = vshll.u32 920167782, %v764
        %v780 = vshrl.u32 1326507024, %v765
        %v781 = vor.u32 %v779, %v780
        %vm782 = vcmp.lt.s32.totalorder %v763, 1
        %vm783 = vcmp.lt.s32.totalorder %v763, 2
        %vm784 = vcmp.lt.s32.totalorder %v763, 3
        %vm785 = vcmp.lt.s32.totalorder %v763, 4
        %v786 = vsel %vm782, %v766, %v769
        %v787 = vsel %vm785, %v775, 2102212464
        %v788 = vsel %vm784, %v772, %v787
        %v789 = vsel %vm783, %v786, %v788
        %v790 = vsel %vm782, %v769, %v772
        %v791 = vsel %vm785, %v778, 920167782
        %v792 = vsel %vm784, %v775, %v791
        %v793 = vsel %vm783, %v790, %v792
        %v794 = vsel %vm782, %v772, %v775
        %v795 = vsel %vm785, %v781, 1326507024
        %v796 = vsel %vm784, %v778, %v795
        %v797 = vsel %vm783, %v794, %v796
        %v798 = vshll.u32 %v758, 8
        %v799 = vand.u32 %v798, 65535
        %v800 = vshrl.u32 %v798, 16
        %v801 = vand.u32 %v797, 65535
        %v802 = vshrl.u32 %v797, 16
        %v803 = vmul.u32 %v799, %v801
        %v804 = vmul.u32 %v799, %v802
        %v805 = vmul.u32 %v800, %v801
        %v806 = vmul.u32 %v800, %v802
        %v807 = vshll.u32 %v804, 16
        %v808 = vshrl.u32 %v804, 16
        %v809 = vshll.u32 %v805, 16
        %v810 = vshrl.u32 %v805, 16
        %vm811 = vc.u32 %v803, %v807
        %v812 = vsel %vm811, 1, 0
        %v813 = vadd.s32 %v803, %v807
        %v814 = vadd.s32 %v806, %v812
        %vm815 = vc.u32 %v813, %v809
        %v816 = vsel %vm815, 1, 0
        %v817 = vadd.s32 %v813, %v809
        %v818 = vadd.s32 %v814, %v816
        %v819 = vadd.s32 %v818, %v808
        %v820 = vadd.s32 %v819, %v810
        %v821 = vand.u32 %v798, 65535
        %v822 = vshrl.u32 %v798, 16
        %v823 = vand.u32 %v793, 65535
        %v824 = vshrl.u32 %v793, 16
        %v825 = vmul.u32 %v821, %v823
        %v826 = vmul.u32 %v821, %v824
        %v827 = vmul.u32 %v822, %v823
        %v828 = vmul.u32 %v822, %v824
        %v829 = vshll.u32 %v826, 16
        %v830 = vshrl.u32 %v826, 16
        %v831 = vshll.u32 %v827, 16
        %v832 = vshrl.u32 %v827, 16
        %vm833 = vc.u32 %v825, %v829
        %v834 = vsel %vm833, 1, 0
        %v835 = vadd.s32 %v825, %v829
        %v836 = vadd.s32 %v828, %v834
        %vm837 = vc.u32 %v835, %v831
        %v838 = vsel %vm837, 1, 0
        %v839 = vadd.s32 %v835, %v831
        %v840 = vadd.s32 %v836, %v838
        %v841 = vadd.s32 %v840, %v830
        %v842 = vadd.s32 %v841, %v832
        %v843 = vmul.u32 %v798, %v789
        %v844 = vadd.s32 %v820, %v839
        %vm845 = vc.u32 %v820, %v839
        %v846 = vadd.s32 %v842, 1
        %v847 = vsel %vm845, %v846, %v842
        %v848 = vadd.s32 %v843, %v847
        %v849 = vadd.s32 %v848, 536870912
        %v850 = vshrl.u32 %v849, 30
        %v851 = vshll.u32 %v850, 30
        %v852 = vsub.s32 %v848, %v851
        %vm853 = vcmp.lt.s32.totalorder %v852, 0
        %v854 = vsub.s32 0, %v852
        %v855 = vsel %vm853, %v854, %v852
        %v856 = vclz %v855
        %v857 = vsub.s32 %v856, 2
        %vm858 = vcmp.gt.s32.totalorder 0, %v857
        %v859 = vsel %vm858, 0, %v857
        %v860 = vsub.s32 32, %v859
        %v861 = vshll.u32 %v852, %v859
        %v862 = vshrl.u32 %v844, %v860
        %v863 = vor.u32 %v861, %v862
        %v864 = vsub.s32 4294967266, %v859
        %v865 = vadd.s32 %v864, 127
        %v866 = vshll.u32 %v865, 23
        %v867 = vor.u32 4788187, %v866
        %v868 = vand.u32 2147483647, %v867
        %v870 = vcvt.s32.f32 %v863
        %v871 = vmul.f32 %v870, %v868
        %v872 = vxor.u32 %v871, 2147483648
        %v873 = vsel %vm752, %v872, %v871
        %v874 = vsub.s32 4, %v850
        %v875 = vsel %vm752, %v874, %v850
        %v876 = vsel %vm751, %v564, %v873
        %v877 = vsel %vm751, 0, %v875
        %v878 = vmul.f32 %v876, %v876
        %v879 = vmul.f32 %v878, -0.001358992
        %v880 = vadd.f32 %v879, 0.041655596
        %v881 = vmul.f32 %v878, %v880
        %v882 = vadd.f32 %v881, -0.4999988
        %v883 = vmul.f32 %v878, %v882
        %v884 = vadd.f32 1.0, %v883
        %v885 = vmul.f32 %v876, %v876
        %v886 = vmul.f32 %v885, -0.00019511016
        %v887 = vadd.f32 %v886, 0.008332121
        %v888 = vmul.f32 %v885, %v887
        %v889 = vadd.f32 %v888, -0.16666654
        %v890 = vmul.f32 %v885, %v889
        %v891 = vadd.f32 %v890, 1.0
        %v892 = vmul.f32 %v891, %v876
        %vm893 = vweird.f32 %v564
        %v894 = vadd.s32 %v877, 3
        %v895 = vand.u32 %v894, 3
        %vm896 = vcmp.lt.s32.totalorder %v895, 2
        %vm897 = vcmp.eq.s32.totalorder %v895, 0
        %v898 = vxor.u32 %v892, 2147483648
        %v899 = vsel %vm897, %v884, %v898
        %vm900 = vcmp.eq.s32.totalorder %v895, 2
        %v901 = vxor.u32 %v884, 2147483648
        %v902 = vsel %vm900, %v901, %v892
        %v903 = vsel %vm896, %v899, %v902
        %v904 = vsel %vm893, nan, %v903
        %v905 = vand.u32 2147483647, %v565
        %vm906 = vcmp.le.f32.partialorder %v905, 0.7853982
        %vm907 = vcmp.lt.s32.totalorder %v565, 0
        %v908 = vand.u32 %v565, 2139095040
        %v909 = vshrl.u32 %v908, 23
        %v910 = vsub.s32 %v909, 127
        %v911 = vand.u32 2147483647, %v565
        %v912 = vand.u32 %v911, 8388607
        %v913 = vor.u32 %v912, 8388608
        %v914 = vsub.s32 0, %v913
        %v915 = vadd.s32 %v910, 1
        %vm916 = vcmp.gt.s32.totalorder %v915, 0
        %v917 = vsel %vm916, %v915, 0
        %v918 = vshrl.u32 %v917, 5
        %v919 = vand.u32 %v917, 31
        %v920 = vsub.s32 32, %v919
        %v921 = vshrl.u32 683565275, %v920
        %v922 = vshll.u32 683565275, %v919
        %v923 = vshrl.u32 2475754826, %v920
        %v924 = vor.u32 %v922, %v923
        %v925 = vshll.u32 2475754826, %v919
        %v926 = vshrl.u32 2131351028, %v920
        %v927 = vor.u32 %v925, %v926
        %v928 = vshll.u32 2131351028, %v919
        %v929 = vshrl.u32 2102212464, %v920
        %v930 = vor.u32 %v928, %v929
        %v931 = vshll.u32 2102212464, %v919
        %v932 = vshrl.u32 920167782, %v920
        %v933 = vor.u32 %v931, %v932
        %v934 = vshll.u32 920167782, %v919
        %v935 = vshrl.u32 1326507024, %v920
        %v936 = vor.u32 %v934, %v935
        %vm937 = vcmp.lt.s32.totalorder %v918, 1
        %vm938 = vcmp.lt.s32.totalorder %v918, 2
        %vm939 = vcmp.lt.s32.totalorder %v918, 3
        %vm940 = vcmp.lt.s32.totalorder %v918, 4
        %v941 = vsel %vm937, %v921, %v924
        %v942 = vsel %vm940, %v930, 2102212464
        %v943 = vsel %vm939, %v927, %v942
        %v944 = vsel %vm938, %v941, %v943
        %v945 = vsel %vm937, %v924, %v927
        %v946 = vsel %vm940, %v933, 920167782
        %v947 = vsel %vm939, %v930, %v946
        %v948 = vsel %vm938, %v945, %v947
        %v949 = vsel %vm937, %v927, %v930
        %v950 = vsel %vm940, %v936, 1326507024
        %v951 = vsel %vm939, %v933, %v950
        %v952 = vsel %vm938, %v949, %v951
        %v953 = vshll.u32 %v913, 8
        %v954 = vand.u32 %v953, 65535
        %v955 = vshrl.u32 %v953, 16
        %v956 = vand.u32 %v952, 65535
        %v957 = vshrl.u32 %v952, 16
        %v958 = vmul.u32 %v954, %v956
        %v959 = vmul.u32 %v954, %v957
        %v960 = vmul.u32 %v955, %v956
        %v961 = vmul.u32 %v955, %v957
        %v962 = vshll.u32 %v959, 16
        %v963 = vshrl.u32 %v959, 16
        %v964 = vshll.u32 %v960, 16
        %v965 = vshrl.u32 %v960, 16
        %vm966 = vc.u32 %v958, %v962
        %v967 = vsel %vm966, 1, 0
        %v968 = vadd.s32 %v958, %v962
        %v969 = vadd.s32 %v961, %v967
        %vm970 = vc.u32 %v968, %v964
        %v971 = vsel %vm970, 1, 0
        %v972 = vadd.s32 %v968, %v964
        %v973 = vadd.s32 %v969, %v971
        %v974 = vadd.s32 %v973, %v963
        %v975 = vadd.s32 %v974, %v965
        %v976 = vand.u32 %v953, 65535
        %v977 = vshrl.u32 %v953, 16
        %v978 = vand.u32 %v948, 65535
        %v979 = vshrl.u32 %v948, 16
        %v980 = vmul.u32 %v976, %v978
        %v981 = vmul.u32 %v976, %v979
        %v982 = vmul.u32 %v977, %v978
        %v983 = vmul.u32 %v977, %v979
        %v984 = vshll.u32 %v981, 16
        %v985 = vshrl.u32 %v981, 16
        %v986 = vshll.u32 %v982, 16
        %v987 = vshrl.u32 %v982, 16
        %vm988 = vc.u32 %v980, %v984
        %v989 = vsel %vm988, 1, 0
        %v990 = vadd.s32 %v980, %v984
        %v991 = vadd.s32 %v983, %v989
        %vm992 = vc.u32 %v990, %v986
        %v993 = vsel %vm992, 1, 0
        %v994 = vadd.s32 %v990, %v986
        %v995 = vadd.s32 %v991, %v993
        %v996 = vadd.s32 %v995, %v985
        %v997 = vadd.s32 %v996, %v987
        %v998 = vmul.u32 %v953, %v944
        %v999 = vadd.s32 %v975, %v994
        %vm1000 = vc.u32 %v975, %v994
        %v1001 = vadd.s32 %v997, 1
        %v1002 = vsel %vm1000, %v1001, %v997
        %v1003 = vadd.s32 %v998, %v1002
        %v1004 = vadd.s32 %v1003, 536870912
        %v1005 = vshrl.u32 %v1004, 30
        %v1006 = vshll.u32 %v1005, 30
        %v1007 = vsub.s32 %v1003, %v1006
        %vm1008 = vcmp.lt.s32.totalorder %v1007, 0
        %v1009 = vsub.s32 0, %v1007
        %v1010 = vsel %vm1008, %v1009, %v1007
        %v1011 = vclz %v1010
        %v1012 = vsub.s32 %v1011, 2
        %vm1013 = vcmp.gt.s32.totalorder 0, %v1012
        %v1014 = vsel %vm1013, 0, %v1012
        %v1015 = vsub.s32 32, %v1014
        %v1016 = vshll.u32 %v1007, %v1014
        %v1017 = vshrl.u32 %v999, %v1015
        %v1018 = vor.u32 %v1016, %v1017
        %v1019 = vsub.s32 4294967266, %v1014
        %v1020 = vadd.s32 %v1019, 127
        %v1021 = vshll.u32 %v1020, 23
        %v1022 = vor.u32 4788187, %v1021
        %v1023 = vand.u32 2147483647, %v1022
        %v1025 = vcvt.s32.f32 %v1018
        %v1026 = vmul.f32 %v1025, %v1023
        %v1027 = vxor.u32 %v1026, 2147483648
        %v1028 = vsel %vm907, %v1027, %v1026
        %v1029 = vsub.s32 4, %v1005
        %v1030 = vsel %vm907, %v1029, %v1005
        %v1031 = vsel %vm906, %v565, %v1028
        %v1032 = vsel %vm906, 0, %v1030
        %v1033 = vmul.f32 %v1031, %v1031
        %v1034 = vmul.f32 %v1033, -0.001358992
        %v1035 = vadd.f32 %v1034, 0.041655596
        %v1036 = vmul.f32 %v1033, %v1035
        %v1037 = vadd.f32 %v1036, -0.4999988
        %v1038 = vmul.f32 %v1033, %v1037
        %v1039 = vadd.f32 1.0, %v1038
        %v1040 = vmul.f32 %v1031, %v1031
        %v1041 = vmul.f32 %v1040, -0.00019511016
        %v1042 = vadd.f32 %v1041, 0.008332121
        %v1043 = vmul.f32 %v1040, %v1042
        %v1044 = vadd.f32 %v1043, -0.16666654
        %v1045 = vmul.f32 %v1040, %v1044
        %v1046 = vadd.f32 %v1045, 1.0
        %v1047 = vmul.f32 %v1046, %v1031
        %vm1048 = vweird.f32 %v565
        %v1049 = vadd.s32 %v1032, 3
        %v1050 = vand.u32 %v1049, 3
        %vm1051 = vcmp.lt.s32.totalorder %v1050, 2
        %vm1052 = vcmp.eq.s32.totalorder %v1050, 0
        %v1053 = vxor.u32 %v1047, 2147483648
        %v1054 = vsel %vm1052, %v1039, %v1053
        %vm1055 = vcmp.eq.s32.totalorder %v1050, 2
        %v1056 = vxor.u32 %v1039, 2147483648
        %v1057 = vsel %vm1055, %v1056, %v1047
        %v1058 = vsel %vm1051, %v1054, %v1057
        %v1059 = vsel %vm1048, nan, %v1058
        %v1060 = vand.u32 2147483647, %v566
        %vm1061 = vcmp.le.f32.partialorder %v1060, 0.7853982
        %vm1062 = vcmp.lt.s32.totalorder %v566, 0
        %v1063 = vand.u32 %v566, 2139095040
        %v1064 = vshrl.u32 %v1063, 23
        %v1065 = vsub.s32 %v1064, 127
        %v1066 = vand.u32 2147483647, %v566
        %v1067 = vand.u32 %v1066, 8388607
        %v1068 = vor.u32 %v1067, 8388608
        %v1069 = vsub.s32 0, %v1068
        %v1070 = vadd.s32 %v1065, 1
        %vm1071 = vcmp.gt.s32.totalorder %v1070, 0
        %v1072 = vsel %vm1071, %v1070, 0
        %v1073 = vshrl.u32 %v1072, 5
        %v1074 = vand.u32 %v1072, 31
        %v1075 = vsub.s32 32, %v1074
        %v1076 = vshrl.u32 683565275, %v1075
        %v1077 = vshll.u32 683565275, %v1074
        %v1078 = vshrl.u32 2475754826, %v1075
        %v1079 = vor.u32 %v1077, %v1078
        %v1080 = vshll.u32 2475754826, %v1074
        %v1081 = vshrl.u32 2131351028, %v1075
        %v1082 = vor.u32 %v1080, %v1081
        %v1083 = vshll.u32 2131351028, %v1074
        %v1084 = vshrl.u32 2102212464, %v1075
        %v1085 = vor.u32 %v1083, %v1084
        %v1086 = vshll.u32 2102212464, %v1074
        %v1087 = vshrl.u32 920167782, %v1075
        %v1088 = vor.u32 %v1086, %v1087
        %v1089 = vshll.u32 920167782, %v1074
        %v1090 = vshrl.u32 1326507024, %v1075
        %v1091 = vor.u32 %v1089, %v1090
        %vm1092 = vcmp.lt.s32.totalorder %v1073, 1
        %vm1093 = vcmp.lt.s32.totalorder %v1073, 2
        %vm1094 = vcmp.lt.s32.totalorder %v1073, 3
        %vm1095 = vcmp.lt.s32.totalorder %v1073, 4
        %v1096 = vsel %vm1092, %v1076, %v1079
        %v1097 = vsel %vm1095, %v1085, 2102212464
        %v1098 = vsel %vm1094, %v1082, %v1097
        %v1099 = vsel %vm1093, %v1096, %v1098
        %v1100 = vsel %vm1092, %v1079, %v1082
        %v1101 = vsel %vm1095, %v1088, 920167782
        %v1102 = vsel %vm1094, %v1085, %v1101
        %v1103 = vsel %vm1093, %v1100, %v1102
        %v1104 = vsel %vm1092, %v1082, %v1085
        %v1105 = vsel %vm1095, %v1091, 1326507024
        %v1106 = vsel %vm1094, %v1088, %v1105
        %v1107 = vsel %vm1093, %v1104, %v1106
        %v1108 = vshll.u32 %v1068, 8
        %v1109 = vand.u32 %v1108, 65535
        %v1110 = vshrl.u32 %v1108, 16
        %v1111 = vand.u32 %v1107, 65535
        %v1112 = vshrl.u32 %v1107, 16
        %v1113 = vmul.u32 %v1109, %v1111
        %v1114 = vmul.u32 %v1109, %v1112
        %v1115 = vmul.u32 %v1110, %v1111
        %v1116 = vmul.u32 %v1110, %v1112
        %v1117 = vshll.u32 %v1114, 16
        %v1118 = vshrl.u32 %v1114, 16
        %v1119 = vshll.u32 %v1115, 16
        %v1120 = vshrl.u32 %v1115, 16
        %vm1121 = vc.u32 %v1113, %v1117
        %v1122 = vsel %vm1121, 1, 0
        %v1123 = vadd.s32 %v1113, %v1117
        %v1124 = vadd.s32 %v1116, %v1122
        %vm1125 = vc.u32 %v1123, %v1119
        %v1126 = vsel %vm1125, 1, 0
        %v1127 = vadd.s32 %v1123, %v1119
        %v1128 = vadd.s32 %v1124, %v1126
        %v1129 = vadd.s32 %v1128, %v1118
        %v1130 = vadd.s32 %v1129, %v1120
        %v1131 = vand.u32 %v1108, 65535
        %v1132 = vshrl.u32 %v1108, 16
        %v1133 = vand.u32 %v1103, 65535
        %v1134 = vshrl.u32 %v1103, 16
        %v1135 = vmul.u32 %v1131, %v1133
        %v1136 = vmul.u32 %v1131, %v1134
        %v1137 = vmul.u32 %v1132, %v1133
        %v1138 = vmul.u32 %v1132, %v1134
        %v1139 = vshll.u32 %v1136, 16
        %v1140 = vshrl.u32 %v1136, 16
        %v1141 = vshll.u32 %v1137, 16
        %v1142 = vshrl.u32 %v1137, 16
        %vm1143 = vc.u32 %v1135, %v1139
        %v1144 = vsel %vm1143, 1, 0
        %v1145 = vadd.s32 %v1135, %v1139
        %v1146 = vadd.s32 %v1138, %v1144
        %vm1147 = vc.u32 %v1145, %v1141
        %v1148 = vsel %vm1147, 1, 0
        %v1149 = vadd.s32 %v1145, %v1141
        %v1150 = vadd.s32 %v1146, %v1148
        %v1151 = vadd.s32 %v1150, %v1140
        %v1152 = vadd.s32 %v1151, %v1142
        %v1153 = vmul.u32 %v1108, %v1099
        %v1154 = vadd.s32 %v1130, %v1149
        %vm1155 = vc.u32 %v1130, %v1149
        %v1156 = vadd.s32 %v1152, 1
        %v1157 = vsel %vm1155, %v1156, %v1152
        %v1158 = vadd.s32 %v1153, %v1157
        %v1159 = vadd.s32 %v1158, 536870912
        %v1160 = vshrl.u32 %v1159, 30
        %v1161 = vshll.u32 %v1160, 30
        %v1162 = vsub.s32 %v1158, %v1161
        %vm1163 = vcmp.lt.s32.totalorder %v1162, 0
        %v1164 = vsub.s32 0, %v1162
        %v1165 = vsel %vm1163, %v1164, %v1162
        %v1166 = vclz %v1165
        %v1167 = vsub.s32 %v1166, 2
        %vm1168 = vcmp.gt.s32.totalorder 0, %v1167
        %v1169 = vsel %vm1168, 0, %v1167
        %v1170 = vsub.s32 32, %v1169
        %v1171 = vshll.u32 %v1162, %v1169
        %v1172 = vshrl.u32 %v1154, %v1170
        %v1173 = vor.u32 %v1171, %v1172
        %v1174 = vsub.s32 4294967266, %v1169
        %v1175 = vadd.s32 %v1174, 127
        %v1176 = vshll.u32 %v1175, 23
        %v1177 = vor.u32 4788187, %v1176
        %v1178 = vand.u32 2147483647, %v1177
        %v1180 = vcvt.s32.f32 %v1173
        %v1181 = vmul.f32 %v1180, %v1178
        %v1182 = vxor.u32 %v1181, 2147483648
        %v1183 = vsel %vm1062, %v1182, %v1181
        %v1184 = vsub.s32 4, %v1160
        %v1185 = vsel %vm1062, %v1184, %v1160
        %v1186 = vsel %vm1061, %v566, %v1183
        %v1187 = vsel %vm1061, 0, %v1185
        %v1188 = vmul.f32 %v1186, %v1186
        %v1189 = vmul.f32 %v1188, -0.001358992
        %v1190 = vadd.f32 %v1189, 0.041655596
        %v1191 = vmul.f32 %v1188, %v1190
        %v1192 = vadd.f32 %v1191, -0.4999988
        %v1193 = vmul.f32 %v1188, %v1192
        %v1194 = vadd.f32 1.0, %v1193
        %v1195 = vmul.f32 %v1186, %v1186
        %v1196 = vmul.f32 %v1195, -0.00019511016
        %v1197 = vadd.f32 %v1196, 0.008332121
        %v1198 = vmul.f32 %v1195, %v1197
        %v1199 = vadd.f32 %v1198, -0.16666654
        %v1200 = vmul.f32 %v1195, %v1199
        %v1201 = vadd.f32 %v1200, 1.0
        %v1202 = vmul.f32 %v1201, %v1186
        %vm1203 = vweird.f32 %v566
        %v1204 = vadd.s32 %v1187, 3
        %v1205 = vand.u32 %v1204, 3
        %vm1206 = vcmp.lt.s32.totalorder %v1205, 2
        %vm1207 = vcmp.eq.s32.totalorder %v1205, 0
        %v1208 = vxor.u32 %v1202, 2147483648
        %v1209 = vsel %vm1207, %v1194, %v1208
        %vm1210 = vcmp.eq.s32.totalorder %v1205, 2
        %v1211 = vxor.u32 %v1194, 2147483648
        %v1212 = vsel %vm1210, %v1211, %v1202
        %v1213 = vsel %vm1206, %v1209, %v1212
        %v1214 = vsel %vm1203, nan, %v1213
        %v1215 = vand.u32 2147483647, %v567
        %vm1216 = vcmp.le.f32.partialorder %v1215, 0.7853982
        %vm1217 = vcmp.lt.s32.totalorder %v567, 0
        %v1218 = vand.u32 %v567, 2139095040
        %v1219 = vshrl.u32 %v1218, 23
        %v1220 = vsub.s32 %v1219, 127
        %v1221 = vand.u32 2147483647, %v567
        %v1222 = vand.u32 %v1221, 8388607
        %v1223 = vor.u32 %v1222, 8388608
        %v1224 = vsub.s32 0, %v1223
        %v1225 = vadd.s32 %v1220, 1
        %vm1226 = vcmp.gt.s32.totalorder %v1225, 0
        %v1227 = vsel %vm1226, %v1225, 0
        %v1228 = vshrl.u32 %v1227, 5
        %v1229 = vand.u32 %v1227, 31
        %v1230 = vsub.s32 32, %v1229
        %v1231 = vshrl.u32 683565275, %v1230
        %v1232 = vshll.u32 683565275, %v1229
        %v1233 = vshrl.u32 2475754826, %v1230
        %v1234 = vor.u32 %v1232, %v1233
        %v1235 = vshll.u32 2475754826, %v1229
        %v1236 = vshrl.u32 2131351028, %v1230
        %v1237 = vor.u32 %v1235, %v1236
        %v1238 = vshll.u32 2131351028, %v1229
        %v1239 = vshrl.u32 2102212464, %v1230
        %v1240 = vor.u32 %v1238, %v1239
        %v1241 = vshll.u32 2102212464, %v1229
        %v1242 = vshrl.u32 920167782, %v1230
        %v1243 = vor.u32 %v1241, %v1242
        %v1244 = vshll.u32 920167782, %v1229
        %v1245 = vshrl.u32 1326507024, %v1230
        %v1246 = vor.u32 %v1244, %v1245
        %vm1247 = vcmp.lt.s32.totalorder %v1228, 1
        %vm1248 = vcmp.lt.s32.totalorder %v1228, 2
        %vm1249 = vcmp.lt.s32.totalorder %v1228, 3
        %vm1250 = vcmp.lt.s32.totalorder %v1228, 4
        %v1251 = vsel %vm1247, %v1231, %v1234
        %v1252 = vsel %vm1250, %v1240, 2102212464
        %v1253 = vsel %vm1249, %v1237, %v1252
        %v1254 = vsel %vm1248, %v1251, %v1253
        %v1255 = vsel %vm1247, %v1234, %v1237
        %v1256 = vsel %vm1250, %v1243, 920167782
        %v1257 = vsel %vm1249, %v1240, %v1256
        %v1258 = vsel %vm1248, %v1255, %v1257
        %v1259 = vsel %vm1247, %v1237, %v1240
        %v1260 = vsel %vm1250, %v1246, 1326507024
        %v1261 = vsel %vm1249, %v1243, %v1260
        %v1262 = vsel %vm1248, %v1259, %v1261
        %v1263 = vshll.u32 %v1223, 8
        %v1264 = vand.u32 %v1263, 65535
        %v1265 = vshrl.u32 %v1263, 16
        %v1266 = vand.u32 %v1262, 65535
        %v1267 = vshrl.u32 %v1262, 16
        %v1268 = vmul.u32 %v1264, %v1266
        %v1269 = vmul.u32 %v1264, %v1267
        %v1270 = vmul.u32 %v1265, %v1266
        %v1271 = vmul.u32 %v1265, %v1267
        %v1272 = vshll.u32 %v1269, 16
        %v1273 = vshrl.u32 %v1269, 16
        %v1274 = vshll.u32 %v1270, 16
        %v1275 = vshrl.u32 %v1270, 16
        %vm1276 = vc.u32 %v1268, %v1272
        %v1277 = vsel %vm1276, 1, 0
        %v1278 = vadd.s32 %v1268, %v1272
        %v1279 = vadd.s32 %v1271, %v1277
        %vm1280 = vc.u32 %v1278, %v1274
        %v1281 = vsel %vm1280, 1, 0
        %v1282 = vadd.s32 %v1278, %v1274
        %v1283 = vadd.s32 %v1279, %v1281
        %v1284 = vadd.s32 %v1283, %v1273
        %v1285 = vadd.s32 %v1284, %v1275
        %v1286 = vand.u32 %v1263, 65535
        %v1287 = vshrl.u32 %v1263, 16
        %v1288 = vand.u32 %v1258, 65535
        %v1289 = vshrl.u32 %v1258, 16
        %v1290 = vmul.u32 %v1286, %v1288
        %v1291 = vmul.u32 %v1286, %v1289
        %v1292 = vmul.u32 %v1287, %v1288
        %v1293 = vmul.u32 %v1287, %v1289
        %v1294 = vshll.u32 %v1291, 16
        %v1295 = vshrl.u32 %v1291, 16
        %v1296 = vshll.u32 %v1292, 16
        %v1297 = vshrl.u32 %v1292, 16
        %vm1298 = vc.u32 %v1290, %v1294
        %v1299 = vsel %vm1298, 1, 0
        %v1300 = vadd.s32 %v1290, %v1294
        %v1301 = vadd.s32 %v1293, %v1299
        %vm1302 = vc.u32 %v1300, %v1296
        %v1303 = vsel %vm1302, 1, 0
        %v1304 = vadd.s32 %v1300, %v1296
        %v1305 = vadd.s32 %v1301, %v1303
        %v1306 = vadd.s32 %v1305, %v1295
        %v1307 = vadd.s32 %v1306, %v1297
        %v1308 = vmul.u32 %v1263, %v1254
        %v1309 = vadd.s32 %v1285, %v1304
        %vm1310 = vc.u32 %v1285, %v1304
        %v1311 = vadd.s32 %v1307, 1
        %v1312 = vsel %vm1310, %v1311, %v1307
        %v1313 = vadd.s32 %v1308, %v1312
        %v1314 = vadd.s32 %v1313, 536870912
        %v1315 = vshrl.u32 %v1314, 30
        %v1316 = vshll.u32 %v1315, 30
        %v1317 = vsub.s32 %v1313, %v1316
        %vm1318 = vcmp.lt.s32.totalorder %v1317, 0
        %v1319 = vsub.s32 0, %v1317
        %v1320 = vsel %vm1318, %v1319, %v1317
        %v1321 = vclz %v1320
        %v1322 = vsub.s32 %v1321, 2
        %vm1323 = vcmp.gt.s32.totalorder 0, %v1322
        %v1324 = vsel %vm1323, 0, %v1322
        %v1325 = vsub.s32 32, %v1324
        %v1326 = vshll.u32 %v1317, %v1324
        %v1327 = vshrl.u32 %v1309, %v1325
        %v1328 = vor.u32 %v1326, %v1327
        %v1329 = vsub.s32 4294967266, %v1324
        %v1330 = vadd.s32 %v1329, 127
        %v1331 = vshll.u32 %v1330, 23
        %v1332 = vor.u32 4788187, %v1331
        %v1333 = vand.u32 2147483647, %v1332
        %v1335 = vcvt.s32.f32 %v1328
        %v1336 = vmul.f32 %v1335, %v1333
        %v1337 = vxor.u32 %v1336, 2147483648
        %v1338 = vsel %vm1217, %v1337, %v1336
        %v1339 = vsub.s32 4, %v1315
        %v1340 = vsel %vm1217, %v1339, %v1315
        %v1341 = vsel %vm1216, %v567, %v1338
        %v1342 = vsel %vm1216, 0, %v1340
        %v1343 = vmul.f32 %v1341, %v1341
        %v1344 = vmul.f32 %v1343, -0.001358992
        %v1345 = vadd.f32 %v1344, 0.041655596
        %v1346 = vmul.f32 %v1343, %v1345
        %v1347 = vadd.f32 %v1346, -0.4999988
        %v1348 = vmul.f32 %v1343, %v1347
        %v1349 = vadd.f32 1.0, %v1348
        %v1350 = vmul.f32 %v1341, %v1341
        %v1351 = vmul.f32 %v1350, -0.00019511016
        %v1352 = vadd.f32 %v1351, 0.008332121
        %v1353 = vmul.f32 %v1350, %v1352
        %v1354 = vadd.f32 %v1353, -0.16666654
        %v1355 = vmul.f32 %v1350, %v1354
        %v1356 = vadd.f32 %v1355, 1.0
        %v1357 = vmul.f32 %v1356, %v1341
        %vm1358 = vweird.f32 %v567
        %v1359 = vadd.s32 %v1342, 3
        %v1360 = vand.u32 %v1359, 3
        %vm1361 = vcmp.lt.s32.totalorder %v1360, 2
        %vm1362 = vcmp.eq.s32.totalorder %v1360, 0
        %v1363 = vxor.u32 %v1357, 2147483648
        %v1364 = vsel %vm1362, %v1349, %v1363
        %vm1365 = vcmp.eq.s32.totalorder %v1360, 2
        %v1366 = vxor.u32 %v1349, 2147483648
        %v1367 = vsel %vm1365, %v1366, %v1357
        %v1368 = vsel %vm1361, %v1364, %v1367
        %v1369 = vsel %vm1358, nan, %v1368
        %v1370 = vand.u32 2147483647, %v568
        %vm1371 = vcmp.le.f32.partialorder %v1370, 0.7853982
        %vm1372 = vcmp.lt.s32.totalorder %v568, 0
        %v1373 = vand.u32 %v568, 2139095040
        %v1374 = vshrl.u32 %v1373, 23
        %v1375 = vsub.s32 %v1374, 127
        %v1376 = vand.u32 2147483647, %v568
        %v1377 = vand.u32 %v1376, 8388607
        %v1378 = vor.u32 %v1377, 8388608
        %v1379 = vsub.s32 0, %v1378
        %v1380 = vadd.s32 %v1375, 1
        %vm1381 = vcmp.gt.s32.totalorder %v1380, 0
        %v1382 = vsel %vm1381, %v1380, 0
        %v1383 = vshrl.u32 %v1382, 5
        %v1384 = vand.u32 %v1382, 31
        %v1385 = vsub.s32 32, %v1384
        %v1386 = vshrl.u32 683565275, %v1385
        %v1387 = vshll.u32 683565275, %v1384
        %v1388 = vshrl.u32 2475754826, %v1385
        %v1389 = vor.u32 %v1387, %v1388
        %v1390 = vshll.u32 2475754826, %v1384
        %v1391 = vshrl.u32 2131351028, %v1385
        %v1392 = vor.u32 %v1390, %v1391
        %v1393 = vshll.u32 2131351028, %v1384
        %v1394 = vshrl.u32 2102212464, %v1385
        %v1395 = vor.u32 %v1393, %v1394
        %v1396 = vshll.u32 2102212464, %v1384
        %v1397 = vshrl.u32 920167782, %v1385
        %v1398 = vor.u32 %v1396, %v1397
        %v1399 = vshll.u32 920167782, %v1384
        %v1400 = vshrl.u32 1326507024, %v1385
        %v1401 = vor.u32 %v1399, %v1400
        %vm1402 = vcmp.lt.s32.totalorder %v1383, 1
        %vm1403 = vcmp.lt.s32.totalorder %v1383, 2
        %vm1404 = vcmp.lt.s32.totalorder %v1383, 3
        %vm1405 = vcmp.lt.s32.totalorder %v1383, 4
        %v1406 = vsel %vm1402, %v1386, %v1389
        %v1407 = vsel %vm1405, %v1395, 2102212464
        %v1408 = vsel %vm1404, %v1392, %v1407
        %v1409 = vsel %vm1403, %v1406, %v1408
        %v1410 = vsel %vm1402, %v1389, %v1392
        %v1411 = vsel %vm1405, %v1398, 920167782
        %v1412 = vsel %vm1404, %v1395, %v1411
        %v1413 = vsel %vm1403, %v1410, %v1412
        %v1414 = vsel %vm1402, %v1392, %v1395
        %v1415 = vsel %vm1405, %v1401, 1326507024
        %v1416 = vsel %vm1404, %v1398, %v1415
        %v1417 = vsel %vm1403, %v1414, %v1416
        %v1418 = vshll.u32 %v1378, 8
        %v1419 = vand.u32 %v1418, 65535
        %v1420 = vshrl.u32 %v1418, 16
        %v1421 = vand.u32 %v1417, 65535
        %v1422 = vshrl.u32 %v1417, 16
        %v1423 = vmul.u32 %v1419, %v1421
        %v1424 = vmul.u32 %v1419, %v1422
        %v1425 = vmul.u32 %v1420, %v1421
        %v1426 = vmul.u32 %v1420, %v1422
        %v1427 = vshll.u32 %v1424, 16
        %v1428 = vshrl.u32 %v1424, 16
        %v1429 = vshll.u32 %v1425, 16
        %v1430 = vshrl.u32 %v1425, 16
        %vm1431 = vc.u32 %v1423, %v1427
        %v1432 = vsel %vm1431, 1, 0
        %v1433 = vadd.s32 %v1423, %v1427
        %v1434 = vadd.s32 %v1426, %v1432
        %vm1435 = vc.u32 %v1433, %v1429
        %v1436 = vsel %vm1435, 1, 0
        %v1437 = vadd.s32 %v1433, %v1429
        %v1438 = vadd.s32 %v1434, %v1436
        %v1439 = vadd.s32 %v1438, %v1428
        %v1440 = vadd.s32 %v1439, %v1430
        %v1441 = vand.u32 %v1418, 65535
        %v1442 = vshrl.u32 %v1418, 16
        %v1443 = vand.u32 %v1413, 65535
        %v1444 = vshrl.u32 %v1413, 16
        %v1445 = vmul.u32 %v1441, %v1443
        %v1446 = vmul.u32 %v1441, %v1444
        %v1447 = vmul.u32 %v1442, %v1443
        %v1448 = vmul.u32 %v1442, %v1444
        %v1449 = vshll.u32 %v1446, 16
        %v1450 = vshrl.u32 %v1446, 16
        %v1451 = vshll.u32 %v1447, 16
        %v1452 = vshrl.u32 %v1447, 16
        %vm1453 = vc.u32 %v1445, %v1449
        %v1454 = vsel %vm1453, 1, 0
        %v1455 = vadd.s32 %v1445, %v1449
        %v1456 = vadd.s32 %v1448, %v1454
        %vm1457 = vc.u32 %v1455, %v1451
        %v1458 = vsel %vm1457, 1, 0
        %v1459 = vadd.s32 %v1455, %v1451
        %v1460 = vadd.s32 %v1456, %v1458
        %v1461 = vadd.s32 %v1460, %v1450
        %v1462 = vadd.s32 %v1461, %v1452
        %v1463 = vmul.u32 %v1418, %v1409
        %v1464 = vadd.s32 %v1440, %v1459
        %vm1465 = vc.u32 %v1440, %v1459
        %v1466 = vadd.s32 %v1462, 1
        %v1467 = vsel %vm1465, %v1466, %v1462
        %v1468 = vadd.s32 %v1463, %v1467
        %v1469 = vadd.s32 %v1468, 536870912
        %v1470 = vshrl.u32 %v1469, 30
        %v1471 = vshll.u32 %v1470, 30
        %v1472 = vsub.s32 %v1468, %v1471
        %vm1473 = vcmp.lt.s32.totalorder %v1472, 0
        %v1474 = vsub.s32 0, %v1472
        %v1475 = vsel %vm1473, %v1474, %v1472
        %v1476 = vclz %v1475
        %v1477 = vsub.s32 %v1476, 2
        %vm1478 = vcmp.gt.s32.totalorder 0, %v1477
        %v1479 = vsel %vm1478, 0, %v1477
        %v1480 = vsub.s32 32, %v1479
        %v1481 = vshll.u32 %v1472, %v1479
        %v1482 = vshrl.u32 %v1464, %v1480
        %v1483 = vor.u32 %v1481, %v1482
        %v1484 = vsub.s32 4294967266, %v1479
        %v1485 = vadd.s32 %v1484, 127
        %v1486 = vshll.u32 %v1485, 23
        %v1487 = vor.u32 4788187, %v1486
        %v1488 = vand.u32 2147483647, %v1487
        %v1490 = vcvt.s32.f32 %v1483
        %v1491 = vmul.f32 %v1490, %v1488
        %v1492 = vxor.u32 %v1491, 2147483648
        %v1493 = vsel %vm1372, %v1492, %v1491
        %v1494 = vsub.s32 4, %v1470
        %v1495 = vsel %vm1372, %v1494, %v1470
        %v1496 = vsel %vm1371, %v568, %v1493
        %v1497 = vsel %vm1371, 0, %v1495
        %v1498 = vmul.f32 %v1496, %v1496
        %v1499 = vmul.f32 %v1498, -0.001358992
        %v1500 = vadd.f32 %v1499, 0.041655596
        %v1501 = vmul.f32 %v1498, %v1500
        %v1502 = vadd.f32 %v1501, -0.4999988
        %v1503 = vmul.f32 %v1498, %v1502
        %v1504 = vadd.f32 1.0, %v1503
        %v1505 = vmul.f32 %v1496, %v1496
        %v1506 = vmul.f32 %v1505, -0.00019511016
        %v1507 = vadd.f32 %v1506, 0.008332121
        %v1508 = vmul.f32 %v1505, %v1507
        %v1509 = vadd.f32 %v1508, -0.16666654
        %v1510 = vmul.f32 %v1505, %v1509
        %v1511 = vadd.f32 %v1510, 1.0
        %v1512 = vmul.f32 %v1511, %v1496
        %vm1513 = vweird.f32 %v568
        %v1514 = vadd.s32 %v1497, 3
        %v1515 = vand.u32 %v1514, 3
        %vm1516 = vcmp.lt.s32.totalorder %v1515, 2
        %vm1517 = vcmp.eq.s32.totalorder %v1515, 0
        %v1518 = vxor.u32 %v1512, 2147483648
        %v1519 = vsel %vm1517, %v1504, %v1518
        %vm1520 = vcmp.eq.s32.totalorder %v1515, 2
        %v1521 = vxor.u32 %v1504, 2147483648
        %v1522 = vsel %vm1520, %v1521, %v1512
        %v1523 = vsel %vm1516, %v1519, %v1522
        %v1524 = vsel %vm1513, nan, %v1523
        %v1525 = vand.u32 2147483647, %v569
        %vm1526 = vcmp.le.f32.partialorder %v1525, 0.7853982
        %vm1527 = vcmp.lt.s32.totalorder %v569, 0
        %v1528 = vand.u32 %v569, 2139095040
        %v1529 = vshrl.u32 %v1528, 23
        %v1530 = vsub.s32 %v1529, 127
        %v1531 = vand.u32 2147483647, %v569
        %v1532 = vand.u32 %v1531, 8388607
        %v1533 = vor.u32 %v1532, 8388608
        %v1534 = vsub.s32 0, %v1533
        %v1535 = vadd.s32 %v1530, 1
        %vm1536 = vcmp.gt.s32.totalorder %v1535, 0
        %v1537 = vsel %vm1536, %v1535, 0
        %v1538 = vshrl.u32 %v1537, 5
        %v1539 = vand.u32 %v1537, 31
        %v1540 = vsub.s32 32, %v1539
        %v1541 = vshrl.u32 683565275, %v1540
        %v1542 = vshll.u32 683565275, %v1539
        %v1543 = vshrl.u32 2475754826, %v1540
        %v1544 = vor.u32 %v1542, %v1543
        %v1545 = vshll.u32 2475754826, %v1539
        %v1546 = vshrl.u32 2131351028, %v1540
        %v1547 = vor.u32 %v1545, %v1546
        %v1548 = vshll.u32 2131351028, %v1539
        %v1549 = vshrl.u32 2102212464, %v1540
        %v1550 = vor.u32 %v1548, %v1549
        %v1551 = vshll.u32 2102212464, %v1539
        %v1552 = vshrl.u32 920167782, %v1540
        %v1553 = vor.u32 %v1551, %v1552
        %v1554 = vshll.u32 920167782, %v1539
        %v1555 = vshrl.u32 1326507024, %v1540
        %v1556 = vor.u32 %v1554, %v1555
        %vm1557 = vcmp.lt.s32.totalorder %v1538, 1
        %vm1558 = vcmp.lt.s32.totalorder %v1538, 2
        %vm1559 = vcmp.lt.s32.totalorder %v1538, 3
        %vm1560 = vcmp.lt.s32.totalorder %v1538, 4
        %v1561 = vsel %vm1557, %v1541, %v1544
        %v1562 = vsel %vm1560, %v1550, 2102212464
        %v1563 = vsel %vm1559, %v1547, %v1562
        %v1564 = vsel %vm1558, %v1561, %v1563
        %v1565 = vsel %vm1557, %v1544, %v1547
        %v1566 = vsel %vm1560, %v1553, 920167782
        %v1567 = vsel %vm1559, %v1550, %v1566
        %v1568 = vsel %vm1558, %v1565, %v1567
        %v1569 = vsel %vm1557, %v1547, %v1550
        %v1570 = vsel %vm1560, %v1556, 1326507024
        %v1571 = vsel %vm1559, %v1553, %v1570
        %v1572 = vsel %vm1558, %v1569, %v1571
        %v1573 = vshll.u32 %v1533, 8
        %v1574 = vand.u32 %v1573, 65535
        %v1575 = vshrl.u32 %v1573, 16
        %v1576 = vand.u32 %v1572, 65535
        %v1577 = vshrl.u32 %v1572, 16
        %v1578 = vmul.u32 %v1574, %v1576
        %v1579 = vmul.u32 %v1574, %v1577
        %v1580 = vmul.u32 %v1575, %v1576
        %v1581 = vmul.u32 %v1575, %v1577
        %v1582 = vshll.u32 %v1579, 16
        %v1583 = vshrl.u32 %v1579, 16
        %v1584 = vshll.u32 %v1580, 16
        %v1585 = vshrl.u32 %v1580, 16
        %vm1586 = vc.u32 %v1578, %v1582
        %v1587 = vsel %vm1586, 1, 0
        %v1588 = vadd.s32 %v1578, %v1582
        %v1589 = vadd.s32 %v1581, %v1587
        %vm1590 = vc.u32 %v1588, %v1584
        %v1591 = vsel %vm1590, 1, 0
        %v1592 = vadd.s32 %v1588, %v1584
        %v1593 = vadd.s32 %v1589, %v1591
        %v1594 = vadd.s32 %v1593, %v1583
        %v1595 = vadd.s32 %v1594, %v1585
        %v1596 = vand.u32 %v1573, 65535
        %v1597 = vshrl.u32 %v1573, 16
        %v1598 = vand.u32 %v1568, 65535
        %v1599 = vshrl.u32 %v1568, 16
        %v1600 = vmul.u32 %v1596, %v1598
        %v1601 = vmul.u32 %v1596, %v1599
        %v1602 = vmul.u32 %v1597, %v1598
        %v1603 = vmul.u32 %v1597, %v1599
        %v1604 = vshll.u32 %v1601, 16
        %v1605 = vshrl.u32 %v1601, 16
        %v1606 = vshll.u32 %v1602, 16
        %v1607 = vshrl.u32 %v1602, 16
        %vm1608 = vc.u32 %v1600, %v1604
        %v1609 = vsel %vm1608, 1, 0
        %v1610 = vadd.s32 %v1600, %v1604
        %v1611 = vadd.s32 %v1603, %v1609
        %vm1612 = vc.u32 %v1610, %v1606
        %v1613 = vsel %vm1612, 1, 0
        %v1614 = vadd.s32 %v1610, %v1606
        %v1615 = vadd.s32 %v1611, %v1613
        %v1616 = vadd.s32 %v1615, %v1605
        %v1617 = vadd.s32 %v1616, %v1607
        %v1618 = vmul.u32 %v1573, %v1564
        %v1619 = vadd.s32 %v1595, %v1614
        %vm1620 = vc.u32 %v1595, %v1614
        %v1621 = vadd.s32 %v1617, 1
        %v1622 = vsel %vm1620, %v1621, %v1617
        %v1623 = vadd.s32 %v1618, %v1622
        %v1624 = vadd.s32 %v1623, 536870912
        %v1625 = vshrl.u32 %v1624, 30
        %v1626 = vshll.u32 %v1625, 30
        %v1627 = vsub.s32 %v1623, %v1626
        %vm1628 = vcmp.lt.s32.totalorder %v1627, 0
        %v1629 = vsub.s32 0, %v1627
        %v1630 = vsel %vm1628, %v1629, %v1627
        %v1631 = vclz %v1630
        %v1632 = vsub.s32 %v1631, 2
        %vm1633 = vcmp.gt.s32.totalorder 0, %v1632
        %v1634 = vsel %vm1633, 0, %v1632
        %v1635 = vsub.s32 32, %v1634
        %v1636 = vshll.u32 %v1627, %v1634
        %v1637 = vshrl.u32 %v1619, %v1635
        %v1638 = vor.u32 %v1636, %v1637
        %v1639 = vsub.s32 4294967266, %v1634
        %v1640 = vadd.s32 %v1639, 127
        %v1641 = vshll.u32 %v1640, 23
        %v1642 = vor.u32 4788187, %v1641
        %v1643 = vand.u32 2147483647, %v1642
        %v1645 = vcvt.s32.f32 %v1638
        %v1646 = vmul.f32 %v1645, %v1643
        %v1647 = vxor.u32 %v1646, 2147483648
        %v1648 = vsel %vm1527, %v1647, %v1646
        %v1649 = vsub.s32 4, %v1625
        %v1650 = vsel %vm1527, %v1649, %v1625
        %v1651 = vsel %vm1526, %v569, %v1648
        %v1652 = vsel %vm1526, 0, %v1650
        %v1653 = vmul.f32 %v1651, %v1651
        %v1654 = vmul.f32 %v1653, -0.001358992
        %v1655 = vadd.f32 %v1654, 0.041655596
        %v1656 = vmul.f32 %v1653, %v1655
        %v1657 = vadd.f32 %v1656, -0.4999988
        %v1658 = vmul.f32 %v1653, %v1657
        %v1659 = vadd.f32 1.0, %v1658
        %v1660 = vmul.f32 %v1651, %v1651
        %v1661 = vmul.f32 %v1660, -0.00019511016
        %v1662 = vadd.f32 %v1661, 0.008332121
        %v1663 = vmul.f32 %v1660, %v1662
        %v1664 = vadd.f32 %v1663, -0.16666654
        %v1665 = vmul.f32 %v1660, %v1664
        %v1666 = vadd.f32 %v1665, 1.0
        %v1667 = vmul.f32 %v1666, %v1651
        %vm1668 = vweird.f32 %v569
        %v1669 = vadd.s32 %v1652, 3
        %v1670 = vand.u32 %v1669, 3
        %vm1671 = vcmp.lt.s32.totalorder %v1670, 2
        %vm1672 = vcmp.eq.s32.totalorder %v1670, 0
        %v1673 = vxor.u32 %v1667, 2147483648
        %v1674 = vsel %vm1672, %v1659, %v1673
        %vm1675 = vcmp.eq.s32.totalorder %v1670, 2
        %v1676 = vxor.u32 %v1659, 2147483648
        %v1677 = vsel %vm1675, %v1676, %v1667
        %v1678 = vsel %vm1671, %v1674, %v1677
        %v1679 = vsel %vm1668, nan, %v1678
        %v1680 = vand.u32 2147483647, %v570
        %vm1681 = vcmp.le.f32.partialorder %v1680, 0.7853982
        %vm1682 = vcmp.lt.s32.totalorder %v570, 0
        %v1683 = vand.u32 %v570, 2139095040
        %v1684 = vshrl.u32 %v1683, 23
        %v1685 = vsub.s32 %v1684, 127
        %v1686 = vand.u32 2147483647, %v570
        %v1687 = vand.u32 %v1686, 8388607
        %v1688 = vor.u32 %v1687, 8388608
        %v1689 = vsub.s32 0, %v1688
        %v1690 = vadd.s32 %v1685, 1
        %vm1691 = vcmp.gt.s32.totalorder %v1690, 0
        %v1692 = vsel %vm1691, %v1690, 0
        %v1693 = vshrl.u32 %v1692, 5
        %v1694 = vand.u32 %v1692, 31
        %v1695 = vsub.s32 32, %v1694
        %v1696 = vshrl.u32 683565275, %v1695
        %v1697 = vshll.u32 683565275, %v1694
        %v1698 = vshrl.u32 2475754826, %v1695
        %v1699 = vor.u32 %v1697, %v1698
        %v1700 = vshll.u32 2475754826, %v1694
        %v1701 = vshrl.u32 2131351028, %v1695
        %v1702 = vor.u32 %v1700, %v1701
        %v1703 = vshll.u32 2131351028, %v1694
        %v1704 = vshrl.u32 2102212464, %v1695
        %v1705 = vor.u32 %v1703, %v1704
        %v1706 = vshll.u32 2102212464, %v1694
        %v1707 = vshrl.u32 920167782, %v1695
        %v1708 = vor.u32 %v1706, %v1707
        %v1709 = vshll.u32 920167782, %v1694
        %v1710 = vshrl.u32 1326507024, %v1695
        %v1711 = vor.u32 %v1709, %v1710
        %vm1712 = vcmp.lt.s32.totalorder %v1693, 1
        %vm1713 = vcmp.lt.s32.totalorder %v1693, 2
        %vm1714 = vcmp.lt.s32.totalorder %v1693, 3
        %vm1715 = vcmp.lt.s32.totalorder %v1693, 4
        %v1716 = vsel %vm1712, %v1696, %v1699
        %v1717 = vsel %vm1715, %v1705, 2102212464
        %v1718 = vsel %vm1714, %v1702, %v1717
        %v1719 = vsel %vm1713, %v1716, %v1718
        %v1720 = vsel %vm1712, %v1699, %v1702
        %v1721 = vsel %vm1715, %v1708, 920167782
        %v1722 = vsel %vm1714, %v1705, %v1721
        %v1723 = vsel %vm1713, %v1720, %v1722
        %v1724 = vsel %vm1712, %v1702, %v1705
        %v1725 = vsel %vm1715, %v1711, 1326507024
        %v1726 = vsel %vm1714, %v1708, %v1725
        %v1727 = vsel %vm1713, %v1724, %v1726
        %v1728 = vshll.u32 %v1688, 8
        %v1729 = vand.u32 %v1728, 65535
        %v1730 = vshrl.u32 %v1728, 16
        %v1731 = vand.u32 %v1727, 65535
        %v1732 = vshrl.u32 %v1727, 16
        %v1733 = vmul.u32 %v1729, %v1731
        %v1734 = vmul.u32 %v1729, %v1732
        %v1735 = vmul.u32 %v1730, %v1731
        %v1736 = vmul.u32 %v1730, %v1732
        %v1737 = vshll.u32 %v1734, 16
        %v1738 = vshrl.u32 %v1734, 16
        %v1739 = vshll.u32 %v1735, 16
        %v1740 = vshrl.u32 %v1735, 16
        %vm1741 = vc.u32 %v1733, %v1737
        %v1742 = vsel %vm1741, 1, 0
        %v1743 = vadd.s32 %v1733, %v1737
        %v1744 = vadd.s32 %v1736, %v1742
        %vm1745 = vc.u32 %v1743, %v1739
        %v1746 = vsel %vm1745, 1, 0
        %v1747 = vadd.s32 %v1743, %v1739
        %v1748 = vadd.s32 %v1744, %v1746
        %v1749 = vadd.s32 %v1748, %v1738
        %v1750 = vadd.s32 %v1749, %v1740
        %v1751 = vand.u32 %v1728, 65535
        %v1752 = vshrl.u32 %v1728, 16
        %v1753 = vand.u32 %v1723, 65535
        %v1754 = vshrl.u32 %v1723, 16
        %v1755 = vmul.u32 %v1751, %v1753
        %v1756 = vmul.u32 %v1751, %v1754
        %v1757 = vmul.u32 %v1752, %v1753
        %v1758 = vmul.u32 %v1752, %v1754
        %v1759 = vshll.u32 %v1756, 16
        %v1760 = vshrl.u32 %v1756, 16
        %v1761 = vshll.u32 %v1757, 16
        %v1762 = vshrl.u32 %v1757, 16
        %vm1763 = vc.u32 %v1755, %v1759
        %v1764 = vsel %vm1763, 1, 0
        %v1765 = vadd.s32 %v1755, %v1759
        %v1766 = vadd.s32 %v1758, %v1764
        %vm1767 = vc.u32 %v1765, %v1761
        %v1768 = vsel %vm1767, 1, 0
        %v1769 = vadd.s32 %v1765, %v1761
        %v1770 = vadd.s32 %v1766, %v1768
        %v1771 = vadd.s32 %v1770, %v1760
        %v1772 = vadd.s32 %v1771, %v1762
        %v1773 = vmul.u32 %v1728, %v1719
        %v1774 = vadd.s32 %v1750, %v1769
        %vm1775 = vc.u32 %v1750, %v1769
        %v1776 = vadd.s32 %v1772, 1
        %v1777 = vsel %vm1775, %v1776, %v1772
        %v1778 = vadd.s32 %v1773, %v1777
        %v1779 = vadd.s32 %v1778, 536870912
        %v1780 = vshrl.u32 %v1779, 30
        %v1781 = vshll.u32 %v1780, 30
        %v1782 = vsub.s32 %v1778, %v1781
        %vm1783 = vcmp.lt.s32.totalorder %v1782, 0
        %v1784 = vsub.s32 0, %v1782
        %v1785 = vsel %vm1783, %v1784, %v1782
        %v1786 = vclz %v1785
        %v1787 = vsub.s32 %v1786, 2
        %vm1788 = vcmp.gt.s32.totalorder 0, %v1787
        %v1789 = vsel %vm1788, 0, %v1787
        %v1790 = vsub.s32 32, %v1789
        %v1791 = vshll.u32 %v1782, %v1789
        %v1792 = vshrl.u32 %v1774, %v1790
        %v1793 = vor.u32 %v1791, %v1792
        %v1794 = vsub.s32 4294967266, %v1789
        %v1795 = vadd.s32 %v1794, 127
        %v1796 = vshll.u32 %v1795, 23
        %v1797 = vor.u32 4788187, %v1796
        %v1798 = vand.u32 2147483647, %v1797
        %v1800 = vcvt.s32.f32 %v1793
        %v1801 = vmul.f32 %v1800, %v1798
        %v1802 = vxor.u32 %v1801, 2147483648
        %v1803 = vsel %vm1682, %v1802, %v1801
        %v1804 = vsub.s32 4, %v1780
        %v1805 = vsel %vm1682, %v1804, %v1780
        %v1806 = vsel %vm1681, %v570, %v1803
        %v1807 = vsel %vm1681, 0, %v1805
        %v1808 = vmul.f32 %v1806, %v1806
        %v1809 = vmul.f32 %v1808, -0.001358992
        %v1810 = vadd.f32 %v1809, 0.041655596
        %v1811 = vmul.f32 %v1808, %v1810
        %v1812 = vadd.f32 %v1811, -0.4999988
        %v1813 = vmul.f32 %v1808, %v1812
        %v1814 = vadd.f32 1.0, %v1813
        %v1815 = vmul.f32 %v1806, %v1806
        %v1816 = vmul.f32 %v1815, -0.00019511016
        %v1817 = vadd.f32 %v1816, 0.008332121
        %v1818 = vmul.f32 %v1815, %v1817
        %v1819 = vadd.f32 %v1818, -0.16666654
        %v1820 = vmul.f32 %v1815, %v1819
        %v1821 = vadd.f32 %v1820, 1.0
        %v1822 = vmul.f32 %v1821, %v1806
        %vm1823 = vweird.f32 %v570
        %v1824 = vadd.s32 %v1807, 3
        %v1825 = vand.u32 %v1824, 3
        %vm1826 = vcmp.lt.s32.totalorder %v1825, 2
        %vm1827 = vcmp.eq.s32.totalorder %v1825, 0
        %v1828 = vxor.u32 %v1822, 2147483648
        %v1829 = vsel %vm1827, %v1814, %v1828
        %vm1830 = vcmp.eq.s32.totalorder %v1825, 2
        %v1831 = vxor.u32 %v1814, 2147483648
        %v1832 = vsel %vm1830, %v1831, %v1822
        %v1833 = vsel %vm1826, %v1829, %v1832
        %v1834 = vsel %vm1823, nan, %v1833
        %v1835 = vand.u32 2147483647, %v571
        %vm1836 = vcmp.le.f32.partialorder %v1835, 0.7853982
        %vm1837 = vcmp.lt.s32.totalorder %v571, 0
        %v1838 = vand.u32 %v571, 2139095040
        %v1839 = vshrl.u32 %v1838, 23
        %v1840 = vsub.s32 %v1839, 127
        %v1841 = vand.u32 2147483647, %v571
        %v1842 = vand.u32 %v1841, 8388607
        %v1843 = vor.u32 %v1842, 8388608
        %v1844 = vsub.s32 0, %v1843
        %v1845 = vadd.s32 %v1840, 1
        %vm1846 = vcmp.gt.s32.totalorder %v1845, 0
        %v1847 = vsel %vm1846, %v1845, 0
        %v1848 = vshrl.u32 %v1847, 5
        %v1849 = vand.u32 %v1847, 31
        %v1850 = vsub.s32 32, %v1849
        %v1851 = vshrl.u32 683565275, %v1850
        %v1852 = vshll.u32 683565275, %v1849
        %v1853 = vshrl.u32 2475754826, %v1850
        %v1854 = vor.u32 %v1852, %v1853
        %v1855 = vshll.u32 2475754826, %v1849
        %v1856 = vshrl.u32 2131351028, %v1850
        %v1857 = vor.u32 %v1855, %v1856
        %v1858 = vshll.u32 2131351028, %v1849
        %v1859 = vshrl.u32 2102212464, %v1850
        %v1860 = vor.u32 %v1858, %v1859
        %v1861 = vshll.u32 2102212464, %v1849
        %v1862 = vshrl.u32 920167782, %v1850
        %v1863 = vor.u32 %v1861, %v1862
        %v1864 = vshll.u32 920167782, %v1849
        %v1865 = vshrl.u32 1326507024, %v1850
        %v1866 = vor.u32 %v1864, %v1865
        %vm1867 = vcmp.lt.s32.totalorder %v1848, 1
        %vm1868 = vcmp.lt.s32.totalorder %v1848, 2
        %vm1869 = vcmp.lt.s32.totalorder %v1848, 3
        %vm1870 = vcmp.lt.s32.totalorder %v1848, 4
        %v1871 = vsel %vm1867, %v1851, %v1854
        %v1872 = vsel %vm1870, %v1860, 2102212464
        %v1873 = vsel %vm1869, %v1857, %v1872
        %v1874 = vsel %vm1868, %v1871, %v1873
        %v1875 = vsel %vm1867, %v1854, %v1857
        %v1876 = vsel %vm1870, %v1863, 920167782
        %v1877 = vsel %vm1869, %v1860, %v1876
        %v1878 = vsel %vm1868, %v1875, %v1877
        %v1879 = vsel %vm1867, %v1857, %v1860
        %v1880 = vsel %vm1870, %v1866, 1326507024
        %v1881 = vsel %vm1869, %v1863, %v1880
        %v1882 = vsel %vm1868, %v1879, %v1881
        %v1883 = vshll.u32 %v1843, 8
        %v1884 = vand.u32 %v1883, 65535
        %v1885 = vshrl.u32 %v1883, 16
        %v1886 = vand.u32 %v1882, 65535
        %v1887 = vshrl.u32 %v1882, 16
        %v1888 = vmul.u32 %v1884, %v1886
        %v1889 = vmul.u32 %v1884, %v1887
        %v1890 = vmul.u32 %v1885, %v1886
        %v1891 = vmul.u32 %v1885, %v1887
        %v1892 = vshll.u32 %v1889, 16
        %v1893 = vshrl.u32 %v1889, 16
        %v1894 = vshll.u32 %v1890, 16
        %v1895 = vshrl.u32 %v1890, 16
        %vm1896 = vc.u32 %v1888, %v1892
        %v1897 = vsel %vm1896, 1, 0
        %v1898 = vadd.s32 %v1888, %v1892
        %v1899 = vadd.s32 %v1891, %v1897
        %vm1900 = vc.u32 %v1898, %v1894
        %v1901 = vsel %vm1900, 1, 0
        %v1902 = vadd.s32 %v1898, %v1894
        %v1903 = vadd.s32 %v1899, %v1901
        %v1904 = vadd.s32 %v1903, %v1893
        %v1905 = vadd.s32 %v1904, %v1895
        %v1906 = vand.u32 %v1883, 65535
        %v1907 = vshrl.u32 %v1883, 16
        %v1908 = vand.u32 %v1878, 65535
        %v1909 = vshrl.u32 %v1878, 16
        %v1910 = vmul.u32 %v1906, %v1908
        %v1911 = vmul.u32 %v1906, %v1909
        %v1912 = vmul.u32 %v1907, %v1908
        %v1913 = vmul.u32 %v1907, %v1909
        %v1914 = vshll.u32 %v1911, 16
        %v1915 = vshrl.u32 %v1911, 16
        %v1916 = vshll.u32 %v1912, 16
        %v1917 = vshrl.u32 %v1912, 16
        %vm1918 = vc.u32 %v1910, %v1914
        %v1919 = vsel %vm1918, 1, 0
        %v1920 = vadd.s32 %v1910, %v1914
        %v1921 = vadd.s32 %v1913, %v1919
        %vm1922 = vc.u32 %v1920, %v1916
        %v1923 = vsel %vm1922, 1, 0
        %v1924 = vadd.s32 %v1920, %v1916
        %v1925 = vadd.s32 %v1921, %v1923
        %v1926 = vadd.s32 %v1925, %v1915
        %v1927 = vadd.s32 %v1926, %v1917
        %v1928 = vmul.u32 %v1883, %v1874
        %v1929 = vadd.s32 %v1905, %v1924
        %vm1930 = vc.u32 %v1905, %v1924
        %v1931 = vadd.s32 %v1927, 1
        %v1932 = vsel %vm1930, %v1931, %v1927
        %v1933 = vadd.s32 %v1928, %v1932
        %v1934 = vadd.s32 %v1933, 536870912
        %v1935 = vshrl.u32 %v1934, 30
        %v1936 = vshll.u32 %v1935, 30
        %v1937 = vsub.s32 %v1933, %v1936
        %vm1938 = vcmp.lt.s32.totalorder %v1937, 0
        %v1939 = vsub.s32 0, %v1937
        %v1940 = vsel %vm1938, %v1939, %v1937
        %v1941 = vclz %v1940
        %v1942 = vsub.s32 %v1941, 2
        %vm1943 = vcmp.gt.s32.totalorder 0, %v1942
        %v1944 = vsel %vm1943, 0, %v1942
        %v1945 = vsub.s32 32, %v1944
        %v1946 = vshll.u32 %v1937, %v1944
        %v1947 = vshrl.u32 %v1929, %v1945
        %v1948 = vor.u32 %v1946, %v1947
        %v1949 = vsub.s32 4294967266, %v1944
        %v1950 = vadd.s32 %v1949, 127
        %v1951 = vshll.u32 %v1950, 23
        %v1952 = vor.u32 4788187, %v1951
        %v1953 = vand.u32 2147483647, %v1952
        %v1955 = vcvt.s32.f32 %v1948
        %v1956 = vmul.f32 %v1955, %v1953
        %v1957 = vxor.u32 %v1956, 2147483648
        %v1958 = vsel %vm1837, %v1957, %v1956
        %v1959 = vsub.s32 4, %v1935
        %v1960 = vsel %vm1837, %v1959, %v1935
        %v1961 = vsel %vm1836, %v571, %v1958
        %v1962 = vsel %vm1836, 0, %v1960
        %v1963 = vmul.f32 %v1961, %v1961
        %v1964 = vmul.f32 %v1963, -0.001358992
        %v1965 = vadd.f32 %v1964, 0.041655596
        %v1966 = vmul.f32 %v1963, %v1965
        %v1967 = vadd.f32 %v1966, -0.4999988
        %v1968 = vmul.f32 %v1963, %v1967
        %v1969 = vadd.f32 1.0, %v1968
        %v1970 = vmul.f32 %v1961, %v1961
        %v1971 = vmul.f32 %v1970, -0.00019511016
        %v1972 = vadd.f32 %v1971, 0.008332121
        %v1973 = vmul.f32 %v1970, %v1972
        %v1974 = vadd.f32 %v1973, -0.16666654
        %v1975 = vmul.f32 %v1970, %v1974
        %v1976 = vadd.f32 %v1975, 1.0
        %v1977 = vmul.f32 %v1976, %v1961
        %vm1978 = vweird.f32 %v571
        %v1979 = vadd.s32 %v1962, 3
        %v1980 = vand.u32 %v1979, 3
        %vm1981 = vcmp.lt.s32.totalorder %v1980, 2
        %vm1982 = vcmp.eq.s32.totalorder %v1980, 0
        %v1983 = vxor.u32 %v1977, 2147483648
        %v1984 = vsel %vm1982, %v1969, %v1983
        %vm1985 = vcmp.eq.s32.totalorder %v1980, 2
        %v1986 = vxor.u32 %v1969, 2147483648
        %v1987 = vsel %vm1985, %v1986, %v1977
        %v1988 = vsel %vm1981, %v1984, %v1987
        %v1989 = vsel %vm1978, nan, %v1988
        %v1990 = vand.u32 2147483647, %v572
        %vm1991 = vcmp.le.f32.partialorder %v1990, 0.7853982
        %vm1992 = vcmp.lt.s32.totalorder %v572, 0
        %v1993 = vand.u32 %v572, 2139095040
        %v1994 = vshrl.u32 %v1993, 23
        %v1995 = vsub.s32 %v1994, 127
        %v1996 = vand.u32 2147483647, %v572
        %v1997 = vand.u32 %v1996, 8388607
        %v1998 = vor.u32 %v1997, 8388608
        %v1999 = vsub.s32 0, %v1998
        %v2000 = vadd.s32 %v1995, 1
        %vm2001 = vcmp.gt.s32.totalorder %v2000, 0
        %v2002 = vsel %vm2001, %v2000, 0
        %v2003 = vshrl.u32 %v2002, 5
        %v2004 = vand.u32 %v2002, 31
        %v2005 = vsub.s32 32, %v2004
        %v2006 = vshrl.u32 683565275, %v2005
        %v2007 = vshll.u32 683565275, %v2004
        %v2008 = vshrl.u32 2475754826, %v2005
        %v2009 = vor.u32 %v2007, %v2008
        %v2010 = vshll.u32 2475754826, %v2004
        %v2011 = vshrl.u32 2131351028, %v2005
        %v2012 = vor.u32 %v2010, %v2011
        %v2013 = vshll.u32 2131351028, %v2004
        %v2014 = vshrl.u32 2102212464, %v2005
        %v2015 = vor.u32 %v2013, %v2014
        %v2016 = vshll.u32 2102212464, %v2004
        %v2017 = vshrl.u32 920167782, %v2005
        %v2018 = vor.u32 %v2016, %v2017
        %v2019 = vshll.u32 920167782, %v2004
        %v2020 = vshrl.u32 1326507024, %v2005
        %v2021 = vor.u32 %v2019, %v2020
        %vm2022 = vcmp.lt.s32.totalorder %v2003, 1
        %vm2023 = vcmp.lt.s32.totalorder %v2003, 2
        %vm2024 = vcmp.lt.s32.totalorder %v2003, 3
        %vm2025 = vcmp.lt.s32.totalorder %v2003, 4
        %v2026 = vsel %vm2022, %v2006, %v2009
        %v2027 = vsel %vm2025, %v2015, 2102212464
        %v2028 = vsel %vm2024, %v2012, %v2027
        %v2029 = vsel %vm2023, %v2026, %v2028
        %v2030 = vsel %vm2022, %v2009, %v2012
        %v2031 = vsel %vm2025, %v2018, 920167782
        %v2032 = vsel %vm2024, %v2015, %v2031
        %v2033 = vsel %vm2023, %v2030, %v2032
        %v2034 = vsel %vm2022, %v2012, %v2015
        %v2035 = vsel %vm2025, %v2021, 1326507024
        %v2036 = vsel %vm2024, %v2018, %v2035
        %v2037 = vsel %vm2023, %v2034, %v2036
        %v2038 = vshll.u32 %v1998, 8
        %v2039 = vand.u32 %v2038, 65535
        %v2040 = vshrl.u32 %v2038, 16
        %v2041 = vand.u32 %v2037, 65535
        %v2042 = vshrl.u32 %v2037, 16
        %v2043 = vmul.u32 %v2039, %v2041
        %v2044 = vmul.u32 %v2039, %v2042
        %v2045 = vmul.u32 %v2040, %v2041
        %v2046 = vmul.u32 %v2040, %v2042
        %v2047 = vshll.u32 %v2044, 16
        %v2048 = vshrl.u32 %v2044, 16
        %v2049 = vshll.u32 %v2045, 16
        %v2050 = vshrl.u32 %v2045, 16
        %vm2051 = vc.u32 %v2043, %v2047
        %v2052 = vsel %vm2051, 1, 0
        %v2053 = vadd.s32 %v2043, %v2047
        %v2054 = vadd.s32 %v2046, %v2052
        %vm2055 = vc.u32 %v2053, %v2049
        %v2056 = vsel %vm2055, 1, 0
        %v2057 = vadd.s32 %v2053, %v2049
        %v2058 = vadd.s32 %v2054, %v2056
        %v2059 = vadd.s32 %v2058, %v2048
        %v2060 = vadd.s32 %v2059, %v2050
        %v2061 = vand.u32 %v2038, 65535
        %v2062 = vshrl.u32 %v2038, 16
        %v2063 = vand.u32 %v2033, 65535
        %v2064 = vshrl.u32 %v2033, 16
        %v2065 = vmul.u32 %v2061, %v2063
        %v2066 = vmul.u32 %v2061, %v2064
        %v2067 = vmul.u32 %v2062, %v2063
        %v2068 = vmul.u32 %v2062, %v2064
        %v2069 = vshll.u32 %v2066, 16
        %v2070 = vshrl.u32 %v2066, 16
        %v2071 = vshll.u32 %v2067, 16
        %v2072 = vshrl.u32 %v2067, 16
        %vm2073 = vc.u32 %v2065, %v2069
        %v2074 = vsel %vm2073, 1, 0
        %v2075 = vadd.s32 %v2065, %v2069
        %v2076 = vadd.s32 %v2068, %v2074
        %vm2077 = vc.u32 %v2075, %v2071
        %v2078 = vsel %vm2077, 1, 0
        %v2079 = vadd.s32 %v2075, %v2071
        %v2080 = vadd.s32 %v2076, %v2078
        %v2081 = vadd.s32 %v2080, %v2070
        %v2082 = vadd.s32 %v2081, %v2072
        %v2083 = vmul.u32 %v2038, %v2029
        %v2084 = vadd.s32 %v2060, %v2079
        %vm2085 = vc.u32 %v2060, %v2079
        %v2086 = vadd.s32 %v2082, 1
        %v2087 = vsel %vm2085, %v2086, %v2082
        %v2088 = vadd.s32 %v2083, %v2087
        %v2089 = vadd.s32 %v2088, 536870912
        %v2090 = vshrl.u32 %v2089, 30
        %v2091 = vshll.u32 %v2090, 30
        %v2092 = vsub.s32 %v2088, %v2091
        %vm2093 = vcmp.lt.s32.totalorder %v2092, 0
        %v2094 = vsub.s32 0, %v2092
        %v2095 = vsel %vm2093, %v2094, %v2092
        %v2096 = vclz %v2095
        %v2097 = vsub.s32 %v2096, 2
        %vm2098 = vcmp.gt.s32.totalorder 0, %v2097
        %v2099 = vsel %vm2098, 0, %v2097
        %v2100 = vsub.s32 32, %v2099
        %v2101 = vshll.u32 %v2092, %v2099
        %v2102 = vshrl.u32 %v2084, %v2100
        %v2103 = vor.u32 %v2101, %v2102
        %v2104 = vsub.s32 4294967266, %v2099
        %v2105 = vadd.s32 %v2104, 127
        %v2106 = vshll.u32 %v2105, 23
        %v2107 = vor.u32 4788187, %v2106
        %v2108 = vand.u32 2147483647, %v2107
        %v2110 = vcvt.s32.f32 %v2103
        %v2111 = vmul.f32 %v2110, %v2108
        %v2112 = vxor.u32 %v2111, 2147483648
        %v2113 = vsel %vm1992, %v2112, %v2111
        %v2114 = vsub.s32 4, %v2090
        %v2115 = vsel %vm1992, %v2114, %v2090
        %v2116 = vsel %vm1991, %v572, %v2113
        %v2117 = vsel %vm1991, 0, %v2115
        %v2118 = vmul.f32 %v2116, %v2116
        %v2119 = vmul.f32 %v2118, -0.001358992
        %v2120 = vadd.f32 %v2119, 0.041655596
        %v2121 = vmul.f32 %v2118, %v2120
        %v2122 = vadd.f32 %v2121, -0.4999988
        %v2123 = vmul.f32 %v2118, %v2122
        %v2124 = vadd.f32 1.0, %v2123
        %v2125 = vmul.f32 %v2116, %v2116
        %v2126 = vmul.f32 %v2125, -0.00019511016
        %v2127 = vadd.f32 %v2126, 0.008332121
        %v2128 = vmul.f32 %v2125, %v2127
        %v2129 = vadd.f32 %v2128, -0.16666654
        %v2130 = vmul.f32 %v2125, %v2129
        %v2131 = vadd.f32 %v2130, 1.0
        %v2132 = vmul.f32 %v2131, %v2116
        %vm2133 = vweird.f32 %v572
        %v2134 = vadd.s32 %v2117, 3
        %v2135 = vand.u32 %v2134, 3
        %vm2136 = vcmp.lt.s32.totalorder %v2135, 2
        %vm2137 = vcmp.eq.s32.totalorder %v2135, 0
        %v2138 = vxor.u32 %v2132, 2147483648
        %v2139 = vsel %vm2137, %v2124, %v2138
        %vm2140 = vcmp.eq.s32.totalorder %v2135, 2
        %v2141 = vxor.u32 %v2124, 2147483648
        %v2142 = vsel %vm2140, %v2141, %v2132
        %v2143 = vsel %vm2136, %v2139, %v2142
        %v2144 = vsel %vm2133, nan, %v2143
        %v2145 = vand.u32 2147483647, %v573
        %vm2146 = vcmp.le.f32.partialorder %v2145, 0.7853982
        %vm2147 = vcmp.lt.s32.totalorder %v573, 0
        %v2148 = vand.u32 %v573, 2139095040
        %v2149 = vshrl.u32 %v2148, 23
        %v2150 = vsub.s32 %v2149, 127
        %v2151 = vand.u32 2147483647, %v573
        %v2152 = vand.u32 %v2151, 8388607
        %v2153 = vor.u32 %v2152, 8388608
        %v2154 = vsub.s32 0, %v2153
        %v2155 = vadd.s32 %v2150, 1
        %vm2156 = vcmp.gt.s32.totalorder %v2155, 0
        %v2157 = vsel %vm2156, %v2155, 0
        %v2158 = vshrl.u32 %v2157, 5
        %v2159 = vand.u32 %v2157, 31
        %v2160 = vsub.s32 32, %v2159
        %v2161 = vshrl.u32 683565275, %v2160
        %v2162 = vshll.u32 683565275, %v2159
        %v2163 = vshrl.u32 2475754826, %v2160
        %v2164 = vor.u32 %v2162, %v2163
        %v2165 = vshll.u32 2475754826, %v2159
        %v2166 = vshrl.u32 2131351028, %v2160
        %v2167 = vor.u32 %v2165, %v2166
        %v2168 = vshll.u32 2131351028, %v2159
        %v2169 = vshrl.u32 2102212464, %v2160
        %v2170 = vor.u32 %v2168, %v2169
        %v2171 = vshll.u32 2102212464, %v2159
        %v2172 = vshrl.u32 920167782, %v2160
        %v2173 = vor.u32 %v2171, %v2172
        %v2174 = vshll.u32 920167782, %v2159
        %v2175 = vshrl.u32 1326507024, %v2160
        %v2176 = vor.u32 %v2174, %v2175
        %vm2177 = vcmp.lt.s32.totalorder %v2158, 1
        %vm2178 = vcmp.lt.s32.totalorder %v2158, 2
        %vm2179 = vcmp.lt.s32.totalorder %v2158, 3
        %vm2180 = vcmp.lt.s32.totalorder %v2158, 4
        %v2181 = vsel %vm2177, %v2161, %v2164
        %v2182 = vsel %vm2180, %v2170, 2102212464
        %v2183 = vsel %vm2179, %v2167, %v2182
        %v2184 = vsel %vm2178, %v2181, %v2183
        %v2185 = vsel %vm2177, %v2164, %v2167
        %v2186 = vsel %vm2180, %v2173, 920167782
        %v2187 = vsel %vm2179, %v2170, %v2186
        %v2188 = vsel %vm2178, %v2185, %v2187
        %v2189 = vsel %vm2177, %v2167, %v2170
        %v2190 = vsel %vm2180, %v2176, 1326507024
        %v2191 = vsel %vm2179, %v2173, %v2190
        %v2192 = vsel %vm2178, %v2189, %v2191
        %v2193 = vshll.u32 %v2153, 8
        %v2194 = vand.u32 %v2193, 65535
        %v2195 = vshrl.u32 %v2193, 16
        %v2196 = vand.u32 %v2192, 65535
        %v2197 = vshrl.u32 %v2192, 16
        %v2198 = vmul.u32 %v2194, %v2196
        %v2199 = vmul.u32 %v2194, %v2197
        %v2200 = vmul.u32 %v2195, %v2196
        %v2201 = vmul.u32 %v2195, %v2197
        %v2202 = vshll.u32 %v2199, 16
        %v2203 = vshrl.u32 %v2199, 16
        %v2204 = vshll.u32 %v2200, 16
        %v2205 = vshrl.u32 %v2200, 16
        %vm2206 = vc.u32 %v2198, %v2202
        %v2207 = vsel %vm2206, 1, 0
        %v2208 = vadd.s32 %v2198, %v2202
        %v2209 = vadd.s32 %v2201, %v2207
        %vm2210 = vc.u32 %v2208, %v2204
        %v2211 = vsel %vm2210, 1, 0
        %v2212 = vadd.s32 %v2208, %v2204
        %v2213 = vadd.s32 %v2209, %v2211
        %v2214 = vadd.s32 %v2213, %v2203
        %v2215 = vadd.s32 %v2214, %v2205
        %v2216 = vand.u32 %v2193, 65535
        %v2217 = vshrl.u32 %v2193, 16
        %v2218 = vand.u32 %v2188, 65535
        %v2219 = vshrl.u32 %v2188, 16
        %v2220 = vmul.u32 %v2216, %v2218
        %v2221 = vmul.u32 %v2216, %v2219
        %v2222 = vmul.u32 %v2217, %v2218
        %v2223 = vmul.u32 %v2217, %v2219
        %v2224 = vshll.u32 %v2221, 16
        %v2225 = vshrl.u32 %v2221, 16
        %v2226 = vshll.u32 %v2222, 16
        %v2227 = vshrl.u32 %v2222, 16
        %vm2228 = vc.u32 %v2220, %v2224
        %v2229 = vsel %vm2228, 1, 0
        %v2230 = vadd.s32 %v2220, %v2224
        %v2231 = vadd.s32 %v2223, %v2229
        %vm2232 = vc.u32 %v2230, %v2226
        %v2233 = vsel %vm2232, 1, 0
        %v2234 = vadd.s32 %v2230, %v2226
        %v2235 = vadd.s32 %v2231, %v2233
        %v2236 = vadd.s32 %v2235, %v2225
        %v2237 = vadd.s32 %v2236, %v2227
        %v2238 = vmul.u32 %v2193, %v2184
        %v2239 = vadd.s32 %v2215, %v2234
        %vm2240 = vc.u32 %v2215, %v2234
        %v2241 = vadd.s32 %v2237, 1
        %v2242 = vsel %vm2240, %v2241, %v2237
        %v2243 = vadd.s32 %v2238, %v2242
        %v2244 = vadd.s32 %v2243, 536870912
        %v2245 = vshrl.u32 %v2244, 30
        %v2246 = vshll.u32 %v2245, 30
        %v2247 = vsub.s32 %v2243, %v2246
        %vm2248 = vcmp.lt.s32.totalorder %v2247, 0
        %v2249 = vsub.s32 0, %v2247
        %v2250 = vsel %vm2248, %v2249, %v2247
        %v2251 = vclz %v2250
        %v2252 = vsub.s32 %v2251, 2
        %vm2253 = vcmp.gt.s32.totalorder 0, %v2252
        %v2254 = vsel %vm2253, 0, %v2252
        %v2255 = vsub.s32 32, %v2254
        %v2256 = vshll.u32 %v2247, %v2254
        %v2257 = vshrl.u32 %v2239, %v2255
        %v2258 = vor.u32 %v2256, %v2257
        %v2259 = vsub.s32 4294967266, %v2254
        %v2260 = vadd.s32 %v2259, 127
        %v2261 = vshll.u32 %v2260, 23
        %v2262 = vor.u32 4788187, %v2261
        %v2263 = vand.u32 2147483647, %v2262
        %v2265 = vcvt.s32.f32 %v2258
        %v2266 = vmul.f32 %v2265, %v2263
        %v2267 = vxor.u32 %v2266, 2147483648
        %v2268 = vsel %vm2147, %v2267, %v2266
        %v2269 = vsub.s32 4, %v2245
        %v2270 = vsel %vm2147, %v2269, %v2245
        %v2271 = vsel %vm2146, %v573, %v2268
        %v2272 = vsel %vm2146, 0, %v2270
        %v2273 = vmul.f32 %v2271, %v2271
        %v2274 = vmul.f32 %v2273, -0.001358992
        %v2275 = vadd.f32 %v2274, 0.041655596
        %v2276 = vmul.f32 %v2273, %v2275
        %v2277 = vadd.f32 %v2276, -0.4999988
        %v2278 = vmul.f32 %v2273, %v2277
        %v2279 = vadd.f32 1.0, %v2278
        %v2280 = vmul.f32 %v2271, %v2271
        %v2281 = vmul.f32 %v2280, -0.00019511016
        %v2282 = vadd.f32 %v2281, 0.008332121
        %v2283 = vmul.f32 %v2280, %v2282
        %v2284 = vadd.f32 %v2283, -0.16666654
        %v2285 = vmul.f32 %v2280, %v2284
        %v2286 = vadd.f32 %v2285, 1.0
        %v2287 = vmul.f32 %v2286, %v2271
        %vm2288 = vweird.f32 %v573
        %v2289 = vadd.s32 %v2272, 3
        %v2290 = vand.u32 %v2289, 3
        %vm2291 = vcmp.lt.s32.totalorder %v2290, 2
        %vm2292 = vcmp.eq.s32.totalorder %v2290, 0
        %v2293 = vxor.u32 %v2287, 2147483648
        %v2294 = vsel %vm2292, %v2279, %v2293
        %vm2295 = vcmp.eq.s32.totalorder %v2290, 2
        %v2296 = vxor.u32 %v2279, 2147483648
        %v2297 = vsel %vm2295, %v2296, %v2287
        %v2298 = vsel %vm2291, %v2294, %v2297
        %v2299 = vsel %vm2288, nan, %v2298
        %v2300 = vand.u32 2147483647, %v574
        %vm2301 = vcmp.le.f32.partialorder %v2300, 0.7853982
        %vm2302 = vcmp.lt.s32.totalorder %v574, 0
        %v2303 = vand.u32 %v574, 2139095040
        %v2304 = vshrl.u32 %v2303, 23
        %v2305 = vsub.s32 %v2304, 127
        %v2306 = vand.u32 2147483647, %v574
        %v2307 = vand.u32 %v2306, 8388607
        %v2308 = vor.u32 %v2307, 8388608
        %v2309 = vsub.s32 0, %v2308
        %v2310 = vadd.s32 %v2305, 1
        %vm2311 = vcmp.gt.s32.totalorder %v2310, 0
        %v2312 = vsel %vm2311, %v2310, 0
        %v2313 = vshrl.u32 %v2312, 5
        %v2314 = vand.u32 %v2312, 31
        %v2315 = vsub.s32 32, %v2314
        %v2316 = vshrl.u32 683565275, %v2315
        %v2317 = vshll.u32 683565275, %v2314
        %v2318 = vshrl.u32 2475754826, %v2315
        %v2319 = vor.u32 %v2317, %v2318
        %v2320 = vshll.u32 2475754826, %v2314
        %v2321 = vshrl.u32 2131351028, %v2315
        %v2322 = vor.u32 %v2320, %v2321
        %v2323 = vshll.u32 2131351028, %v2314
        %v2324 = vshrl.u32 2102212464, %v2315
        %v2325 = vor.u32 %v2323, %v2324
        %v2326 = vshll.u32 2102212464, %v2314
        %v2327 = vshrl.u32 920167782, %v2315
        %v2328 = vor.u32 %v2326, %v2327
        %v2329 = vshll.u32 920167782, %v2314
        %v2330 = vshrl.u32 1326507024, %v2315
        %v2331 = vor.u32 %v2329, %v2330
        %vm2332 = vcmp.lt.s32.totalorder %v2313, 1
        %vm2333 = vcmp.lt.s32.totalorder %v2313, 2
        %vm2334 = vcmp.lt.s32.totalorder %v2313, 3
        %vm2335 = vcmp.lt.s32.totalorder %v2313, 4
        %v2336 = vsel %vm2332, %v2316, %v2319
        %v2337 = vsel %vm2335, %v2325, 2102212464
        %v2338 = vsel %vm2334, %v2322, %v2337
        %v2339 = vsel %vm2333, %v2336, %v2338
        %v2340 = vsel %vm2332, %v2319, %v2322
        %v2341 = vsel %vm2335, %v2328, 920167782
        %v2342 = vsel %vm2334, %v2325, %v2341
        %v2343 = vsel %vm2333, %v2340, %v2342
        %v2344 = vsel %vm2332, %v2322, %v2325
        %v2345 = vsel %vm2335, %v2331, 1326507024
        %v2346 = vsel %vm2334, %v2328, %v2345
        %v2347 = vsel %vm2333, %v2344, %v2346
        %v2348 = vshll.u32 %v2308, 8
        %v2349 = vand.u32 %v2348, 65535
        %v2350 = vshrl.u32 %v2348, 16
        %v2351 = vand.u32 %v2347, 65535
        %v2352 = vshrl.u32 %v2347, 16
        %v2353 = vmul.u32 %v2349, %v2351
        %v2354 = vmul.u32 %v2349, %v2352
        %v2355 = vmul.u32 %v2350, %v2351
        %v2356 = vmul.u32 %v2350, %v2352
        %v2357 = vshll.u32 %v2354, 16
        %v2358 = vshrl.u32 %v2354, 16
        %v2359 = vshll.u32 %v2355, 16
        %v2360 = vshrl.u32 %v2355, 16
        %vm2361 = vc.u32 %v2353, %v2357
        %v2362 = vsel %vm2361, 1, 0
        %v2363 = vadd.s32 %v2353, %v2357
        %v2364 = vadd.s32 %v2356, %v2362
        %vm2365 = vc.u32 %v2363, %v2359
        %v2366 = vsel %vm2365, 1, 0
        %v2367 = vadd.s32 %v2363, %v2359
        %v2368 = vadd.s32 %v2364, %v2366
        %v2369 = vadd.s32 %v2368, %v2358
        %v2370 = vadd.s32 %v2369, %v2360
        %v2371 = vand.u32 %v2348, 65535
        %v2372 = vshrl.u32 %v2348, 16
        %v2373 = vand.u32 %v2343, 65535
        %v2374 = vshrl.u32 %v2343, 16
        %v2375 = vmul.u32 %v2371, %v2373
        %v2376 = vmul.u32 %v2371, %v2374
        %v2377 = vmul.u32 %v2372, %v2373
        %v2378 = vmul.u32 %v2372, %v2374
        %v2379 = vshll.u32 %v2376, 16
        %v2380 = vshrl.u32 %v2376, 16
        %v2381 = vshll.u32 %v2377, 16
        %v2382 = vshrl.u32 %v2377, 16
        %vm2383 = vc.u32 %v2375, %v2379
        %v2384 = vsel %vm2383, 1, 0
        %v2385 = vadd.s32 %v2375, %v2379
        %v2386 = vadd.s32 %v2378, %v2384
        %vm2387 = vc.u32 %v2385, %v2381
        %v2388 = vsel %vm2387, 1, 0
        %v2389 = vadd.s32 %v2385, %v2381
        %v2390 = vadd.s32 %v2386, %v2388
        %v2391 = vadd.s32 %v2390, %v2380
        %v2392 = vadd.s32 %v2391, %v2382
        %v2393 = vmul.u32 %v2348, %v2339
        %v2394 = vadd.s32 %v2370, %v2389
        %vm2395 = vc.u32 %v2370, %v2389
        %v2396 = vadd.s32 %v2392, 1
        %v2397 = vsel %vm2395, %v2396, %v2392
        %v2398 = vadd.s32 %v2393, %v2397
        %v2399 = vadd.s32 %v2398, 536870912
        %v2400 = vshrl.u32 %v2399, 30
        %v2401 = vshll.u32 %v2400, 30
        %v2402 = vsub.s32 %v2398, %v2401
        %vm2403 = vcmp.lt.s32.totalorder %v2402, 0
        %v2404 = vsub.s32 0, %v2402
        %v2405 = vsel %vm2403, %v2404, %v2402
        %v2406 = vclz %v2405
        %v2407 = vsub.s32 %v2406, 2
        %vm2408 = vcmp.gt.s32.totalorder 0, %v2407
        %v2409 = vsel %vm2408, 0, %v2407
        %v2410 = vsub.s32 32, %v2409
        %v2411 = vshll.u32 %v2402, %v2409
        %v2412 = vshrl.u32 %v2394, %v2410
        %v2413 = vor.u32 %v2411, %v2412
        %v2414 = vsub.s32 4294967266, %v2409
        %v2415 = vadd.s32 %v2414, 127
        %v2416 = vshll.u32 %v2415, 23
        %v2417 = vor.u32 4788187, %v2416
        %v2418 = vand.u32 2147483647, %v2417
        %v2420 = vcvt.s32.f32 %v2413
        %v2421 = vmul.f32 %v2420, %v2418
        %v2422 = vxor.u32 %v2421, 2147483648
        %v2423 = vsel %vm2302, %v2422, %v2421
        %v2424 = vsub.s32 4, %v2400
        %v2425 = vsel %vm2302, %v2424, %v2400
        %v2426 = vsel %vm2301, %v574, %v2423
        %v2427 = vsel %vm2301, 0, %v2425
        %v2428 = vmul.f32 %v2426, %v2426
        %v2429 = vmul.f32 %v2428, -0.001358992
        %v2430 = vadd.f32 %v2429, 0.041655596
        %v2431 = vmul.f32 %v2428, %v2430
        %v2432 = vadd.f32 %v2431, -0.4999988
        %v2433 = vmul.f32 %v2428, %v2432
        %v2434 = vadd.f32 1.0, %v2433
        %v2435 = vmul.f32 %v2426, %v2426
        %v2436 = vmul.f32 %v2435, -0.00019511016
        %v2437 = vadd.f32 %v2436, 0.008332121
        %v2438 = vmul.f32 %v2435, %v2437
        %v2439 = vadd.f32 %v2438, -0.16666654
        %v2440 = vmul.f32 %v2435, %v2439
        %v2441 = vadd.f32 %v2440, 1.0
        %v2442 = vmul.f32 %v2441, %v2426
        %vm2443 = vweird.f32 %v574
        %v2444 = vadd.s32 %v2427, 3
        %v2445 = vand.u32 %v2444, 3
        %vm2446 = vcmp.lt.s32.totalorder %v2445, 2
        %vm2447 = vcmp.eq.s32.totalorder %v2445, 0
        %v2448 = vxor.u32 %v2442, 2147483648
        %v2449 = vsel %vm2447, %v2434, %v2448
        %vm2450 = vcmp.eq.s32.totalorder %v2445, 2
        %v2451 = vxor.u32 %v2434, 2147483648
        %v2452 = vsel %vm2450, %v2451, %v2442
        %v2453 = vsel %vm2446, %v2449, %v2452
        %v2454 = vsel %vm2443, nan, %v2453
        %v2455 = vand.u32 2147483647, %v575
        %vm2456 = vcmp.le.f32.partialorder %v2455, 0.7853982
        %vm2457 = vcmp.lt.s32.totalorder %v575, 0
        %v2458 = vand.u32 %v575, 2139095040
        %v2459 = vshrl.u32 %v2458, 23
        %v2460 = vsub.s32 %v2459, 127
        %v2461 = vand.u32 2147483647, %v575
        %v2462 = vand.u32 %v2461, 8388607
        %v2463 = vor.u32 %v2462, 8388608
        %v2464 = vsub.s32 0, %v2463
        %v2465 = vadd.s32 %v2460, 1
        %vm2466 = vcmp.gt.s32.totalorder %v2465, 0
        %v2467 = vsel %vm2466, %v2465, 0
        %v2468 = vshrl.u32 %v2467, 5
        %v2469 = vand.u32 %v2467, 31
        %v2470 = vsub.s32 32, %v2469
        %v2471 = vshrl.u32 683565275, %v2470
        %v2472 = vshll.u32 683565275, %v2469
        %v2473 = vshrl.u32 2475754826, %v2470
        %v2474 = vor.u32 %v2472, %v2473
        %v2475 = vshll.u32 2475754826, %v2469
        %v2476 = vshrl.u32 2131351028, %v2470
        %v2477 = vor.u32 %v2475, %v2476
        %v2478 = vshll.u32 2131351028, %v2469
        %v2479 = vshrl.u32 2102212464, %v2470
        %v2480 = vor.u32 %v2478, %v2479
        %v2481 = vshll.u32 2102212464, %v2469
        %v2482 = vshrl.u32 920167782, %v2470
        %v2483 = vor.u32 %v2481, %v2482
        %v2484 = vshll.u32 920167782, %v2469
        %v2485 = vshrl.u32 1326507024, %v2470
        %v2486 = vor.u32 %v2484, %v2485
        %vm2487 = vcmp.lt.s32.totalorder %v2468, 1
        %vm2488 = vcmp.lt.s32.totalorder %v2468, 2
        %vm2489 = vcmp.lt.s32.totalorder %v2468, 3
        %vm2490 = vcmp.lt.s32.totalorder %v2468, 4
        %v2491 = vsel %vm2487, %v2471, %v2474
        %v2492 = vsel %vm2490, %v2480, 2102212464
        %v2493 = vsel %vm2489, %v2477, %v2492
        %v2494 = vsel %vm2488, %v2491, %v2493
        %v2495 = vsel %vm2487, %v2474, %v2477
        %v2496 = vsel %vm2490, %v2483, 920167782
        %v2497 = vsel %vm2489, %v2480, %v2496
        %v2498 = vsel %vm2488, %v2495, %v2497
        %v2499 = vsel %vm2487, %v2477, %v2480
        %v2500 = vsel %vm2490, %v2486, 1326507024
        %v2501 = vsel %vm2489, %v2483, %v2500
        %v2502 = vsel %vm2488, %v2499, %v2501
        %v2503 = vshll.u32 %v2463, 8
        %v2504 = vand.u32 %v2503, 65535
        %v2505 = vshrl.u32 %v2503, 16
        %v2506 = vand.u32 %v2502, 65535
        %v2507 = vshrl.u32 %v2502, 16
        %v2508 = vmul.u32 %v2504, %v2506
        %v2509 = vmul.u32 %v2504, %v2507
        %v2510 = vmul.u32 %v2505, %v2506
        %v2511 = vmul.u32 %v2505, %v2507
        %v2512 = vshll.u32 %v2509, 16
        %v2513 = vshrl.u32 %v2509, 16
        %v2514 = vshll.u32 %v2510, 16
        %v2515 = vshrl.u32 %v2510, 16
        %vm2516 = vc.u32 %v2508, %v2512
        %v2517 = vsel %vm2516, 1, 0
        %v2518 = vadd.s32 %v2508, %v2512
        %v2519 = vadd.s32 %v2511, %v2517
        %vm2520 = vc.u32 %v2518, %v2514
        %v2521 = vsel %vm2520, 1, 0
        %v2522 = vadd.s32 %v2518, %v2514
        %v2523 = vadd.s32 %v2519, %v2521
        %v2524 = vadd.s32 %v2523, %v2513
        %v2525 = vadd.s32 %v2524, %v2515
        %v2526 = vand.u32 %v2503, 65535
        %v2527 = vshrl.u32 %v2503, 16
        %v2528 = vand.u32 %v2498, 65535
        %v2529 = vshrl.u32 %v2498, 16
        %v2530 = vmul.u32 %v2526, %v2528
        %v2531 = vmul.u32 %v2526, %v2529
        %v2532 = vmul.u32 %v2527, %v2528
        %v2533 = vmul.u32 %v2527, %v2529
        %v2534 = vshll.u32 %v2531, 16
        %v2535 = vshrl.u32 %v2531, 16
        %v2536 = vshll.u32 %v2532, 16
        %v2537 = vshrl.u32 %v2532, 16
        %vm2538 = vc.u32 %v2530, %v2534
        %v2539 = vsel %vm2538, 1, 0
        %v2540 = vadd.s32 %v2530, %v2534
        %v2541 = vadd.s32 %v2533, %v2539
        %vm2542 = vc.u32 %v2540, %v2536
        %v2543 = vsel %vm2542, 1, 0
        %v2544 = vadd.s32 %v2540, %v2536
        %v2545 = vadd.s32 %v2541, %v2543
        %v2546 = vadd.s32 %v2545, %v2535
        %v2547 = vadd.s32 %v2546, %v2537
        %v2548 = vmul.u32 %v2503, %v2494
        %v2549 = vadd.s32 %v2525, %v2544
        %vm2550 = vc.u32 %v2525, %v2544
        %v2551 = vadd.s32 %v2547, 1
        %v2552 = vsel %vm2550, %v2551, %v2547
        %v2553 = vadd.s32 %v2548, %v2552
        %v2554 = vadd.s32 %v2553, 536870912
        %v2555 = vshrl.u32 %v2554, 30
        %v2556 = vshll.u32 %v2555, 30
        %v2557 = vsub.s32 %v2553, %v2556
        %vm2558 = vcmp.lt.s32.totalorder %v2557, 0
        %v2559 = vsub.s32 0, %v2557
        %v2560 = vsel %vm2558, %v2559, %v2557
        %v2561 = vclz %v2560
        %v2562 = vsub.s32 %v2561, 2
        %vm2563 = vcmp.gt.s32.totalorder 0, %v2562
        %v2564 = vsel %vm2563, 0, %v2562
        %v2565 = vsub.s32 32, %v2564
        %v2566 = vshll.u32 %v2557, %v2564
        %v2567 = vshrl.u32 %v2549, %v2565
        %v2568 = vor.u32 %v2566, %v2567
        %v2569 = vsub.s32 4294967266, %v2564
        %v2570 = vadd.s32 %v2569, 127
        %v2571 = vshll.u32 %v2570, 23
        %v2572 = vor.u32 4788187, %v2571
        %v2573 = vand.u32 2147483647, %v2572
        %v2575 = vcvt.s32.f32 %v2568
        %v2576 = vmul.f32 %v2575, %v2573
        %v2577 = vxor.u32 %v2576, 2147483648
        %v2578 = vsel %vm2457, %v2577, %v2576
        %v2579 = vsub.s32 4, %v2555
        %v2580 = vsel %vm2457, %v2579, %v2555
        %v2581 = vsel %vm2456, %v575, %v2578
        %v2582 = vsel %vm2456, 0, %v2580
        %v2583 = vmul.f32 %v2581, %v2581
        %v2584 = vmul.f32 %v2583, -0.001358992
        %v2585 = vadd.f32 %v2584, 0.041655596
        %v2586 = vmul.f32 %v2583, %v2585
        %v2587 = vadd.f32 %v2586, -0.4999988
        %v2588 = vmul.f32 %v2583, %v2587
        %v2589 = vadd.f32 1.0, %v2588
        %v2590 = vmul.f32 %v2581, %v2581
        %v2591 = vmul.f32 %v2590, -0.00019511016
        %v2592 = vadd.f32 %v2591, 0.008332121
        %v2593 = vmul.f32 %v2590, %v2592
        %v2594 = vadd.f32 %v2593, -0.16666654
        %v2595 = vmul.f32 %v2590, %v2594
        %v2596 = vadd.f32 %v2595, 1.0
        %v2597 = vmul.f32 %v2596, %v2581
        %vm2598 = vweird.f32 %v575
        %v2599 = vadd.s32 %v2582, 3
        %v2600 = vand.u32 %v2599, 3
        %vm2601 = vcmp.lt.s32.totalorder %v2600, 2
        %vm2602 = vcmp.eq.s32.totalorder %v2600, 0
        %v2603 = vxor.u32 %v2597, 2147483648
        %v2604 = vsel %vm2602, %v2589, %v2603
        %vm2605 = vcmp.eq.s32.totalorder %v2600, 2
        %v2606 = vxor.u32 %v2589, 2147483648
        %v2607 = vsel %vm2605, %v2606, %v2597
        %v2608 = vsel %vm2601, %v2604, %v2607
        %v2609 = vsel %vm2598, nan, %v2608
        %v2610 = vand.u32 2147483647, %v576
        %vm2611 = vcmp.le.f32.partialorder %v2610, 0.7853982
        %vm2612 = vcmp.lt.s32.totalorder %v576, 0
        %v2613 = vand.u32 %v576, 2139095040
        %v2614 = vshrl.u32 %v2613, 23
        %v2615 = vsub.s32 %v2614, 127
        %v2616 = vand.u32 2147483647, %v576
        %v2617 = vand.u32 %v2616, 8388607
        %v2618 = vor.u32 %v2617, 8388608
        %v2619 = vsub.s32 0, %v2618
        %v2620 = vadd.s32 %v2615, 1
        %vm2621 = vcmp.gt.s32.totalorder %v2620, 0
        %v2622 = vsel %vm2621, %v2620, 0
        %v2623 = vshrl.u32 %v2622, 5
        %v2624 = vand.u32 %v2622, 31
        %v2625 = vsub.s32 32, %v2624
        %v2626 = vshrl.u32 683565275, %v2625
        %v2627 = vshll.u32 683565275, %v2624
        %v2628 = vshrl.u32 2475754826, %v2625
        %v2629 = vor.u32 %v2627, %v2628
        %v2630 = vshll.u32 2475754826, %v2624
        %v2631 = vshrl.u32 2131351028, %v2625
        %v2632 = vor.u32 %v2630, %v2631
        %v2633 = vshll.u32 2131351028, %v2624
        %v2634 = vshrl.u32 2102212464, %v2625
        %v2635 = vor.u32 %v2633, %v2634
        %v2636 = vshll.u32 2102212464, %v2624
        %v2637 = vshrl.u32 920167782, %v2625
        %v2638 = vor.u32 %v2636, %v2637
        %v2639 = vshll.u32 920167782, %v2624
        %v2640 = vshrl.u32 1326507024, %v2625
        %v2641 = vor.u32 %v2639, %v2640
        %vm2642 = vcmp.lt.s32.totalorder %v2623, 1
        %vm2643 = vcmp.lt.s32.totalorder %v2623, 2
        %vm2644 = vcmp.lt.s32.totalorder %v2623, 3
        %vm2645 = vcmp.lt.s32.totalorder %v2623, 4
        %v2646 = vsel %vm2642, %v2626, %v2629
        %v2647 = vsel %vm2645, %v2635, 2102212464
        %v2648 = vsel %vm2644, %v2632, %v2647
        %v2649 = vsel %vm2643, %v2646, %v2648
        %v2650 = vsel %vm2642, %v2629, %v2632
        %v2651 = vsel %vm2645, %v2638, 920167782
        %v2652 = vsel %vm2644, %v2635, %v2651
        %v2653 = vsel %vm2643, %v2650, %v2652
        %v2654 = vsel %vm2642, %v2632, %v2635
        %v2655 = vsel %vm2645, %v2641, 1326507024
        %v2656 = vsel %vm2644, %v2638, %v2655
        %v2657 = vsel %vm2643, %v2654, %v2656
        %v2658 = vshll.u32 %v2618, 8
        %v2659 = vand.u32 %v2658, 65535
        %v2660 = vshrl.u32 %v2658, 16
        %v2661 = vand.u32 %v2657, 65535
        %v2662 = vshrl.u32 %v2657, 16
        %v2663 = vmul.u32 %v2659, %v2661
        %v2664 = vmul.u32 %v2659, %v2662
        %v2665 = vmul.u32 %v2660, %v2661
        %v2666 = vmul.u32 %v2660, %v2662
        %v2667 = vshll.u32 %v2664, 16
        %v2668 = vshrl.u32 %v2664, 16
        %v2669 = vshll.u32 %v2665, 16
        %v2670 = vshrl.u32 %v2665, 16
        %vm2671 = vc.u32 %v2663, %v2667
        %v2672 = vsel %vm2671, 1, 0
        %v2673 = vadd.s32 %v2663, %v2667
        %v2674 = vadd.s32 %v2666, %v2672
        %vm2675 = vc.u32 %v2673, %v2669
        %v2676 = vsel %vm2675, 1, 0
        %v2677 = vadd.s32 %v2673, %v2669
        %v2678 = vadd.s32 %v2674, %v2676
        %v2679 = vadd.s32 %v2678, %v2668
        %v2680 = vadd.s32 %v2679, %v2670
        %v2681 = vand.u32 %v2658, 65535
        %v2682 = vshrl.u32 %v2658, 16
        %v2683 = vand.u32 %v2653, 65535
        %v2684 = vshrl.u32 %v2653, 16
        %v2685 = vmul.u32 %v2681, %v2683
        %v2686 = vmul.u32 %v2681, %v2684
        %v2687 = vmul.u32 %v2682, %v2683
        %v2688 = vmul.u32 %v2682, %v2684
        %v2689 = vshll.u32 %v2686, 16
        %v2690 = vshrl.u32 %v2686, 16
        %v2691 = vshll.u32 %v2687, 16
        %v2692 = vshrl.u32 %v2687, 16
        %vm2693 = vc.u32 %v2685, %v2689
        %v2694 = vsel %vm2693, 1, 0
        %v2695 = vadd.s32 %v2685, %v2689
        %v2696 = vadd.s32 %v2688, %v2694
        %vm2697 = vc.u32 %v2695, %v2691
        %v2698 = vsel %vm2697, 1, 0
        %v2699 = vadd.s32 %v2695, %v2691
        %v2700 = vadd.s32 %v2696, %v2698
        %v2701 = vadd.s32 %v2700, %v2690
        %v2702 = vadd.s32 %v2701, %v2692
        %v2703 = vmul.u32 %v2658, %v2649
        %v2704 = vadd.s32 %v2680, %v2699
        %vm2705 = vc.u32 %v2680, %v2699
        %v2706 = vadd.s32 %v2702, 1
        %v2707 = vsel %vm2705, %v2706, %v2702
        %v2708 = vadd.s32 %v2703, %v2707
        %v2709 = vadd.s32 %v2708, 536870912
        %v2710 = vshrl.u32 %v2709, 30
        %v2711 = vshll.u32 %v2710, 30
        %v2712 = vsub.s32 %v2708, %v2711
        %vm2713 = vcmp.lt.s32.totalorder %v2712, 0
        %v2714 = vsub.s32 0, %v2712
        %v2715 = vsel %vm2713, %v2714, %v2712
        %v2716 = vclz %v2715
        %v2717 = vsub.s32 %v2716, 2
        %vm2718 = vcmp.gt.s32.totalorder 0, %v2717
        %v2719 = vsel %vm2718, 0, %v2717
        %v2720 = vsub.s32 32, %v2719
        %v2721 = vshll.u32 %v2712, %v2719
        %v2722 = vshrl.u32 %v2704, %v2720
        %v2723 = vor.u32 %v2721, %v2722
        %v2724 = vsub.s32 4294967266, %v2719
        %v2725 = vadd.s32 %v2724, 127
        %v2726 = vshll.u32 %v2725, 23
        %v2727 = vor.u32 4788187, %v2726
        %v2728 = vand.u32 2147483647, %v2727
        %v2730 = vcvt.s32.f32 %v2723
        %v2731 = vmul.f32 %v2730, %v2728
        %v2732 = vxor.u32 %v2731, 2147483648
        %v2733 = vsel %vm2612, %v2732, %v2731
        %v2734 = vsub.s32 4, %v2710
        %v2735 = vsel %vm2612, %v2734, %v2710
        %v2736 = vsel %vm2611, %v576, %v2733
        %v2737 = vsel %vm2611, 0, %v2735
        %v2738 = vmul.f32 %v2736, %v2736
        %v2739 = vmul.f32 %v2738, -0.001358992
        %v2740 = vadd.f32 %v2739, 0.041655596
        %v2741 = vmul.f32 %v2738, %v2740
        %v2742 = vadd.f32 %v2741, -0.4999988
        %v2743 = vmul.f32 %v2738, %v2742
        %v2744 = vadd.f32 1.0, %v2743
        %v2745 = vmul.f32 %v2736, %v2736
        %v2746 = vmul.f32 %v2745, -0.00019511016
        %v2747 = vadd.f32 %v2746, 0.008332121
        %v2748 = vmul.f32 %v2745, %v2747
        %v2749 = vadd.f32 %v2748, -0.16666654
        %v2750 = vmul.f32 %v2745, %v2749
        %v2751 = vadd.f32 %v2750, 1.0
        %v2752 = vmul.f32 %v2751, %v2736
        %vm2753 = vweird.f32 %v576
        %v2754 = vadd.s32 %v2737, 3
        %v2755 = vand.u32 %v2754, 3
        %vm2756 = vcmp.lt.s32.totalorder %v2755, 2
        %vm2757 = vcmp.eq.s32.totalorder %v2755, 0
        %v2758 = vxor.u32 %v2752, 2147483648
        %v2759 = vsel %vm2757, %v2744, %v2758
        %vm2760 = vcmp.eq.s32.totalorder %v2755, 2
        %v2761 = vxor.u32 %v2744, 2147483648
        %v2762 = vsel %vm2760, %v2761, %v2752
        %v2763 = vsel %vm2756, %v2759, %v2762
        %v2764 = vsel %vm2753, nan, %v2763
        %v2765 = vand.u32 2147483647, %v577
        %vm2766 = vcmp.le.f32.partialorder %v2765, 0.7853982
        %vm2767 = vcmp.lt.s32.totalorder %v577, 0
        %v2768 = vand.u32 %v577, 2139095040
        %v2769 = vshrl.u32 %v2768, 23
        %v2770 = vsub.s32 %v2769, 127
        %v2771 = vand.u32 2147483647, %v577
        %v2772 = vand.u32 %v2771, 8388607
        %v2773 = vor.u32 %v2772, 8388608
        %v2774 = vsub.s32 0, %v2773
        %v2775 = vadd.s32 %v2770, 1
        %vm2776 = vcmp.gt.s32.totalorder %v2775, 0
        %v2777 = vsel %vm2776, %v2775, 0
        %v2778 = vshrl.u32 %v2777, 5
        %v2779 = vand.u32 %v2777, 31
        %v2780 = vsub.s32 32, %v2779
        %v2781 = vshrl.u32 683565275, %v2780
        %v2782 = vshll.u32 683565275, %v2779
        %v2783 = vshrl.u32 2475754826, %v2780
        %v2784 = vor.u32 %v2782, %v2783
        %v2785 = vshll.u32 2475754826, %v2779
        %v2786 = vshrl.u32 2131351028, %v2780
        %v2787 = vor.u32 %v2785, %v2786
        %v2788 = vshll.u32 2131351028, %v2779
        %v2789 = vshrl.u32 2102212464, %v2780
        %v2790 = vor.u32 %v2788, %v2789
        %v2791 = vshll.u32 2102212464, %v2779
        %v2792 = vshrl.u32 920167782, %v2780
        %v2793 = vor.u32 %v2791, %v2792
        %v2794 = vshll.u32 920167782, %v2779
        %v2795 = vshrl.u32 1326507024, %v2780
        %v2796 = vor.u32 %v2794, %v2795
        %vm2797 = vcmp.lt.s32.totalorder %v2778, 1
        %vm2798 = vcmp.lt.s32.totalorder %v2778, 2
        %vm2799 = vcmp.lt.s32.totalorder %v2778, 3
        %vm2800 = vcmp.lt.s32.totalorder %v2778, 4
        %v2801 = vsel %vm2797, %v2781, %v2784
        %v2802 = vsel %vm2800, %v2790, 2102212464
        %v2803 = vsel %vm2799, %v2787, %v2802
        %v2804 = vsel %vm2798, %v2801, %v2803
        %v2805 = vsel %vm2797, %v2784, %v2787
        %v2806 = vsel %vm2800, %v2793, 920167782
        %v2807 = vsel %vm2799, %v2790, %v2806
        %v2808 = vsel %vm2798, %v2805, %v2807
        %v2809 = vsel %vm2797, %v2787, %v2790
        %v2810 = vsel %vm2800, %v2796, 1326507024
        %v2811 = vsel %vm2799, %v2793, %v2810
        %v2812 = vsel %vm2798, %v2809, %v2811
        %v2813 = vshll.u32 %v2773, 8
        %v2814 = vand.u32 %v2813, 65535
        %v2815 = vshrl.u32 %v2813, 16
        %v2816 = vand.u32 %v2812, 65535
        %v2817 = vshrl.u32 %v2812, 16
        %v2818 = vmul.u32 %v2814, %v2816
        %v2819 = vmul.u32 %v2814, %v2817
        %v2820 = vmul.u32 %v2815, %v2816
        %v2821 = vmul.u32 %v2815, %v2817
        %v2822 = vshll.u32 %v2819, 16
        %v2823 = vshrl.u32 %v2819, 16
        %v2824 = vshll.u32 %v2820, 16
        %v2825 = vshrl.u32 %v2820, 16
        %vm2826 = vc.u32 %v2818, %v2822
        %v2827 = vsel %vm2826, 1, 0
        %v2828 = vadd.s32 %v2818, %v2822
        %v2829 = vadd.s32 %v2821, %v2827
        %vm2830 = vc.u32 %v2828, %v2824
        %v2831 = vsel %vm2830, 1, 0
        %v2832 = vadd.s32 %v2828, %v2824
        %v2833 = vadd.s32 %v2829, %v2831
        %v2834 = vadd.s32 %v2833, %v2823
        %v2835 = vadd.s32 %v2834, %v2825
        %v2836 = vand.u32 %v2813, 65535
        %v2837 = vshrl.u32 %v2813, 16
        %v2838 = vand.u32 %v2808, 65535
        %v2839 = vshrl.u32 %v2808, 16
        %v2840 = vmul.u32 %v2836, %v2838
        %v2841 = vmul.u32 %v2836, %v2839
        %v2842 = vmul.u32 %v2837, %v2838
        %v2843 = vmul.u32 %v2837, %v2839
        %v2844 = vshll.u32 %v2841, 16
        %v2845 = vshrl.u32 %v2841, 16
        %v2846 = vshll.u32 %v2842, 16
        %v2847 = vshrl.u32 %v2842, 16
        %vm2848 = vc.u32 %v2840, %v2844
        %v2849 = vsel %vm2848, 1, 0
        %v2850 = vadd.s32 %v2840, %v2844
        %v2851 = vadd.s32 %v2843, %v2849
        %vm2852 = vc.u32 %v2850, %v2846
        %v2853 = vsel %vm2852, 1, 0
        %v2854 = vadd.s32 %v2850, %v2846
        %v2855 = vadd.s32 %v2851, %v2853
        %v2856 = vadd.s32 %v2855, %v2845
        %v2857 = vadd.s32 %v2856, %v2847
        %v2858 = vmul.u32 %v2813, %v2804
        %v2859 = vadd.s32 %v2835, %v2854
        %vm2860 = vc.u32 %v2835, %v2854
        %v2861 = vadd.s32 %v2857, 1
        %v2862 = vsel %vm2860, %v2861, %v2857
        %v2863 = vadd.s32 %v2858, %v2862
        %v2864 = vadd.s32 %v2863, 536870912
        %v2865 = vshrl.u32 %v2864, 30
        %v2866 = vshll.u32 %v2865, 30
        %v2867 = vsub.s32 %v2863, %v2866
        %vm2868 = vcmp.lt.s32.totalorder %v2867, 0
        %v2869 = vsub.s32 0, %v2867
        %v2870 = vsel %vm2868, %v2869, %v2867
        %v2871 = vclz %v2870
        %v2872 = vsub.s32 %v2871, 2
        %vm2873 = vcmp.gt.s32.totalorder 0, %v2872
        %v2874 = vsel %vm2873, 0, %v2872
        %v2875 = vsub.s32 32, %v2874
        %v2876 = vshll.u32 %v2867, %v2874
        %v2877 = vshrl.u32 %v2859, %v2875
        %v2878 = vor.u32 %v2876, %v2877
        %v2879 = vsub.s32 4294967266, %v2874
        %v2880 = vadd.s32 %v2879, 127
        %v2881 = vshll.u32 %v2880, 23
        %v2882 = vor.u32 4788187, %v2881
        %v2883 = vand.u32 2147483647, %v2882
        %v2885 = vcvt.s32.f32 %v2878
        %v2886 = vmul.f32 %v2885, %v2883
        %v2887 = vxor.u32 %v2886, 2147483648
        %v2888 = vsel %vm2767, %v2887, %v2886
        %v2889 = vsub.s32 4, %v2865
        %v2890 = vsel %vm2767, %v2889, %v2865
        %v2891 = vsel %vm2766, %v577, %v2888
        %v2892 = vsel %vm2766, 0, %v2890
        %v2893 = vmul.f32 %v2891, %v2891
        %v2894 = vmul.f32 %v2893, -0.001358992
        %v2895 = vadd.f32 %v2894, 0.041655596
        %v2896 = vmul.f32 %v2893, %v2895
        %v2897 = vadd.f32 %v2896, -0.4999988
        %v2898 = vmul.f32 %v2893, %v2897
        %v2899 = vadd.f32 1.0, %v2898
        %v2900 = vmul.f32 %v2891, %v2891
        %v2901 = vmul.f32 %v2900, -0.00019511016
        %v2902 = vadd.f32 %v2901, 0.008332121
        %v2903 = vmul.f32 %v2900, %v2902
        %v2904 = vadd.f32 %v2903, -0.16666654
        %v2905 = vmul.f32 %v2900, %v2904
        %v2906 = vadd.f32 %v2905, 1.0
        %v2907 = vmul.f32 %v2906, %v2891
        %vm2908 = vweird.f32 %v577
        %v2909 = vadd.s32 %v2892, 3
        %v2910 = vand.u32 %v2909, 3
        %vm2911 = vcmp.lt.s32.totalorder %v2910, 2
        %vm2912 = vcmp.eq.s32.totalorder %v2910, 0
        %v2913 = vxor.u32 %v2907, 2147483648
        %v2914 = vsel %vm2912, %v2899, %v2913
        %vm2915 = vcmp.eq.s32.totalorder %v2910, 2
        %v2916 = vxor.u32 %v2899, 2147483648
        %v2917 = vsel %vm2915, %v2916, %v2907
        %v2918 = vsel %vm2911, %v2914, %v2917
        %v2919 = vsel %vm2908, nan, %v2918
        %v2920 = vand.u32 2147483647, %v578
        %vm2921 = vcmp.le.f32.partialorder %v2920, 0.7853982
        %vm2922 = vcmp.lt.s32.totalorder %v578, 0
        %v2923 = vand.u32 %v578, 2139095040
        %v2924 = vshrl.u32 %v2923, 23
        %v2925 = vsub.s32 %v2924, 127
        %v2926 = vand.u32 2147483647, %v578
        %v2927 = vand.u32 %v2926, 8388607
        %v2928 = vor.u32 %v2927, 8388608
        %v2929 = vsub.s32 0, %v2928
        %v2930 = vadd.s32 %v2925, 1
        %vm2931 = vcmp.gt.s32.totalorder %v2930, 0
        %v2932 = vsel %vm2931, %v2930, 0
        %v2933 = vshrl.u32 %v2932, 5
        %v2934 = vand.u32 %v2932, 31
        %v2935 = vsub.s32 32, %v2934
        %v2936 = vshrl.u32 683565275, %v2935
        %v2937 = vshll.u32 683565275, %v2934
        %v2938 = vshrl.u32 2475754826, %v2935
        %v2939 = vor.u32 %v2937, %v2938
        %v2940 = vshll.u32 2475754826, %v2934
        %v2941 = vshrl.u32 2131351028, %v2935
        %v2942 = vor.u32 %v2940, %v2941
        %v2943 = vshll.u32 2131351028, %v2934
        %v2944 = vshrl.u32 2102212464, %v2935
        %v2945 = vor.u32 %v2943, %v2944
        %v2946 = vshll.u32 2102212464, %v2934
        %v2947 = vshrl.u32 920167782, %v2935
        %v2948 = vor.u32 %v2946, %v2947
        %v2949 = vshll.u32 920167782, %v2934
        %v2950 = vshrl.u32 1326507024, %v2935
        %v2951 = vor.u32 %v2949, %v2950
        %vm2952 = vcmp.lt.s32.totalorder %v2933, 1
        %vm2953 = vcmp.lt.s32.totalorder %v2933, 2
        %vm2954 = vcmp.lt.s32.totalorder %v2933, 3
        %vm2955 = vcmp.lt.s32.totalorder %v2933, 4
        %v2956 = vsel %vm2952, %v2936, %v2939
        %v2957 = vsel %vm2955, %v2945, 2102212464
        %v2958 = vsel %vm2954, %v2942, %v2957
        %v2959 = vsel %vm2953, %v2956, %v2958
        %v2960 = vsel %vm2952, %v2939, %v2942
        %v2961 = vsel %vm2955, %v2948, 920167782
        %v2962 = vsel %vm2954, %v2945, %v2961
        %v2963 = vsel %vm2953, %v2960, %v2962
        %v2964 = vsel %vm2952, %v2942, %v2945
        %v2965 = vsel %vm2955, %v2951, 1326507024
        %v2966 = vsel %vm2954, %v2948, %v2965
        %v2967 = vsel %vm2953, %v2964, %v2966
        %v2968 = vshll.u32 %v2928, 8
        %v2969 = vand.u32 %v2968, 65535
        %v2970 = vshrl.u32 %v2968, 16
        %v2971 = vand.u32 %v2967, 65535
        %v2972 = vshrl.u32 %v2967, 16
        %v2973 = vmul.u32 %v2969, %v2971
        %v2974 = vmul.u32 %v2969, %v2972
        %v2975 = vmul.u32 %v2970, %v2971
        %v2976 = vmul.u32 %v2970, %v2972
        %v2977 = vshll.u32 %v2974, 16
        %v2978 = vshrl.u32 %v2974, 16
        %v2979 = vshll.u32 %v2975, 16
        %v2980 = vshrl.u32 %v2975, 16
        %vm2981 = vc.u32 %v2973, %v2977
        %v2982 = vsel %vm2981, 1, 0
        %v2983 = vadd.s32 %v2973, %v2977
        %v2984 = vadd.s32 %v2976, %v2982
        %vm2985 = vc.u32 %v2983, %v2979
        %v2986 = vsel %vm2985, 1, 0
        %v2987 = vadd.s32 %v2983, %v2979
        %v2988 = vadd.s32 %v2984, %v2986
        %v2989 = vadd.s32 %v2988, %v2978
        %v2990 = vadd.s32 %v2989, %v2980
        %v2991 = vand.u32 %v2968, 65535
        %v2992 = vshrl.u32 %v2968, 16
        %v2993 = vand.u32 %v2963, 65535
        %v2994 = vshrl.u32 %v2963, 16
        %v2995 = vmul.u32 %v2991, %v2993
        %v2996 = vmul.u32 %v2991, %v2994
        %v2997 = vmul.u32 %v2992, %v2993
        %v2998 = vmul.u32 %v2992, %v2994
        %v2999 = vshll.u32 %v2996, 16
        %v3000 = vshrl.u32 %v2996, 16
        %v3001 = vshll.u32 %v2997, 16
        %v3002 = vshrl.u32 %v2997, 16
        %vm3003 = vc.u32 %v2995, %v2999
        %v3004 = vsel %vm3003, 1, 0
        %v3005 = vadd.s32 %v2995, %v2999
        %v3006 = vadd.s32 %v2998, %v3004
        %vm3007 = vc.u32 %v3005, %v3001
        %v3008 = vsel %vm3007, 1, 0
        %v3009 = vadd.s32 %v3005, %v3001
        %v3010 = vadd.s32 %v3006, %v3008
        %v3011 = vadd.s32 %v3010, %v3000
        %v3012 = vadd.s32 %v3011, %v3002
        %v3013 = vmul.u32 %v2968, %v2959
        %v3014 = vadd.s32 %v2990, %v3009
        %vm3015 = vc.u32 %v2990, %v3009
        %v3016 = vadd.s32 %v3012, 1
        %v3017 = vsel %vm3015, %v3016, %v3012
        %v3018 = vadd.s32 %v3013, %v3017
        %v3019 = vadd.s32 %v3018, 536870912
        %v3020 = vshrl.u32 %v3019, 30
        %v3021 = vshll.u32 %v3020, 30
        %v3022 = vsub.s32 %v3018, %v3021
        %vm3023 = vcmp.lt.s32.totalorder %v3022, 0
        %v3024 = vsub.s32 0, %v3022
        %v3025 = vsel %vm3023, %v3024, %v3022
        %v3026 = vclz %v3025
        %v3027 = vsub.s32 %v3026, 2
        %vm3028 = vcmp.gt.s32.totalorder 0, %v3027
        %v3029 = vsel %vm3028, 0, %v3027
        %v3030 = vsub.s32 32, %v3029
        %v3031 = vshll.u32 %v3022, %v3029
        %v3032 = vshrl.u32 %v3014, %v3030
        %v3033 = vor.u32 %v3031, %v3032
        %v3034 = vsub.s32 4294967266, %v3029
        %v3035 = vadd.s32 %v3034, 127
        %v3036 = vshll.u32 %v3035, 23
        %v3037 = vor.u32 4788187, %v3036
        %v3038 = vand.u32 2147483647, %v3037
        %v3040 = vcvt.s32.f32 %v3033
        %v3041 = vmul.f32 %v3040, %v3038
        %v3042 = vxor.u32 %v3041, 2147483648
        %v3043 = vsel %vm2922, %v3042, %v3041
        %v3044 = vsub.s32 4, %v3020
        %v3045 = vsel %vm2922, %v3044, %v3020
        %v3046 = vsel %vm2921, %v578, %v3043
        %v3047 = vsel %vm2921, 0, %v3045
        %v3048 = vmul.f32 %v3046, %v3046
        %v3049 = vmul.f32 %v3048, -0.001358992
        %v3050 = vadd.f32 %v3049, 0.041655596
        %v3051 = vmul.f32 %v3048, %v3050
        %v3052 = vadd.f32 %v3051, -0.4999988
        %v3053 = vmul.f32 %v3048, %v3052
        %v3054 = vadd.f32 1.0, %v3053
        %v3055 = vmul.f32 %v3046, %v3046
        %v3056 = vmul.f32 %v3055, -0.00019511016
        %v3057 = vadd.f32 %v3056, 0.008332121
        %v3058 = vmul.f32 %v3055, %v3057
        %v3059 = vadd.f32 %v3058, -0.16666654
        %v3060 = vmul.f32 %v3055, %v3059
        %v3061 = vadd.f32 %v3060, 1.0
        %v3062 = vmul.f32 %v3061, %v3046
        %vm3063 = vweird.f32 %v578
        %v3064 = vadd.s32 %v3047, 3
        %v3065 = vand.u32 %v3064, 3
        %vm3066 = vcmp.lt.s32.totalorder %v3065, 2
        %vm3067 = vcmp.eq.s32.totalorder %v3065, 0
        %v3068 = vxor.u32 %v3062, 2147483648
        %v3069 = vsel %vm3067, %v3054, %v3068
        %vm3070 = vcmp.eq.s32.totalorder %v3065, 2
        %v3071 = vxor.u32 %v3054, 2147483648
        %v3072 = vsel %vm3070, %v3071, %v3062
        %v3073 = vsel %vm3066, %v3069, %v3072
        %v3074 = vsel %vm3063, nan, %v3073
        %v3075 = vand.u32 2147483647, %v579
        %vm3076 = vcmp.le.f32.partialorder %v3075, 0.7853982
        %vm3077 = vcmp.lt.s32.totalorder %v579, 0
        %v3078 = vand.u32 %v579, 2139095040
        %v3079 = vshrl.u32 %v3078, 23
        %v3080 = vsub.s32 %v3079, 127
        %v3081 = vand.u32 2147483647, %v579
        %v3082 = vand.u32 %v3081, 8388607
        %v3083 = vor.u32 %v3082, 8388608
        %v3084 = vsub.s32 0, %v3083
        %v3085 = vadd.s32 %v3080, 1
        %vm3086 = vcmp.gt.s32.totalorder %v3085, 0
        %v3087 = vsel %vm3086, %v3085, 0
        %v3088 = vshrl.u32 %v3087, 5
        %v3089 = vand.u32 %v3087, 31
        %v3090 = vsub.s32 32, %v3089
        %v3091 = vshrl.u32 683565275, %v3090
        %v3092 = vshll.u32 683565275, %v3089
        %v3093 = vshrl.u32 2475754826, %v3090
        %v3094 = vor.u32 %v3092, %v3093
        %v3095 = vshll.u32 2475754826, %v3089
        %v3096 = vshrl.u32 2131351028, %v3090
        %v3097 = vor.u32 %v3095, %v3096
        %v3098 = vshll.u32 2131351028, %v3089
        %v3099 = vshrl.u32 2102212464, %v3090
        %v3100 = vor.u32 %v3098, %v3099
        %v3101 = vshll.u32 2102212464, %v3089
        %v3102 = vshrl.u32 920167782, %v3090
        %v3103 = vor.u32 %v3101, %v3102
        %v3104 = vshll.u32 920167782, %v3089
        %v3105 = vshrl.u32 1326507024, %v3090
        %v3106 = vor.u32 %v3104, %v3105
        %vm3107 = vcmp.lt.s32.totalorder %v3088, 1
        %vm3108 = vcmp.lt.s32.totalorder %v3088, 2
        %vm3109 = vcmp.lt.s32.totalorder %v3088, 3
        %vm3110 = vcmp.lt.s32.totalorder %v3088, 4
        %v3111 = vsel %vm3107, %v3091, %v3094
        %v3112 = vsel %vm3110, %v3100, 2102212464
        %v3113 = vsel %vm3109, %v3097, %v3112
        %v3114 = vsel %vm3108, %v3111, %v3113
        %v3115 = vsel %vm3107, %v3094, %v3097
        %v3116 = vsel %vm3110, %v3103, 920167782
        %v3117 = vsel %vm3109, %v3100, %v3116
        %v3118 = vsel %vm3108, %v3115, %v3117
        %v3119 = vsel %vm3107, %v3097, %v3100
        %v3120 = vsel %vm3110, %v3106, 1326507024
        %v3121 = vsel %vm3109, %v3103, %v3120
        %v3122 = vsel %vm3108, %v3119, %v3121
        %v3123 = vshll.u32 %v3083, 8
        %v3124 = vand.u32 %v3123, 65535
        %v3125 = vshrl.u32 %v3123, 16
        %v3126 = vand.u32 %v3122, 65535
        %v3127 = vshrl.u32 %v3122, 16
        %v3128 = vmul.u32 %v3124, %v3126
        %v3129 = vmul.u32 %v3124, %v3127
        %v3130 = vmul.u32 %v3125, %v3126
        %v3131 = vmul.u32 %v3125, %v3127
        %v3132 = vshll.u32 %v3129, 16
        %v3133 = vshrl.u32 %v3129, 16
        %v3134 = vshll.u32 %v3130, 16
        %v3135 = vshrl.u32 %v3130, 16
        %vm3136 = vc.u32 %v3128, %v3132
        %v3137 = vsel %vm3136, 1, 0
        %v3138 = vadd.s32 %v3128, %v3132
        %v3139 = vadd.s32 %v3131, %v3137
        %vm3140 = vc.u32 %v3138, %v3134
        %v3141 = vsel %vm3140, 1, 0
        %v3142 = vadd.s32 %v3138, %v3134
        %v3143 = vadd.s32 %v3139, %v3141
        %v3144 = vadd.s32 %v3143, %v3133
        %v3145 = vadd.s32 %v3144, %v3135
        %v3146 = vand.u32 %v3123, 65535
        %v3147 = vshrl.u32 %v3123, 16
        %v3148 = vand.u32 %v3118, 65535
        %v3149 = vshrl.u32 %v3118, 16
        %v3150 = vmul.u32 %v3146, %v3148
        %v3151 = vmul.u32 %v3146, %v3149
        %v3152 = vmul.u32 %v3147, %v3148
        %v3153 = vmul.u32 %v3147, %v3149
        %v3154 = vshll.u32 %v3151, 16
        %v3155 = vshrl.u32 %v3151, 16
        %v3156 = vshll.u32 %v3152, 16
        %v3157 = vshrl.u32 %v3152, 16
        %vm3158 = vc.u32 %v3150, %v3154
        %v3159 = vsel %vm3158, 1, 0
        %v3160 = vadd.s32 %v3150, %v3154
        %v3161 = vadd.s32 %v3153, %v3159
        %vm3162 = vc.u32 %v3160, %v3156
        %v3163 = vsel %vm3162, 1, 0
        %v3164 = vadd.s32 %v3160, %v3156
        %v3165 = vadd.s32 %v3161, %v3163
        %v3166 = vadd.s32 %v3165, %v3155
        %v3167 = vadd.s32 %v3166, %v3157
        %v3168 = vmul.u32 %v3123, %v3114
        %v3169 = vadd.s32 %v3145, %v3164
        %vm3170 = vc.u32 %v3145, %v3164
        %v3171 = vadd.s32 %v3167, 1
        %v3172 = vsel %vm3170, %v3171, %v3167
        %v3173 = vadd.s32 %v3168, %v3172
        %v3174 = vadd.s32 %v3173, 536870912
        %v3175 = vshrl.u32 %v3174, 30
        %v3176 = vshll.u32 %v3175, 30
        %v3177 = vsub.s32 %v3173, %v3176
        %vm3178 = vcmp.lt.s32.totalorder %v3177, 0
        %v3179 = vsub.s32 0, %v3177
        %v3180 = vsel %vm3178, %v3179, %v3177
        %v3181 = vclz %v3180
        %v3182 = vsub.s32 %v3181, 2
        %vm3183 = vcmp.gt.s32.totalorder 0, %v3182
        %v3184 = vsel %vm3183, 0, %v3182
        %v3185 = vsub.s32 32, %v3184
        %v3186 = vshll.u32 %v3177, %v3184
        %v3187 = vshrl.u32 %v3169, %v3185
        %v3188 = vor.u32 %v3186, %v3187
        %v3189 = vsub.s32 4294967266, %v3184
        %v3190 = vadd.s32 %v3189, 127
        %v3191 = vshll.u32 %v3190, 23
        %v3192 = vor.u32 4788187, %v3191
        %v3193 = vand.u32 2147483647, %v3192
        %v3195 = vcvt.s32.f32 %v3188
        %v3196 = vmul.f32 %v3195, %v3193
        %v3197 = vxor.u32 %v3196, 2147483648
        %v3198 = vsel %vm3077, %v3197, %v3196
        %v3199 = vsub.s32 4, %v3175
        %v3200 = vsel %vm3077, %v3199, %v3175
        %v3201 = vsel %vm3076, %v579, %v3198
        %v3202 = vsel %vm3076, 0, %v3200
        %v3203 = vmul.f32 %v3201, %v3201
        %v3204 = vmul.f32 %v3203, -0.001358992
        %v3205 = vadd.f32 %v3204, 0.041655596
        %v3206 = vmul.f32 %v3203, %v3205
        %v3207 = vadd.f32 %v3206, -0.4999988
        %v3208 = vmul.f32 %v3203, %v3207
        %v3209 = vadd.f32 1.0, %v3208
        %v3210 = vmul.f32 %v3201, %v3201
        %v3211 = vmul.f32 %v3210, -0.00019511016
        %v3212 = vadd.f32 %v3211, 0.008332121
        %v3213 = vmul.f32 %v3210, %v3212
        %v3214 = vadd.f32 %v3213, -0.16666654
        %v3215 = vmul.f32 %v3210, %v3214
        %v3216 = vadd.f32 %v3215, 1.0
        %v3217 = vmul.f32 %v3216, %v3201
        %vm3218 = vweird.f32 %v579
        %v3219 = vadd.s32 %v3202, 3
        %v3220 = vand.u32 %v3219, 3
        %vm3221 = vcmp.lt.s32.totalorder %v3220, 2
        %vm3222 = vcmp.eq.s32.totalorder %v3220, 0
        %v3223 = vxor.u32 %v3217, 2147483648
        %v3224 = vsel %vm3222, %v3209, %v3223
        %vm3225 = vcmp.eq.s32.totalorder %v3220, 2
        %v3226 = vxor.u32 %v3209, 2147483648
        %v3227 = vsel %vm3225, %v3226, %v3217
        %v3228 = vsel %vm3221, %v3224, %v3227
        %v3229 = vsel %vm3218, nan, %v3228
        %v3230 = vand.u32 2147483647, %v580
        %vm3231 = vcmp.le.f32.partialorder %v3230, 0.7853982
        %vm3232 = vcmp.lt.s32.totalorder %v580, 0
        %v3233 = vand.u32 %v580, 2139095040
        %v3234 = vshrl.u32 %v3233, 23
        %v3235 = vsub.s32 %v3234, 127
        %v3236 = vand.u32 2147483647, %v580
        %v3237 = vand.u32 %v3236, 8388607
        %v3238 = vor.u32 %v3237, 8388608
        %v3239 = vsub.s32 0, %v3238
        %v3240 = vadd.s32 %v3235, 1
        %vm3241 = vcmp.gt.s32.totalorder %v3240, 0
        %v3242 = vsel %vm3241, %v3240, 0
        %v3243 = vshrl.u32 %v3242, 5
        %v3244 = vand.u32 %v3242, 31
        %v3245 = vsub.s32 32, %v3244
        %v3246 = vshrl.u32 683565275, %v3245
        %v3247 = vshll.u32 683565275, %v3244
        %v3248 = vshrl.u32 2475754826, %v3245
        %v3249 = vor.u32 %v3247, %v3248
        %v3250 = vshll.u32 2475754826, %v3244
        %v3251 = vshrl.u32 2131351028, %v3245
        %v3252 = vor.u32 %v3250, %v3251
        %v3253 = vshll.u32 2131351028, %v3244
        %v3254 = vshrl.u32 2102212464, %v3245
        %v3255 = vor.u32 %v3253, %v3254
        %v3256 = vshll.u32 2102212464, %v3244
        %v3257 = vshrl.u32 920167782, %v3245
        %v3258 = vor.u32 %v3256, %v3257
        %v3259 = vshll.u32 920167782, %v3244
        %v3260 = vshrl.u32 1326507024, %v3245
        %v3261 = vor.u32 %v3259, %v3260
        %vm3262 = vcmp.lt.s32.totalorder %v3243, 1
        %vm3263 = vcmp.lt.s32.totalorder %v3243, 2
        %vm3264 = vcmp.lt.s32.totalorder %v3243, 3
        %vm3265 = vcmp.lt.s32.totalorder %v3243, 4
        %v3266 = vsel %vm3262, %v3246, %v3249
        %v3267 = vsel %vm3265, %v3255, 2102212464
        %v3268 = vsel %vm3264, %v3252, %v3267
        %v3269 = vsel %vm3263, %v3266, %v3268
        %v3270 = vsel %vm3262, %v3249, %v3252
        %v3271 = vsel %vm3265, %v3258, 920167782
        %v3272 = vsel %vm3264, %v3255, %v3271
        %v3273 = vsel %vm3263, %v3270, %v3272
        %v3274 = vsel %vm3262, %v3252, %v3255
        %v3275 = vsel %vm3265, %v3261, 1326507024
        %v3276 = vsel %vm3264, %v3258, %v3275
        %v3277 = vsel %vm3263, %v3274, %v3276
        %v3278 = vshll.u32 %v3238, 8
        %v3279 = vand.u32 %v3278, 65535
        %v3280 = vshrl.u32 %v3278, 16
        %v3281 = vand.u32 %v3277, 65535
        %v3282 = vshrl.u32 %v3277, 16
        %v3283 = vmul.u32 %v3279, %v3281
        %v3284 = vmul.u32 %v3279, %v3282
        %v3285 = vmul.u32 %v3280, %v3281
        %v3286 = vmul.u32 %v3280, %v3282
        %v3287 = vshll.u32 %v3284, 16
        %v3288 = vshrl.u32 %v3284, 16
        %v3289 = vshll.u32 %v3285, 16
        %v3290 = vshrl.u32 %v3285, 16
        %vm3291 = vc.u32 %v3283, %v3287
        %v3292 = vsel %vm3291, 1, 0
        %v3293 = vadd.s32 %v3283, %v3287
        %v3294 = vadd.s32 %v3286, %v3292
        %vm3295 = vc.u32 %v3293, %v3289
        %v3296 = vsel %vm3295, 1, 0
        %v3297 = vadd.s32 %v3293, %v3289
        %v3298 = vadd.s32 %v3294, %v3296
        %v3299 = vadd.s32 %v3298, %v3288
        %v3300 = vadd.s32 %v3299, %v3290
        %v3301 = vand.u32 %v3278, 65535
        %v3302 = vshrl.u32 %v3278, 16
        %v3303 = vand.u32 %v3273, 65535
        %v3304 = vshrl.u32 %v3273, 16
        %v3305 = vmul.u32 %v3301, %v3303
        %v3306 = vmul.u32 %v3301, %v3304
        %v3307 = vmul.u32 %v3302, %v3303
        %v3308 = vmul.u32 %v3302, %v3304
        %v3309 = vshll.u32 %v3306, 16
        %v3310 = vshrl.u32 %v3306, 16
        %v3311 = vshll.u32 %v3307, 16
        %v3312 = vshrl.u32 %v3307, 16
        %vm3313 = vc.u32 %v3305, %v3309
        %v3314 = vsel %vm3313, 1, 0
        %v3315 = vadd.s32 %v3305, %v3309
        %v3316 = vadd.s32 %v3308, %v3314
        %vm3317 = vc.u32 %v3315, %v3311
        %v3318 = vsel %vm3317, 1, 0
        %v3319 = vadd.s32 %v3315, %v3311
        %v3320 = vadd.s32 %v3316, %v3318
        %v3321 = vadd.s32 %v3320, %v3310
        %v3322 = vadd.s32 %v3321, %v3312
        %v3323 = vmul.u32 %v3278, %v3269
        %v3324 = vadd.s32 %v3300, %v3319
        %vm3325 = vc.u32 %v3300, %v3319
        %v3326 = vadd.s32 %v3322, 1
        %v3327 = vsel %vm3325, %v3326, %v3322
        %v3328 = vadd.s32 %v3323, %v3327
        %v3329 = vadd.s32 %v3328, 536870912
        %v3330 = vshrl.u32 %v3329, 30
        %v3331 = vshll.u32 %v3330, 30
        %v3332 = vsub.s32 %v3328, %v3331
        %vm3333 = vcmp.lt.s32.totalorder %v3332, 0
        %v3334 = vsub.s32 0, %v3332
        %v3335 = vsel %vm3333, %v3334, %v3332
        %v3336 = vclz %v3335
        %v3337 = vsub.s32 %v3336, 2
        %vm3338 = vcmp.gt.s32.totalorder 0, %v3337
        %v3339 = vsel %vm3338, 0, %v3337
        %v3340 = vsub.s32 32, %v3339
        %v3341 = vshll.u32 %v3332, %v3339
        %v3342 = vshrl.u32 %v3324, %v3340
        %v3343 = vor.u32 %v3341, %v3342
        %v3344 = vsub.s32 4294967266, %v3339
        %v3345 = vadd.s32 %v3344, 127
        %v3346 = vshll.u32 %v3345, 23
        %v3347 = vor.u32 4788187, %v3346
        %v3348 = vand.u32 2147483647, %v3347
        %v3350 = vcvt.s32.f32 %v3343
        %v3351 = vmul.f32 %v3350, %v3348
        %v3352 = vxor.u32 %v3351, 2147483648
        %v3353 = vsel %vm3232, %v3352, %v3351
        %v3354 = vsub.s32 4, %v3330
        %v3355 = vsel %vm3232, %v3354, %v3330
        %v3356 = vsel %vm3231, %v580, %v3353
        %v3357 = vsel %vm3231, 0, %v3355
        %v3358 = vmul.f32 %v3356, %v3356
        %v3359 = vmul.f32 %v3358, -0.001358992
        %v3360 = vadd.f32 %v3359, 0.041655596
        %v3361 = vmul.f32 %v3358, %v3360
        %v3362 = vadd.f32 %v3361, -0.4999988
        %v3363 = vmul.f32 %v3358, %v3362
        %v3364 = vadd.f32 1.0, %v3363
        %v3365 = vmul.f32 %v3356, %v3356
        %v3366 = vmul.f32 %v3365, -0.00019511016
        %v3367 = vadd.f32 %v3366, 0.008332121
        %v3368 = vmul.f32 %v3365, %v3367
        %v3369 = vadd.f32 %v3368, -0.16666654
        %v3370 = vmul.f32 %v3365, %v3369
        %v3371 = vadd.f32 %v3370, 1.0
        %v3372 = vmul.f32 %v3371, %v3356
        %vm3373 = vweird.f32 %v580
        %v3374 = vadd.s32 %v3357, 3
        %v3375 = vand.u32 %v3374, 3
        %vm3376 = vcmp.lt.s32.totalorder %v3375, 2
        %vm3377 = vcmp.eq.s32.totalorder %v3375, 0
        %v3378 = vxor.u32 %v3372, 2147483648
        %v3379 = vsel %vm3377, %v3364, %v3378
        %vm3380 = vcmp.eq.s32.totalorder %v3375, 2
        %v3381 = vxor.u32 %v3364, 2147483648
        %v3382 = vsel %vm3380, %v3381, %v3372
        %v3383 = vsel %vm3376, %v3379, %v3382
        %v3384 = vsel %vm3373, nan, %v3383
        %v3385 = vand.u32 2147483647, %v581
        %vm3386 = vcmp.le.f32.partialorder %v3385, 0.7853982
        %vm3387 = vcmp.lt.s32.totalorder %v581, 0
        %v3388 = vand.u32 %v581, 2139095040
        %v3389 = vshrl.u32 %v3388, 23
        %v3390 = vsub.s32 %v3389, 127
        %v3391 = vand.u32 2147483647, %v581
        %v3392 = vand.u32 %v3391, 8388607
        %v3393 = vor.u32 %v3392, 8388608
        %v3394 = vsub.s32 0, %v3393
        %v3395 = vadd.s32 %v3390, 1
        %vm3396 = vcmp.gt.s32.totalorder %v3395, 0
        %v3397 = vsel %vm3396, %v3395, 0
        %v3398 = vshrl.u32 %v3397, 5
        %v3399 = vand.u32 %v3397, 31
        %v3400 = vsub.s32 32, %v3399
        %v3401 = vshrl.u32 683565275, %v3400
        %v3402 = vshll.u32 683565275, %v3399
        %v3403 = vshrl.u32 2475754826, %v3400
        %v3404 = vor.u32 %v3402, %v3403
        %v3405 = vshll.u32 2475754826, %v3399
        %v3406 = vshrl.u32 2131351028, %v3400
        %v3407 = vor.u32 %v3405, %v3406
        %v3408 = vshll.u32 2131351028, %v3399
        %v3409 = vshrl.u32 2102212464, %v3400
        %v3410 = vor.u32 %v3408, %v3409
        %v3411 = vshll.u32 2102212464, %v3399
        %v3412 = vshrl.u32 920167782, %v3400
        %v3413 = vor.u32 %v3411, %v3412
        %v3414 = vshll.u32 920167782, %v3399
        %v3415 = vshrl.u32 1326507024, %v3400
        %v3416 = vor.u32 %v3414, %v3415
        %vm3417 = vcmp.lt.s32.totalorder %v3398, 1
        %vm3418 = vcmp.lt.s32.totalorder %v3398, 2
        %vm3419 = vcmp.lt.s32.totalorder %v3398, 3
        %vm3420 = vcmp.lt.s32.totalorder %v3398, 4
        %v3421 = vsel %vm3417, %v3401, %v3404
        %v3422 = vsel %vm3420, %v3410, 2102212464
        %v3423 = vsel %vm3419, %v3407, %v3422
        %v3424 = vsel %vm3418, %v3421, %v3423
        %v3425 = vsel %vm3417, %v3404, %v3407
        %v3426 = vsel %vm3420, %v3413, 920167782
        %v3427 = vsel %vm3419, %v3410, %v3426
        %v3428 = vsel %vm3418, %v3425, %v3427
        %v3429 = vsel %vm3417, %v3407, %v3410
        %v3430 = vsel %vm3420, %v3416, 1326507024
        %v3431 = vsel %vm3419, %v3413, %v3430
        %v3432 = vsel %vm3418, %v3429, %v3431
        %v3433 = vshll.u32 %v3393, 8
        %v3434 = vand.u32 %v3433, 65535
        %v3435 = vshrl.u32 %v3433, 16
        %v3436 = vand.u32 %v3432, 65535
        %v3437 = vshrl.u32 %v3432, 16
        %v3438 = vmul.u32 %v3434, %v3436
        %v3439 = vmul.u32 %v3434, %v3437
        %v3440 = vmul.u32 %v3435, %v3436
        %v3441 = vmul.u32 %v3435, %v3437
        %v3442 = vshll.u32 %v3439, 16
        %v3443 = vshrl.u32 %v3439, 16
        %v3444 = vshll.u32 %v3440, 16
        %v3445 = vshrl.u32 %v3440, 16
        %vm3446 = vc.u32 %v3438, %v3442
        %v3447 = vsel %vm3446, 1, 0
        %v3448 = vadd.s32 %v3438, %v3442
        %v3449 = vadd.s32 %v3441, %v3447
        %vm3450 = vc.u32 %v3448, %v3444
        %v3451 = vsel %vm3450, 1, 0
        %v3452 = vadd.s32 %v3448, %v3444
        %v3453 = vadd.s32 %v3449, %v3451
        %v3454 = vadd.s32 %v3453, %v3443
        %v3455 = vadd.s32 %v3454, %v3445
        %v3456 = vand.u32 %v3433, 65535
        %v3457 = vshrl.u32 %v3433, 16
        %v3458 = vand.u32 %v3428, 65535
        %v3459 = vshrl.u32 %v3428, 16
        %v3460 = vmul.u32 %v3456, %v3458
        %v3461 = vmul.u32 %v3456, %v3459
        %v3462 = vmul.u32 %v3457, %v3458
        %v3463 = vmul.u32 %v3457, %v3459
        %v3464 = vshll.u32 %v3461, 16
        %v3465 = vshrl.u32 %v3461, 16
        %v3466 = vshll.u32 %v3462, 16
        %v3467 = vshrl.u32 %v3462, 16
        %vm3468 = vc.u32 %v3460, %v3464
        %v3469 = vsel %vm3468, 1, 0
        %v3470 = vadd.s32 %v3460, %v3464
        %v3471 = vadd.s32 %v3463, %v3469
        %vm3472 = vc.u32 %v3470, %v3466
        %v3473 = vsel %vm3472, 1, 0
        %v3474 = vadd.s32 %v3470, %v3466
        %v3475 = vadd.s32 %v3471, %v3473
        %v3476 = vadd.s32 %v3475, %v3465
        %v3477 = vadd.s32 %v3476, %v3467
        %v3478 = vmul.u32 %v3433, %v3424
        %v3479 = vadd.s32 %v3455, %v3474
        %vm3480 = vc.u32 %v3455, %v3474
        %v3481 = vadd.s32 %v3477, 1
        %v3482 = vsel %vm3480, %v3481, %v3477
        %v3483 = vadd.s32 %v3478, %v3482
        %v3484 = vadd.s32 %v3483, 536870912
        %v3485 = vshrl.u32 %v3484, 30
        %v3486 = vshll.u32 %v3485, 30
        %v3487 = vsub.s32 %v3483, %v3486
        %vm3488 = vcmp.lt.s32.totalorder %v3487, 0
        %v3489 = vsub.s32 0, %v3487
        %v3490 = vsel %vm3488, %v3489, %v3487
        %v3491 = vclz %v3490
        %v3492 = vsub.s32 %v3491, 2
        %vm3493 = vcmp.gt.s32.totalorder 0, %v3492
        %v3494 = vsel %vm3493, 0, %v3492
        %v3495 = vsub.s32 32, %v3494
        %v3496 = vshll.u32 %v3487, %v3494
        %v3497 = vshrl.u32 %v3479, %v3495
        %v3498 = vor.u32 %v3496, %v3497
        %v3499 = vsub.s32 4294967266, %v3494
        %v3500 = vadd.s32 %v3499, 127
        %v3501 = vshll.u32 %v3500, 23
        %v3502 = vor.u32 4788187, %v3501
        %v3503 = vand.u32 2147483647, %v3502
        %v3505 = vcvt.s32.f32 %v3498
        %v3506 = vmul.f32 %v3505, %v3503
        %v3507 = vxor.u32 %v3506, 2147483648
        %v3508 = vsel %vm3387, %v3507, %v3506
        %v3509 = vsub.s32 4, %v3485
        %v3510 = vsel %vm3387, %v3509, %v3485
        %v3511 = vsel %vm3386, %v581, %v3508
        %v3512 = vsel %vm3386, 0, %v3510
        %v3513 = vmul.f32 %v3511, %v3511
        %v3514 = vmul.f32 %v3513, -0.001358992
        %v3515 = vadd.f32 %v3514, 0.041655596
        %v3516 = vmul.f32 %v3513, %v3515
        %v3517 = vadd.f32 %v3516, -0.4999988
        %v3518 = vmul.f32 %v3513, %v3517
        %v3519 = vadd.f32 1.0, %v3518
        %v3520 = vmul.f32 %v3511, %v3511
        %v3521 = vmul.f32 %v3520, -0.00019511016
        %v3522 = vadd.f32 %v3521, 0.008332121
        %v3523 = vmul.f32 %v3520, %v3522
        %v3524 = vadd.f32 %v3523, -0.16666654
        %v3525 = vmul.f32 %v3520, %v3524
        %v3526 = vadd.f32 %v3525, 1.0
        %v3527 = vmul.f32 %v3526, %v3511
        %vm3528 = vweird.f32 %v581
        %v3529 = vadd.s32 %v3512, 3
        %v3530 = vand.u32 %v3529, 3
        %vm3531 = vcmp.lt.s32.totalorder %v3530, 2
        %vm3532 = vcmp.eq.s32.totalorder %v3530, 0
        %v3533 = vxor.u32 %v3527, 2147483648
        %v3534 = vsel %vm3532, %v3519, %v3533
        %vm3535 = vcmp.eq.s32.totalorder %v3530, 2
        %v3536 = vxor.u32 %v3519, 2147483648
        %v3537 = vsel %vm3535, %v3536, %v3527
        %v3538 = vsel %vm3531, %v3534, %v3537
        %v3539 = vsel %vm3528, nan, %v3538
        %v3540 = vand.u32 2147483647, %v582
        %vm3541 = vcmp.le.f32.partialorder %v3540, 0.7853982
        %vm3542 = vcmp.lt.s32.totalorder %v582, 0
        %v3543 = vand.u32 %v582, 2139095040
        %v3544 = vshrl.u32 %v3543, 23
        %v3545 = vsub.s32 %v3544, 127
        %v3546 = vand.u32 2147483647, %v582
        %v3547 = vand.u32 %v3546, 8388607
        %v3548 = vor.u32 %v3547, 8388608
        %v3549 = vsub.s32 0, %v3548
        %v3550 = vadd.s32 %v3545, 1
        %vm3551 = vcmp.gt.s32.totalorder %v3550, 0
        %v3552 = vsel %vm3551, %v3550, 0
        %v3553 = vshrl.u32 %v3552, 5
        %v3554 = vand.u32 %v3552, 31
        %v3555 = vsub.s32 32, %v3554
        %v3556 = vshrl.u32 683565275, %v3555
        %v3557 = vshll.u32 683565275, %v3554
        %v3558 = vshrl.u32 2475754826, %v3555
        %v3559 = vor.u32 %v3557, %v3558
        %v3560 = vshll.u32 2475754826, %v3554
        %v3561 = vshrl.u32 2131351028, %v3555
        %v3562 = vor.u32 %v3560, %v3561
        %v3563 = vshll.u32 2131351028, %v3554
        %v3564 = vshrl.u32 2102212464, %v3555
        %v3565 = vor.u32 %v3563, %v3564
        %v3566 = vshll.u32 2102212464, %v3554
        %v3567 = vshrl.u32 920167782, %v3555
        %v3568 = vor.u32 %v3566, %v3567
        %v3569 = vshll.u32 920167782, %v3554
        %v3570 = vshrl.u32 1326507024, %v3555
        %v3571 = vor.u32 %v3569, %v3570
        %vm3572 = vcmp.lt.s32.totalorder %v3553, 1
        %vm3573 = vcmp.lt.s32.totalorder %v3553, 2
        %vm3574 = vcmp.lt.s32.totalorder %v3553, 3
        %vm3575 = vcmp.lt.s32.totalorder %v3553, 4
        %v3576 = vsel %vm3572, %v3556, %v3559
        %v3577 = vsel %vm3575, %v3565, 2102212464
        %v3578 = vsel %vm3574, %v3562, %v3577
        %v3579 = vsel %vm3573, %v3576, %v3578
        %v3580 = vsel %vm3572, %v3559, %v3562
        %v3581 = vsel %vm3575, %v3568, 920167782
        %v3582 = vsel %vm3574, %v3565, %v3581
        %v3583 = vsel %vm3573, %v3580, %v3582
        %v3584 = vsel %vm3572, %v3562, %v3565
        %v3585 = vsel %vm3575, %v3571, 1326507024
        %v3586 = vsel %vm3574, %v3568, %v3585
        %v3587 = vsel %vm3573, %v3584, %v3586
        %v3588 = vshll.u32 %v3548, 8
        %v3589 = vand.u32 %v3588, 65535
        %v3590 = vshrl.u32 %v3588, 16
        %v3591 = vand.u32 %v3587, 65535
        %v3592 = vshrl.u32 %v3587, 16
        %v3593 = vmul.u32 %v3589, %v3591
        %v3594 = vmul.u32 %v3589, %v3592
        %v3595 = vmul.u32 %v3590, %v3591
        %v3596 = vmul.u32 %v3590, %v3592
        %v3597 = vshll.u32 %v3594, 16
        %v3598 = vshrl.u32 %v3594, 16
        %v3599 = vshll.u32 %v3595, 16
        %v3600 = vshrl.u32 %v3595, 16
        %vm3601 = vc.u32 %v3593, %v3597
        %v3602 = vsel %vm3601, 1, 0
        %v3603 = vadd.s32 %v3593, %v3597
        %v3604 = vadd.s32 %v3596, %v3602
        %vm3605 = vc.u32 %v3603, %v3599
        %v3606 = vsel %vm3605, 1, 0
        %v3607 = vadd.s32 %v3603, %v3599
        %v3608 = vadd.s32 %v3604, %v3606
        %v3609 = vadd.s32 %v3608, %v3598
        %v3610 = vadd.s32 %v3609, %v3600
        %v3611 = vand.u32 %v3588, 65535
        %v3612 = vshrl.u32 %v3588, 16
        %v3613 = vand.u32 %v3583, 65535
        %v3614 = vshrl.u32 %v3583, 16
        %v3615 = vmul.u32 %v3611, %v3613
        %v3616 = vmul.u32 %v3611, %v3614
        %v3617 = vmul.u32 %v3612, %v3613
        %v3618 = vmul.u32 %v3612, %v3614
        %v3619 = vshll.u32 %v3616, 16
        %v3620 = vshrl.u32 %v3616, 16
        %v3621 = vshll.u32 %v3617, 16
        %v3622 = vshrl.u32 %v3617, 16
        %vm3623 = vc.u32 %v3615, %v3619
        %v3624 = vsel %vm3623, 1, 0
        %v3625 = vadd.s32 %v3615, %v3619
        %v3626 = vadd.s32 %v3618, %v3624
        %vm3627 = vc.u32 %v3625, %v3621
        %v3628 = vsel %vm3627, 1, 0
        %v3629 = vadd.s32 %v3625, %v3621
        %v3630 = vadd.s32 %v3626, %v3628
        %v3631 = vadd.s32 %v3630, %v3620
        %v3632 = vadd.s32 %v3631, %v3622
        %v3633 = vmul.u32 %v3588, %v3579
        %v3634 = vadd.s32 %v3610, %v3629
        %vm3635 = vc.u32 %v3610, %v3629
        %v3636 = vadd.s32 %v3632, 1
        %v3637 = vsel %vm3635, %v3636, %v3632
        %v3638 = vadd.s32 %v3633, %v3637
        %v3639 = vadd.s32 %v3638, 536870912
        %v3640 = vshrl.u32 %v3639, 30
        %v3641 = vshll.u32 %v3640, 30
        %v3642 = vsub.s32 %v3638, %v3641
        %vm3643 = vcmp.lt.s32.totalorder %v3642, 0
        %v3644 = vsub.s32 0, %v3642
        %v3645 = vsel %vm3643, %v3644, %v3642
        %v3646 = vclz %v3645
        %v3647 = vsub.s32 %v3646, 2
        %vm3648 = vcmp.gt.s32.totalorder 0, %v3647
        %v3649 = vsel %vm3648, 0, %v3647
        %v3650 = vsub.s32 32, %v3649
        %v3651 = vshll.u32 %v3642, %v3649
        %v3652 = vshrl.u32 %v3634, %v3650
        %v3653 = vor.u32 %v3651, %v3652
        %v3654 = vsub.s32 4294967266, %v3649
        %v3655 = vadd.s32 %v3654, 127
        %v3656 = vshll.u32 %v3655, 23
        %v3657 = vor.u32 4788187, %v3656
        %v3658 = vand.u32 2147483647, %v3657
        %v3660 = vcvt.s32.f32 %v3653
        %v3661 = vmul.f32 %v3660, %v3658
        %v3662 = vxor.u32 %v3661, 2147483648
        %v3663 = vsel %vm3542, %v3662, %v3661
        %v3664 = vsub.s32 4, %v3640
        %v3665 = vsel %vm3542, %v3664, %v3640
        %v3666 = vsel %vm3541, %v582, %v3663
        %v3667 = vsel %vm3541, 0, %v3665
        %v3668 = vmul.f32 %v3666, %v3666
        %v3669 = vmul.f32 %v3668, -0.001358992
        %v3670 = vadd.f32 %v3669, 0.041655596
        %v3671 = vmul.f32 %v3668, %v3670
        %v3672 = vadd.f32 %v3671, -0.4999988
        %v3673 = vmul.f32 %v3668, %v3672
        %v3674 = vadd.f32 1.0, %v3673
        %v3675 = vmul.f32 %v3666, %v3666
        %v3676 = vmul.f32 %v3675, -0.00019511016
        %v3677 = vadd.f32 %v3676, 0.008332121
        %v3678 = vmul.f32 %v3675, %v3677
        %v3679 = vadd.f32 %v3678, -0.16666654
        %v3680 = vmul.f32 %v3675, %v3679
        %v3681 = vadd.f32 %v3680, 1.0
        %v3682 = vmul.f32 %v3681, %v3666
        %vm3683 = vweird.f32 %v582
        %v3684 = vadd.s32 %v3667, 3
        %v3685 = vand.u32 %v3684, 3
        %vm3686 = vcmp.lt.s32.totalorder %v3685, 2
        %vm3687 = vcmp.eq.s32.totalorder %v3685, 0
        %v3688 = vxor.u32 %v3682, 2147483648
        %v3689 = vsel %vm3687, %v3674, %v3688
        %vm3690 = vcmp.eq.s32.totalorder %v3685, 2
        %v3691 = vxor.u32 %v3674, 2147483648
        %v3692 = vsel %vm3690, %v3691, %v3682
        %v3693 = vsel %vm3686, %v3689, %v3692
        %v3694 = vsel %vm3683, nan, %v3693
        %v3695 = vand.u32 2147483647, %v583
        %vm3696 = vcmp.le.f32.partialorder %v3695, 0.7853982
        %vm3697 = vcmp.lt.s32.totalorder %v583, 0
        %v3698 = vand.u32 %v583, 2139095040
        %v3699 = vshrl.u32 %v3698, 23
        %v3700 = vsub.s32 %v3699, 127
        %v3701 = vand.u32 2147483647, %v583
        %v3702 = vand.u32 %v3701, 8388607
        %v3703 = vor.u32 %v3702, 8388608
        %v3704 = vsub.s32 0, %v3703
        %v3705 = vadd.s32 %v3700, 1
        %vm3706 = vcmp.gt.s32.totalorder %v3705, 0
        %v3707 = vsel %vm3706, %v3705, 0
        %v3708 = vshrl.u32 %v3707, 5
        %v3709 = vand.u32 %v3707, 31
        %v3710 = vsub.s32 32, %v3709
        %v3711 = vshrl.u32 683565275, %v3710
        %v3712 = vshll.u32 683565275, %v3709
        %v3713 = vshrl.u32 2475754826, %v3710
        %v3714 = vor.u32 %v3712, %v3713
        %v3715 = vshll.u32 2475754826, %v3709
        %v3716 = vshrl.u32 2131351028, %v3710
        %v3717 = vor.u32 %v3715, %v3716
        %v3718 = vshll.u32 2131351028, %v3709
        %v3719 = vshrl.u32 2102212464, %v3710
        %v3720 = vor.u32 %v3718, %v3719
        %v3721 = vshll.u32 2102212464, %v3709
        %v3722 = vshrl.u32 920167782, %v3710
        %v3723 = vor.u32 %v3721, %v3722
        %v3724 = vshll.u32 920167782, %v3709
        %v3725 = vshrl.u32 1326507024, %v3710
        %v3726 = vor.u32 %v3724, %v3725
        %vm3727 = vcmp.lt.s32.totalorder %v3708, 1
        %vm3728 = vcmp.lt.s32.totalorder %v3708, 2
        %vm3729 = vcmp.lt.s32.totalorder %v3708, 3
        %vm3730 = vcmp.lt.s32.totalorder %v3708, 4
        %v3731 = vsel %vm3727, %v3711, %v3714
        %v3732 = vsel %vm3730, %v3720, 2102212464
        %v3733 = vsel %vm3729, %v3717, %v3732
        %v3734 = vsel %vm3728, %v3731, %v3733
        %v3735 = vsel %vm3727, %v3714, %v3717
        %v3736 = vsel %vm3730, %v3723, 920167782
        %v3737 = vsel %vm3729, %v3720, %v3736
        %v3738 = vsel %vm3728, %v3735, %v3737
        %v3739 = vsel %vm3727, %v3717, %v3720
        %v3740 = vsel %vm3730, %v3726, 1326507024
        %v3741 = vsel %vm3729, %v3723, %v3740
        %v3742 = vsel %vm3728, %v3739, %v3741
        %v3743 = vshll.u32 %v3703, 8
        %v3744 = vand.u32 %v3743, 65535
        %v3745 = vshrl.u32 %v3743, 16
        %v3746 = vand.u32 %v3742, 65535
        %v3747 = vshrl.u32 %v3742, 16
        %v3748 = vmul.u32 %v3744, %v3746
        %v3749 = vmul.u32 %v3744, %v3747
        %v3750 = vmul.u32 %v3745, %v3746
        %v3751 = vmul.u32 %v3745, %v3747
        %v3752 = vshll.u32 %v3749, 16
        %v3753 = vshrl.u32 %v3749, 16
        %v3754 = vshll.u32 %v3750, 16
        %v3755 = vshrl.u32 %v3750, 16
        %vm3756 = vc.u32 %v3748, %v3752
        %v3757 = vsel %vm3756, 1, 0
        %v3758 = vadd.s32 %v3748, %v3752
        %v3759 = vadd.s32 %v3751, %v3757
        %vm3760 = vc.u32 %v3758, %v3754
        %v3761 = vsel %vm3760, 1, 0
        %v3762 = vadd.s32 %v3758, %v3754
        %v3763 = vadd.s32 %v3759, %v3761
        %v3764 = vadd.s32 %v3763, %v3753
        %v3765 = vadd.s32 %v3764, %v3755
        %v3766 = vand.u32 %v3743, 65535
        %v3767 = vshrl.u32 %v3743, 16
        %v3768 = vand.u32 %v3738, 65535
        %v3769 = vshrl.u32 %v3738, 16
        %v3770 = vmul.u32 %v3766, %v3768
        %v3771 = vmul.u32 %v3766, %v3769
        %v3772 = vmul.u32 %v3767, %v3768
        %v3773 = vmul.u32 %v3767, %v3769
        %v3774 = vshll.u32 %v3771, 16
        %v3775 = vshrl.u32 %v3771, 16
        %v3776 = vshll.u32 %v3772, 16
        %v3777 = vshrl.u32 %v3772, 16
        %vm3778 = vc.u32 %v3770, %v3774
        %v3779 = vsel %vm3778, 1, 0
        %v3780 = vadd.s32 %v3770, %v3774
        %v3781 = vadd.s32 %v3773, %v3779
        %vm3782 = vc.u32 %v3780, %v3776
        %v3783 = vsel %vm3782, 1, 0
        %v3784 = vadd.s32 %v3780, %v3776
        %v3785 = vadd.s32 %v3781, %v3783
        %v3786 = vadd.s32 %v3785, %v3775
        %v3787 = vadd.s32 %v3786, %v3777
        %v3788 = vmul.u32 %v3743, %v3734
        %v3789 = vadd.s32 %v3765, %v3784
        %vm3790 = vc.u32 %v3765, %v3784
        %v3791 = vadd.s32 %v3787, 1
        %v3792 = vsel %vm3790, %v3791, %v3787
        %v3793 = vadd.s32 %v3788, %v3792
        %v3794 = vadd.s32 %v3793, 536870912
        %v3795 = vshrl.u32 %v3794, 30
        %v3796 = vshll.u32 %v3795, 30
        %v3797 = vsub.s32 %v3793, %v3796
        %vm3798 = vcmp.lt.s32.totalorder %v3797, 0
        %v3799 = vsub.s32 0, %v3797
        %v3800 = vsel %vm3798, %v3799, %v3797
        %v3801 = vclz %v3800
        %v3802 = vsub.s32 %v3801, 2
        %vm3803 = vcmp.gt.s32.totalorder 0, %v3802
        %v3804 = vsel %vm3803, 0, %v3802
        %v3805 = vsub.s32 32, %v3804
        %v3806 = vshll.u32 %v3797, %v3804
        %v3807 = vshrl.u32 %v3789, %v3805
        %v3808 = vor.u32 %v3806, %v3807
        %v3809 = vsub.s32 4294967266, %v3804
        %v3810 = vadd.s32 %v3809, 127
        %v3811 = vshll.u32 %v3810, 23
        %v3812 = vor.u32 4788187, %v3811
        %v3813 = vand.u32 2147483647, %v3812
        %v3815 = vcvt.s32.f32 %v3808
        %v3816 = vmul.f32 %v3815, %v3813
        %v3817 = vxor.u32 %v3816, 2147483648
        %v3818 = vsel %vm3697, %v3817, %v3816
        %v3819 = vsub.s32 4, %v3795
        %v3820 = vsel %vm3697, %v3819, %v3795
        %v3821 = vsel %vm3696, %v583, %v3818
        %v3822 = vsel %vm3696, 0, %v3820
        %v3823 = vmul.f32 %v3821, %v3821
        %v3824 = vmul.f32 %v3823, -0.001358992
        %v3825 = vadd.f32 %v3824, 0.041655596
        %v3826 = vmul.f32 %v3823, %v3825
        %v3827 = vadd.f32 %v3826, -0.4999988
        %v3828 = vmul.f32 %v3823, %v3827
        %v3829 = vadd.f32 1.0, %v3828
        %v3830 = vmul.f32 %v3821, %v3821
        %v3831 = vmul.f32 %v3830, -0.00019511016
        %v3832 = vadd.f32 %v3831, 0.008332121
        %v3833 = vmul.f32 %v3830, %v3832
        %v3834 = vadd.f32 %v3833, -0.16666654
        %v3835 = vmul.f32 %v3830, %v3834
        %v3836 = vadd.f32 %v3835, 1.0
        %v3837 = vmul.f32 %v3836, %v3821
        %vm3838 = vweird.f32 %v583
        %v3839 = vadd.s32 %v3822, 3
        %v3840 = vand.u32 %v3839, 3
        %vm3841 = vcmp.lt.s32.totalorder %v3840, 2
        %vm3842 = vcmp.eq.s32.totalorder %v3840, 0
        %v3843 = vxor.u32 %v3837, 2147483648
        %v3844 = vsel %vm3842, %v3829, %v3843
        %vm3845 = vcmp.eq.s32.totalorder %v3840, 2
        %v3846 = vxor.u32 %v3829, 2147483648
        %v3847 = vsel %vm3845, %v3846, %v3837
        %v3848 = vsel %vm3841, %v3844, %v3847
        %v3849 = vsel %vm3838, nan, %v3848
        %v3850 = vand.u32 2147483647, %v584
        %vm3851 = vcmp.le.f32.partialorder %v3850, 0.7853982
        %vm3852 = vcmp.lt.s32.totalorder %v584, 0
        %v3853 = vand.u32 %v584, 2139095040
        %v3854 = vshrl.u32 %v3853, 23
        %v3855 = vsub.s32 %v3854, 127
        %v3856 = vand.u32 2147483647, %v584
        %v3857 = vand.u32 %v3856, 8388607
        %v3858 = vor.u32 %v3857, 8388608
        %v3859 = vsub.s32 0, %v3858
        %v3860 = vadd.s32 %v3855, 1
        %vm3861 = vcmp.gt.s32.totalorder %v3860, 0
        %v3862 = vsel %vm3861, %v3860, 0
        %v3863 = vshrl.u32 %v3862, 5
        %v3864 = vand.u32 %v3862, 31
        %v3865 = vsub.s32 32, %v3864
        %v3866 = vshrl.u32 683565275, %v3865
        %v3867 = vshll.u32 683565275, %v3864
        %v3868 = vshrl.u32 2475754826, %v3865
        %v3869 = vor.u32 %v3867, %v3868
        %v3870 = vshll.u32 2475754826, %v3864
        %v3871 = vshrl.u32 2131351028, %v3865
        %v3872 = vor.u32 %v3870, %v3871
        %v3873 = vshll.u32 2131351028, %v3864
        %v3874 = vshrl.u32 2102212464, %v3865
        %v3875 = vor.u32 %v3873, %v3874
        %v3876 = vshll.u32 2102212464, %v3864
        %v3877 = vshrl.u32 920167782, %v3865
        %v3878 = vor.u32 %v3876, %v3877
        %v3879 = vshll.u32 920167782, %v3864
        %v3880 = vshrl.u32 1326507024, %v3865
        %v3881 = vor.u32 %v3879, %v3880
        %vm3882 = vcmp.lt.s32.totalorder %v3863, 1
        %vm3883 = vcmp.lt.s32.totalorder %v3863, 2
        %vm3884 = vcmp.lt.s32.totalorder %v3863, 3
        %vm3885 = vcmp.lt.s32.totalorder %v3863, 4
        %v3886 = vsel %vm3882, %v3866, %v3869
        %v3887 = vsel %vm3885, %v3875, 2102212464
        %v3888 = vsel %vm3884, %v3872, %v3887
        %v3889 = vsel %vm3883, %v3886, %v3888
        %v3890 = vsel %vm3882, %v3869, %v3872
        %v3891 = vsel %vm3885, %v3878, 920167782
        %v3892 = vsel %vm3884, %v3875, %v3891
        %v3893 = vsel %vm3883, %v3890, %v3892
        %v3894 = vsel %vm3882, %v3872, %v3875
        %v3895 = vsel %vm3885, %v3881, 1326507024
        %v3896 = vsel %vm3884, %v3878, %v3895
        %v3897 = vsel %vm3883, %v3894, %v3896
        %v3898 = vshll.u32 %v3858, 8
        %v3899 = vand.u32 %v3898, 65535
        %v3900 = vshrl.u32 %v3898, 16
        %v3901 = vand.u32 %v3897, 65535
        %v3902 = vshrl.u32 %v3897, 16
        %v3903 = vmul.u32 %v3899, %v3901
        %v3904 = vmul.u32 %v3899, %v3902
        %v3905 = vmul.u32 %v3900, %v3901
        %v3906 = vmul.u32 %v3900, %v3902
        %v3907 = vshll.u32 %v3904, 16
        %v3908 = vshrl.u32 %v3904, 16
        %v3909 = vshll.u32 %v3905, 16
        %v3910 = vshrl.u32 %v3905, 16
        %vm3911 = vc.u32 %v3903, %v3907
        %v3912 = vsel %vm3911, 1, 0
        %v3913 = vadd.s32 %v3903, %v3907
        %v3914 = vadd.s32 %v3906, %v3912
        %vm3915 = vc.u32 %v3913, %v3909
        %v3916 = vsel %vm3915, 1, 0
        %v3917 = vadd.s32 %v3913, %v3909
        %v3918 = vadd.s32 %v3914, %v3916
        %v3919 = vadd.s32 %v3918, %v3908
        %v3920 = vadd.s32 %v3919, %v3910
        %v3921 = vand.u32 %v3898, 65535
        %v3922 = vshrl.u32 %v3898, 16
        %v3923 = vand.u32 %v3893, 65535
        %v3924 = vshrl.u32 %v3893, 16
        %v3925 = vmul.u32 %v3921, %v3923
        %v3926 = vmul.u32 %v3921, %v3924
        %v3927 = vmul.u32 %v3922, %v3923
        %v3928 = vmul.u32 %v3922, %v3924
        %v3929 = vshll.u32 %v3926, 16
        %v3930 = vshrl.u32 %v3926, 16
        %v3931 = vshll.u32 %v3927, 16
        %v3932 = vshrl.u32 %v3927, 16
        %vm3933 = vc.u32 %v3925, %v3929
        %v3934 = vsel %vm3933, 1, 0
        %v3935 = vadd.s32 %v3925, %v3929
        %v3936 = vadd.s32 %v3928, %v3934
        %vm3937 = vc.u32 %v3935, %v3931
        %v3938 = vsel %vm3937, 1, 0
        %v3939 = vadd.s32 %v3935, %v3931
        %v3940 = vadd.s32 %v3936, %v3938
        %v3941 = vadd.s32 %v3940, %v3930
        %v3942 = vadd.s32 %v3941, %v3932
        %v3943 = vmul.u32 %v3898, %v3889
        %v3944 = vadd.s32 %v3920, %v3939
        %vm3945 = vc.u32 %v3920, %v3939
        %v3946 = vadd.s32 %v3942, 1
        %v3947 = vsel %vm3945, %v3946, %v3942
        %v3948 = vadd.s32 %v3943, %v3947
        %v3949 = vadd.s32 %v3948, 536870912
        %v3950 = vshrl.u32 %v3949, 30
        %v3951 = vshll.u32 %v3950, 30
        %v3952 = vsub.s32 %v3948, %v3951
        %vm3953 = vcmp.lt.s32.totalorder %v3952, 0
        %v3954 = vsub.s32 0, %v3952
        %v3955 = vsel %vm3953, %v3954, %v3952
        %v3956 = vclz %v3955
        %v3957 = vsub.s32 %v3956, 2
        %vm3958 = vcmp.gt.s32.totalorder 0, %v3957
        %v3959 = vsel %vm3958, 0, %v3957
        %v3960 = vsub.s32 32, %v3959
        %v3961 = vshll.u32 %v3952, %v3959
        %v3962 = vshrl.u32 %v3944, %v3960
        %v3963 = vor.u32 %v3961, %v3962
        %v3964 = vsub.s32 4294967266, %v3959
        %v3965 = vadd.s32 %v3964, 127
        %v3966 = vshll.u32 %v3965, 23
        %v3967 = vor.u32 4788187, %v3966
        %v3968 = vand.u32 2147483647, %v3967
        %v3970 = vcvt.s32.f32 %v3963
        %v3971 = vmul.f32 %v3970, %v3968
        %v3972 = vxor.u32 %v3971, 2147483648
        %v3973 = vsel %vm3852, %v3972, %v3971
        %v3974 = vsub.s32 4, %v3950
        %v3975 = vsel %vm3852, %v3974, %v3950
        %v3976 = vsel %vm3851, %v584, %v3973
        %v3977 = vsel %vm3851, 0, %v3975
        %v3978 = vmul.f32 %v3976, %v3976
        %v3979 = vmul.f32 %v3978, -0.001358992
        %v3980 = vadd.f32 %v3979, 0.041655596
        %v3981 = vmul.f32 %v3978, %v3980
        %v3982 = vadd.f32 %v3981, -0.4999988
        %v3983 = vmul.f32 %v3978, %v3982
        %v3984 = vadd.f32 1.0, %v3983
        %v3985 = vmul.f32 %v3976, %v3976
        %v3986 = vmul.f32 %v3985, -0.00019511016
        %v3987 = vadd.f32 %v3986, 0.008332121
        %v3988 = vmul.f32 %v3985, %v3987
        %v3989 = vadd.f32 %v3988, -0.16666654
        %v3990 = vmul.f32 %v3985, %v3989
        %v3991 = vadd.f32 %v3990, 1.0
        %v3992 = vmul.f32 %v3991, %v3976
        %vm3993 = vweird.f32 %v584
        %v3994 = vadd.s32 %v3977, 3
        %v3995 = vand.u32 %v3994, 3
        %vm3996 = vcmp.lt.s32.totalorder %v3995, 2
        %vm3997 = vcmp.eq.s32.totalorder %v3995, 0
        %v3998 = vxor.u32 %v3992, 2147483648
        %v3999 = vsel %vm3997, %v3984, %v3998
        %vm4000 = vcmp.eq.s32.totalorder %v3995, 2
        %v4001 = vxor.u32 %v3984, 2147483648
        %v4002 = vsel %vm4000, %v4001, %v3992
        %v4003 = vsel %vm3996, %v3999, %v4002
        %v4004 = vsel %vm3993, nan, %v4003
        %v4005 = vand.u32 2147483647, %v585
        %vm4006 = vcmp.le.f32.partialorder %v4005, 0.7853982
        %vm4007 = vcmp.lt.s32.totalorder %v585, 0
        %v4008 = vand.u32 %v585, 2139095040
        %v4009 = vshrl.u32 %v4008, 23
        %v4010 = vsub.s32 %v4009, 127
        %v4011 = vand.u32 2147483647, %v585
        %v4012 = vand.u32 %v4011, 8388607
        %v4013 = vor.u32 %v4012, 8388608
        %v4014 = vsub.s32 0, %v4013
        %v4015 = vadd.s32 %v4010, 1
        %vm4016 = vcmp.gt.s32.totalorder %v4015, 0
        %v4017 = vsel %vm4016, %v4015, 0
        %v4018 = vshrl.u32 %v4017, 5
        %v4019 = vand.u32 %v4017, 31
        %v4020 = vsub.s32 32, %v4019
        %v4021 = vshrl.u32 683565275, %v4020
        %v4022 = vshll.u32 683565275, %v4019
        %v4023 = vshrl.u32 2475754826, %v4020
        %v4024 = vor.u32 %v4022, %v4023
        %v4025 = vshll.u32 2475754826, %v4019
        %v4026 = vshrl.u32 2131351028, %v4020
        %v4027 = vor.u32 %v4025, %v4026
        %v4028 = vshll.u32 2131351028, %v4019
        %v4029 = vshrl.u32 2102212464, %v4020
        %v4030 = vor.u32 %v4028, %v4029
        %v4031 = vshll.u32 2102212464, %v4019
        %v4032 = vshrl.u32 920167782, %v4020
        %v4033 = vor.u32 %v4031, %v4032
        %v4034 = vshll.u32 920167782, %v4019
        %v4035 = vshrl.u32 1326507024, %v4020
        %v4036 = vor.u32 %v4034, %v4035
        %vm4037 = vcmp.lt.s32.totalorder %v4018, 1
        %vm4038 = vcmp.lt.s32.totalorder %v4018, 2
        %vm4039 = vcmp.lt.s32.totalorder %v4018, 3
        %vm4040 = vcmp.lt.s32.totalorder %v4018, 4
        %v4041 = vsel %vm4037, %v4021, %v4024
        %v4042 = vsel %vm4040, %v4030, 2102212464
        %v4043 = vsel %vm4039, %v4027, %v4042
        %v4044 = vsel %vm4038, %v4041, %v4043
        %v4045 = vsel %vm4037, %v4024, %v4027
        %v4046 = vsel %vm4040, %v4033, 920167782
        %v4047 = vsel %vm4039, %v4030, %v4046
        %v4048 = vsel %vm4038, %v4045, %v4047
        %v4049 = vsel %vm4037, %v4027, %v4030
        %v4050 = vsel %vm4040, %v4036, 1326507024
        %v4051 = vsel %vm4039, %v4033, %v4050
        %v4052 = vsel %vm4038, %v4049, %v4051
        %v4053 = vshll.u32 %v4013, 8
        %v4054 = vand.u32 %v4053, 65535
        %v4055 = vshrl.u32 %v4053, 16
        %v4056 = vand.u32 %v4052, 65535
        %v4057 = vshrl.u32 %v4052, 16
        %v4058 = vmul.u32 %v4054, %v4056
        %v4059 = vmul.u32 %v4054, %v4057
        %v4060 = vmul.u32 %v4055, %v4056
        %v4061 = vmul.u32 %v4055, %v4057
        %v4062 = vshll.u32 %v4059, 16
        %v4063 = vshrl.u32 %v4059, 16
        %v4064 = vshll.u32 %v4060, 16
        %v4065 = vshrl.u32 %v4060, 16
        %vm4066 = vc.u32 %v4058, %v4062
        %v4067 = vsel %vm4066, 1, 0
        %v4068 = vadd.s32 %v4058, %v4062
        %v4069 = vadd.s32 %v4061, %v4067
        %vm4070 = vc.u32 %v4068, %v4064
        %v4071 = vsel %vm4070, 1, 0
        %v4072 = vadd.s32 %v4068, %v4064
        %v4073 = vadd.s32 %v4069, %v4071
        %v4074 = vadd.s32 %v4073, %v4063
        %v4075 = vadd.s32 %v4074, %v4065
        %v4076 = vand.u32 %v4053, 65535
        %v4077 = vshrl.u32 %v4053, 16
        %v4078 = vand.u32 %v4048, 65535
        %v4079 = vshrl.u32 %v4048, 16
        %v4080 = vmul.u32 %v4076, %v4078
        %v4081 = vmul.u32 %v4076, %v4079
        %v4082 = vmul.u32 %v4077, %v4078
        %v4083 = vmul.u32 %v4077, %v4079
        %v4084 = vshll.u32 %v4081, 16
        %v4085 = vshrl.u32 %v4081, 16
        %v4086 = vshll.u32 %v4082, 16
        %v4087 = vshrl.u32 %v4082, 16
        %vm4088 = vc.u32 %v4080, %v4084
        %v4089 = vsel %vm4088, 1, 0
        %v4090 = vadd.s32 %v4080, %v4084
        %v4091 = vadd.s32 %v4083, %v4089
        %vm4092 = vc.u32 %v4090, %v4086
        %v4093 = vsel %vm4092, 1, 0
        %v4094 = vadd.s32 %v4090, %v4086
        %v4095 = vadd.s32 %v4091, %v4093
        %v4096 = vadd.s32 %v4095, %v4085
        %v4097 = vadd.s32 %v4096, %v4087
        %v4098 = vmul.u32 %v4053, %v4044
        %v4099 = vadd.s32 %v4075, %v4094
        %vm4100 = vc.u32 %v4075, %v4094
        %v4101 = vadd.s32 %v4097, 1
        %v4102 = vsel %vm4100, %v4101, %v4097
        %v4103 = vadd.s32 %v4098, %v4102
        %v4104 = vadd.s32 %v4103, 536870912
        %v4105 = vshrl.u32 %v4104, 30
        %v4106 = vshll.u32 %v4105, 30
        %v4107 = vsub.s32 %v4103, %v4106
        %vm4108 = vcmp.lt.s32.totalorder %v4107, 0
        %v4109 = vsub.s32 0, %v4107
        %v4110 = vsel %vm4108, %v4109, %v4107
        %v4111 = vclz %v4110
        %v4112 = vsub.s32 %v4111, 2
        %vm4113 = vcmp.gt.s32.totalorder 0, %v4112
        %v4114 = vsel %vm4113, 0, %v4112
        %v4115 = vsub.s32 32, %v4114
        %v4116 = vshll.u32 %v4107, %v4114
        %v4117 = vshrl.u32 %v4099, %v4115
        %v4118 = vor.u32 %v4116, %v4117
        %v4119 = vsub.s32 4294967266, %v4114
        %v4120 = vadd.s32 %v4119, 127
        %v4121 = vshll.u32 %v4120, 23
        %v4122 = vor.u32 4788187, %v4121
        %v4123 = vand.u32 2147483647, %v4122
        %v4125 = vcvt.s32.f32 %v4118
        %v4126 = vmul.f32 %v4125, %v4123
        %v4127 = vxor.u32 %v4126, 2147483648
        %v4128 = vsel %vm4007, %v4127, %v4126
        %v4129 = vsub.s32 4, %v4105
        %v4130 = vsel %vm4007, %v4129, %v4105
        %v4131 = vsel %vm4006, %v585, %v4128
        %v4132 = vsel %vm4006, 0, %v4130
        %v4133 = vmul.f32 %v4131, %v4131
        %v4134 = vmul.f32 %v4133, -0.001358992
        %v4135 = vadd.f32 %v4134, 0.041655596
        %v4136 = vmul.f32 %v4133, %v4135
        %v4137 = vadd.f32 %v4136, -0.4999988
        %v4138 = vmul.f32 %v4133, %v4137
        %v4139 = vadd.f32 1.0, %v4138
        %v4140 = vmul.f32 %v4131, %v4131
        %v4141 = vmul.f32 %v4140, -0.00019511016
        %v4142 = vadd.f32 %v4141, 0.008332121
        %v4143 = vmul.f32 %v4140, %v4142
        %v4144 = vadd.f32 %v4143, -0.16666654
        %v4145 = vmul.f32 %v4140, %v4144
        %v4146 = vadd.f32 %v4145, 1.0
        %v4147 = vmul.f32 %v4146, %v4131
        %vm4148 = vweird.f32 %v585
        %v4149 = vadd.s32 %v4132, 3
        %v4150 = vand.u32 %v4149, 3
        %vm4151 = vcmp.lt.s32.totalorder %v4150, 2
        %vm4152 = vcmp.eq.s32.totalorder %v4150, 0
        %v4153 = vxor.u32 %v4147, 2147483648
        %v4154 = vsel %vm4152, %v4139, %v4153
        %vm4155 = vcmp.eq.s32.totalorder %v4150, 2
        %v4156 = vxor.u32 %v4139, 2147483648
        %v4157 = vsel %vm4155, %v4156, %v4147
        %v4158 = vsel %vm4151, %v4154, %v4157
        %v4159 = vsel %vm4148, nan, %v4158
        %v4160 = vand.u32 2147483647, %v586
        %vm4161 = vcmp.le.f32.partialorder %v4160, 0.7853982
        %vm4162 = vcmp.lt.s32.totalorder %v586, 0
        %v4163 = vand.u32 %v586, 2139095040
        %v4164 = vshrl.u32 %v4163, 23
        %v4165 = vsub.s32 %v4164, 127
        %v4166 = vand.u32 2147483647, %v586
        %v4167 = vand.u32 %v4166, 8388607
        %v4168 = vor.u32 %v4167, 8388608
        %v4169 = vsub.s32 0, %v4168
        %v4170 = vadd.s32 %v4165, 1
        %vm4171 = vcmp.gt.s32.totalorder %v4170, 0
        %v4172 = vsel %vm4171, %v4170, 0
        %v4173 = vshrl.u32 %v4172, 5
        %v4174 = vand.u32 %v4172, 31
        %v4175 = vsub.s32 32, %v4174
        %v4176 = vshrl.u32 683565275, %v4175
        %v4177 = vshll.u32 683565275, %v4174
        %v4178 = vshrl.u32 2475754826, %v4175
        %v4179 = vor.u32 %v4177, %v4178
        %v4180 = vshll.u32 2475754826, %v4174
        %v4181 = vshrl.u32 2131351028, %v4175
        %v4182 = vor.u32 %v4180, %v4181
        %v4183 = vshll.u32 2131351028, %v4174
        %v4184 = vshrl.u32 2102212464, %v4175
        %v4185 = vor.u32 %v4183, %v4184
        %v4186 = vshll.u32 2102212464, %v4174
        %v4187 = vshrl.u32 920167782, %v4175
        %v4188 = vor.u32 %v4186, %v4187
        %v4189 = vshll.u32 920167782, %v4174
        %v4190 = vshrl.u32 1326507024, %v4175
        %v4191 = vor.u32 %v4189, %v4190
        %vm4192 = vcmp.lt.s32.totalorder %v4173, 1
        %vm4193 = vcmp.lt.s32.totalorder %v4173, 2
        %vm4194 = vcmp.lt.s32.totalorder %v4173, 3
        %vm4195 = vcmp.lt.s32.totalorder %v4173, 4
        %v4196 = vsel %vm4192, %v4176, %v4179
        %v4197 = vsel %vm4195, %v4185, 2102212464
        %v4198 = vsel %vm4194, %v4182, %v4197
        %v4199 = vsel %vm4193, %v4196, %v4198
        %v4200 = vsel %vm4192, %v4179, %v4182
        %v4201 = vsel %vm4195, %v4188, 920167782
        %v4202 = vsel %vm4194, %v4185, %v4201
        %v4203 = vsel %vm4193, %v4200, %v4202
        %v4204 = vsel %vm4192, %v4182, %v4185
        %v4205 = vsel %vm4195, %v4191, 1326507024
        %v4206 = vsel %vm4194, %v4188, %v4205
        %v4207 = vsel %vm4193, %v4204, %v4206
        %v4208 = vshll.u32 %v4168, 8
        %v4209 = vand.u32 %v4208, 65535
        %v4210 = vshrl.u32 %v4208, 16
        %v4211 = vand.u32 %v4207, 65535
        %v4212 = vshrl.u32 %v4207, 16
        %v4213 = vmul.u32 %v4209, %v4211
        %v4214 = vmul.u32 %v4209, %v4212
        %v4215 = vmul.u32 %v4210, %v4211
        %v4216 = vmul.u32 %v4210, %v4212
        %v4217 = vshll.u32 %v4214, 16
        %v4218 = vshrl.u32 %v4214, 16
        %v4219 = vshll.u32 %v4215, 16
        %v4220 = vshrl.u32 %v4215, 16
        %vm4221 = vc.u32 %v4213, %v4217
        %v4222 = vsel %vm4221, 1, 0
        %v4223 = vadd.s32 %v4213, %v4217
        %v4224 = vadd.s32 %v4216, %v4222
        %vm4225 = vc.u32 %v4223, %v4219
        %v4226 = vsel %vm4225, 1, 0
        %v4227 = vadd.s32 %v4223, %v4219
        %v4228 = vadd.s32 %v4224, %v4226
        %v4229 = vadd.s32 %v4228, %v4218
        %v4230 = vadd.s32 %v4229, %v4220
        %v4231 = vand.u32 %v4208, 65535
        %v4232 = vshrl.u32 %v4208, 16
        %v4233 = vand.u32 %v4203, 65535
        %v4234 = vshrl.u32 %v4203, 16
        %v4235 = vmul.u32 %v4231, %v4233
        %v4236 = vmul.u32 %v4231, %v4234
        %v4237 = vmul.u32 %v4232, %v4233
        %v4238 = vmul.u32 %v4232, %v4234
        %v4239 = vshll.u32 %v4236, 16
        %v4240 = vshrl.u32 %v4236, 16
        %v4241 = vshll.u32 %v4237, 16
        %v4242 = vshrl.u32 %v4237, 16
        %vm4243 = vc.u32 %v4235, %v4239
        %v4244 = vsel %vm4243, 1, 0
        %v4245 = vadd.s32 %v4235, %v4239
        %v4246 = vadd.s32 %v4238, %v4244
        %vm4247 = vc.u32 %v4245, %v4241
        %v4248 = vsel %vm4247, 1, 0
        %v4249 = vadd.s32 %v4245, %v4241
        %v4250 = vadd.s32 %v4246, %v4248
        %v4251 = vadd.s32 %v4250, %v4240
        %v4252 = vadd.s32 %v4251, %v4242
        %v4253 = vmul.u32 %v4208, %v4199
        %v4254 = vadd.s32 %v4230, %v4249
        %vm4255 = vc.u32 %v4230, %v4249
        %v4256 = vadd.s32 %v4252, 1
        %v4257 = vsel %vm4255, %v4256, %v4252
        %v4258 = vadd.s32 %v4253, %v4257
        %v4259 = vadd.s32 %v4258, 536870912
        %v4260 = vshrl.u32 %v4259, 30
        %v4261 = vshll.u32 %v4260, 30
        %v4262 = vsub.s32 %v4258, %v4261
        %vm4263 = vcmp.lt.s32.totalorder %v4262, 0
        %v4264 = vsub.s32 0, %v4262
        %v4265 = vsel %vm4263, %v4264, %v4262
        %v4266 = vclz %v4265
        %v4267 = vsub.s32 %v4266, 2
        %vm4268 = vcmp.gt.s32.totalorder 0, %v4267
        %v4269 = vsel %vm4268, 0, %v4267
        %v4270 = vsub.s32 32, %v4269
        %v4271 = vshll.u32 %v4262, %v4269
        %v4272 = vshrl.u32 %v4254, %v4270
        %v4273 = vor.u32 %v4271, %v4272
        %v4274 = vsub.s32 4294967266, %v4269
        %v4275 = vadd.s32 %v4274, 127
        %v4276 = vshll.u32 %v4275, 23
        %v4277 = vor.u32 4788187, %v4276
        %v4278 = vand.u32 2147483647, %v4277
        %v4280 = vcvt.s32.f32 %v4273
        %v4281 = vmul.f32 %v4280, %v4278
        %v4282 = vxor.u32 %v4281, 2147483648
        %v4283 = vsel %vm4162, %v4282, %v4281
        %v4284 = vsub.s32 4, %v4260
        %v4285 = vsel %vm4162, %v4284, %v4260
        %v4286 = vsel %vm4161, %v586, %v4283
        %v4287 = vsel %vm4161, 0, %v4285
        %v4288 = vmul.f32 %v4286, %v4286
        %v4289 = vmul.f32 %v4288, -0.001358992
        %v4290 = vadd.f32 %v4289, 0.041655596
        %v4291 = vmul.f32 %v4288, %v4290
        %v4292 = vadd.f32 %v4291, -0.4999988
        %v4293 = vmul.f32 %v4288, %v4292
        %v4294 = vadd.f32 1.0, %v4293
        %v4295 = vmul.f32 %v4286, %v4286
        %v4296 = vmul.f32 %v4295, -0.00019511016
        %v4297 = vadd.f32 %v4296, 0.008332121
        %v4298 = vmul.f32 %v4295, %v4297
        %v4299 = vadd.f32 %v4298, -0.16666654
        %v4300 = vmul.f32 %v4295, %v4299
        %v4301 = vadd.f32 %v4300, 1.0
        %v4302 = vmul.f32 %v4301, %v4286
        %vm4303 = vweird.f32 %v586
        %v4304 = vadd.s32 %v4287, 3
        %v4305 = vand.u32 %v4304, 3
        %vm4306 = vcmp.lt.s32.totalorder %v4305, 2
        %vm4307 = vcmp.eq.s32.totalorder %v4305, 0
        %v4308 = vxor.u32 %v4302, 2147483648
        %v4309 = vsel %vm4307, %v4294, %v4308
        %vm4310 = vcmp.eq.s32.totalorder %v4305, 2
        %v4311 = vxor.u32 %v4294, 2147483648
        %v4312 = vsel %vm4310, %v4311, %v4302
        %v4313 = vsel %vm4306, %v4309, %v4312
        %v4314 = vsel %vm4303, nan, %v4313
        %v4315 = vand.u32 2147483647, %v587
        %vm4316 = vcmp.le.f32.partialorder %v4315, 0.7853982
        %vm4317 = vcmp.lt.s32.totalorder %v587, 0
        %v4318 = vand.u32 %v587, 2139095040
        %v4319 = vshrl.u32 %v4318, 23
        %v4320 = vsub.s32 %v4319, 127
        %v4321 = vand.u32 2147483647, %v587
        %v4322 = vand.u32 %v4321, 8388607
        %v4323 = vor.u32 %v4322, 8388608
        %v4324 = vsub.s32 0, %v4323
        %v4325 = vadd.s32 %v4320, 1
        %vm4326 = vcmp.gt.s32.totalorder %v4325, 0
        %v4327 = vsel %vm4326, %v4325, 0
        %v4328 = vshrl.u32 %v4327, 5
        %v4329 = vand.u32 %v4327, 31
        %v4330 = vsub.s32 32, %v4329
        %v4331 = vshrl.u32 683565275, %v4330
        %v4332 = vshll.u32 683565275, %v4329
        %v4333 = vshrl.u32 2475754826, %v4330
        %v4334 = vor.u32 %v4332, %v4333
        %v4335 = vshll.u32 2475754826, %v4329
        %v4336 = vshrl.u32 2131351028, %v4330
        %v4337 = vor.u32 %v4335, %v4336
        %v4338 = vshll.u32 2131351028, %v4329
        %v4339 = vshrl.u32 2102212464, %v4330
        %v4340 = vor.u32 %v4338, %v4339
        %v4341 = vshll.u32 2102212464, %v4329
        %v4342 = vshrl.u32 920167782, %v4330
        %v4343 = vor.u32 %v4341, %v4342
        %v4344 = vshll.u32 920167782, %v4329
        %v4345 = vshrl.u32 1326507024, %v4330
        %v4346 = vor.u32 %v4344, %v4345
        %vm4347 = vcmp.lt.s32.totalorder %v4328, 1
        %vm4348 = vcmp.lt.s32.totalorder %v4328, 2
        %vm4349 = vcmp.lt.s32.totalorder %v4328, 3
        %vm4350 = vcmp.lt.s32.totalorder %v4328, 4
        %v4351 = vsel %vm4347, %v4331, %v4334
        %v4352 = vsel %vm4350, %v4340, 2102212464
        %v4353 = vsel %vm4349, %v4337, %v4352
        %v4354 = vsel %vm4348, %v4351, %v4353
        %v4355 = vsel %vm4347, %v4334, %v4337
        %v4356 = vsel %vm4350, %v4343, 920167782
        %v4357 = vsel %vm4349, %v4340, %v4356
        %v4358 = vsel %vm4348, %v4355, %v4357
        %v4359 = vsel %vm4347, %v4337, %v4340
        %v4360 = vsel %vm4350, %v4346, 1326507024
        %v4361 = vsel %vm4349, %v4343, %v4360
        %v4362 = vsel %vm4348, %v4359, %v4361
        %v4363 = vshll.u32 %v4323, 8
        %v4364 = vand.u32 %v4363, 65535
        %v4365 = vshrl.u32 %v4363, 16
        %v4366 = vand.u32 %v4362, 65535
        %v4367 = vshrl.u32 %v4362, 16
        %v4368 = vmul.u32 %v4364, %v4366
        %v4369 = vmul.u32 %v4364, %v4367
        %v4370 = vmul.u32 %v4365, %v4366
        %v4371 = vmul.u32 %v4365, %v4367
        %v4372 = vshll.u32 %v4369, 16
        %v4373 = vshrl.u32 %v4369, 16
        %v4374 = vshll.u32 %v4370, 16
        %v4375 = vshrl.u32 %v4370, 16
        %vm4376 = vc.u32 %v4368, %v4372
        %v4377 = vsel %vm4376, 1, 0
        %v4378 = vadd.s32 %v4368, %v4372
        %v4379 = vadd.s32 %v4371, %v4377
        %vm4380 = vc.u32 %v4378, %v4374
        %v4381 = vsel %vm4380, 1, 0
        %v4382 = vadd.s32 %v4378, %v4374
        %v4383 = vadd.s32 %v4379, %v4381
        %v4384 = vadd.s32 %v4383, %v4373
        %v4385 = vadd.s32 %v4384, %v4375
        %v4386 = vand.u32 %v4363, 65535
        %v4387 = vshrl.u32 %v4363, 16
        %v4388 = vand.u32 %v4358, 65535
        %v4389 = vshrl.u32 %v4358, 16
        %v4390 = vmul.u32 %v4386, %v4388
        %v4391 = vmul.u32 %v4386, %v4389
        %v4392 = vmul.u32 %v4387, %v4388
        %v4393 = vmul.u32 %v4387, %v4389
        %v4394 = vshll.u32 %v4391, 16
        %v4395 = vshrl.u32 %v4391, 16
        %v4396 = vshll.u32 %v4392, 16
        %v4397 = vshrl.u32 %v4392, 16
        %vm4398 = vc.u32 %v4390, %v4394
        %v4399 = vsel %vm4398, 1, 0
        %v4400 = vadd.s32 %v4390, %v4394
        %v4401 = vadd.s32 %v4393, %v4399
        %vm4402 = vc.u32 %v4400, %v4396
        %v4403 = vsel %vm4402, 1, 0
        %v4404 = vadd.s32 %v4400, %v4396
        %v4405 = vadd.s32 %v4401, %v4403
        %v4406 = vadd.s32 %v4405, %v4395
        %v4407 = vadd.s32 %v4406, %v4397
        %v4408 = vmul.u32 %v4363, %v4354
        %v4409 = vadd.s32 %v4385, %v4404
        %vm4410 = vc.u32 %v4385, %v4404
        %v4411 = vadd.s32 %v4407, 1
        %v4412 = vsel %vm4410, %v4411, %v4407
        %v4413 = vadd.s32 %v4408, %v4412
        %v4414 = vadd.s32 %v4413, 536870912
        %v4415 = vshrl.u32 %v4414, 30
        %v4416 = vshll.u32 %v4415, 30
        %v4417 = vsub.s32 %v4413, %v4416
        %vm4418 = vcmp.lt.s32.totalorder %v4417, 0
        %v4419 = vsub.s32 0, %v4417
        %v4420 = vsel %vm4418, %v4419, %v4417
        %v4421 = vclz %v4420
        %v4422 = vsub.s32 %v4421, 2
        %vm4423 = vcmp.gt.s32.totalorder 0, %v4422
        %v4424 = vsel %vm4423, 0, %v4422
        %v4425 = vsub.s32 32, %v4424
        %v4426 = vshll.u32 %v4417, %v4424
        %v4427 = vshrl.u32 %v4409, %v4425
        %v4428 = vor.u32 %v4426, %v4427
        %v4429 = vsub.s32 4294967266, %v4424
        %v4430 = vadd.s32 %v4429, 127
        %v4431 = vshll.u32 %v4430, 23
        %v4432 = vor.u32 4788187, %v4431
        %v4433 = vand.u32 2147483647, %v4432
        %v4435 = vcvt.s32.f32 %v4428
        %v4436 = vmul.f32 %v4435, %v4433
        %v4437 = vxor.u32 %v4436, 2147483648
        %v4438 = vsel %vm4317, %v4437, %v4436
        %v4439 = vsub.s32 4, %v4415
        %v4440 = vsel %vm4317, %v4439, %v4415
        %v4441 = vsel %vm4316, %v587, %v4438
        %v4442 = vsel %vm4316, 0, %v4440
        %v4443 = vmul.f32 %v4441, %v4441
        %v4444 = vmul.f32 %v4443, -0.001358992
        %v4445 = vadd.f32 %v4444, 0.041655596
        %v4446 = vmul.f32 %v4443, %v4445
        %v4447 = vadd.f32 %v4446, -0.4999988
        %v4448 = vmul.f32 %v4443, %v4447
        %v4449 = vadd.f32 1.0, %v4448
        %v4450 = vmul.f32 %v4441, %v4441
        %v4451 = vmul.f32 %v4450, -0.00019511016
        %v4452 = vadd.f32 %v4451, 0.008332121
        %v4453 = vmul.f32 %v4450, %v4452
        %v4454 = vadd.f32 %v4453, -0.16666654
        %v4455 = vmul.f32 %v4450, %v4454
        %v4456 = vadd.f32 %v4455, 1.0
        %v4457 = vmul.f32 %v4456, %v4441
        %vm4458 = vweird.f32 %v587
        %v4459 = vadd.s32 %v4442, 3
        %v4460 = vand.u32 %v4459, 3
        %vm4461 = vcmp.lt.s32.totalorder %v4460, 2
        %vm4462 = vcmp.eq.s32.totalorder %v4460, 0
        %v4463 = vxor.u32 %v4457, 2147483648
        %v4464 = vsel %vm4462, %v4449, %v4463
        %vm4465 = vcmp.eq.s32.totalorder %v4460, 2
        %v4466 = vxor.u32 %v4449, 2147483648
        %v4467 = vsel %vm4465, %v4466, %v4457
        %v4468 = vsel %vm4461, %v4464, %v4467
        %v4469 = vsel %vm4458, nan, %v4468
        %v4470 = vand.u32 2147483647, %v588
        %vm4471 = vcmp.le.f32.partialorder %v4470, 0.7853982
        %vm4472 = vcmp.lt.s32.totalorder %v588, 0
        %v4473 = vand.u32 %v588, 2139095040
        %v4474 = vshrl.u32 %v4473, 23
        %v4475 = vsub.s32 %v4474, 127
        %v4476 = vand.u32 2147483647, %v588
        %v4477 = vand.u32 %v4476, 8388607
        %v4478 = vor.u32 %v4477, 8388608
        %v4479 = vsub.s32 0, %v4478
        %v4480 = vadd.s32 %v4475, 1
        %vm4481 = vcmp.gt.s32.totalorder %v4480, 0
        %v4482 = vsel %vm4481, %v4480, 0
        %v4483 = vshrl.u32 %v4482, 5
        %v4484 = vand.u32 %v4482, 31
        %v4485 = vsub.s32 32, %v4484
        %v4486 = vshrl.u32 683565275, %v4485
        %v4487 = vshll.u32 683565275, %v4484
        %v4488 = vshrl.u32 2475754826, %v4485
        %v4489 = vor.u32 %v4487, %v4488
        %v4490 = vshll.u32 2475754826, %v4484
        %v4491 = vshrl.u32 2131351028, %v4485
        %v4492 = vor.u32 %v4490, %v4491
        %v4493 = vshll.u32 2131351028, %v4484
        %v4494 = vshrl.u32 2102212464, %v4485
        %v4495 = vor.u32 %v4493, %v4494
        %v4496 = vshll.u32 2102212464, %v4484
        %v4497 = vshrl.u32 920167782, %v4485
        %v4498 = vor.u32 %v4496, %v4497
        %v4499 = vshll.u32 920167782, %v4484
        %v4500 = vshrl.u32 1326507024, %v4485
        %v4501 = vor.u32 %v4499, %v4500
        %vm4502 = vcmp.lt.s32.totalorder %v4483, 1
        %vm4503 = vcmp.lt.s32.totalorder %v4483, 2
        %vm4504 = vcmp.lt.s32.totalorder %v4483, 3
        %vm4505 = vcmp.lt.s32.totalorder %v4483, 4
        %v4506 = vsel %vm4502, %v4486, %v4489
        %v4507 = vsel %vm4505, %v4495, 2102212464
        %v4508 = vsel %vm4504, %v4492, %v4507
        %v4509 = vsel %vm4503, %v4506, %v4508
        %v4510 = vsel %vm4502, %v4489, %v4492
        %v4511 = vsel %vm4505, %v4498, 920167782
        %v4512 = vsel %vm4504, %v4495, %v4511
        %v4513 = vsel %vm4503, %v4510, %v4512
        %v4514 = vsel %vm4502, %v4492, %v4495
        %v4515 = vsel %vm4505, %v4501, 1326507024
        %v4516 = vsel %vm4504, %v4498, %v4515
        %v4517 = vsel %vm4503, %v4514, %v4516
        %v4518 = vshll.u32 %v4478, 8
        %v4519 = vand.u32 %v4518, 65535
        %v4520 = vshrl.u32 %v4518, 16
        %v4521 = vand.u32 %v4517, 65535
        %v4522 = vshrl.u32 %v4517, 16
        %v4523 = vmul.u32 %v4519, %v4521
        %v4524 = vmul.u32 %v4519, %v4522
        %v4525 = vmul.u32 %v4520, %v4521
        %v4526 = vmul.u32 %v4520, %v4522
        %v4527 = vshll.u32 %v4524, 16
        %v4528 = vshrl.u32 %v4524, 16
        %v4529 = vshll.u32 %v4525, 16
        %v4530 = vshrl.u32 %v4525, 16
        %vm4531 = vc.u32 %v4523, %v4527
        %v4532 = vsel %vm4531, 1, 0
        %v4533 = vadd.s32 %v4523, %v4527
        %v4534 = vadd.s32 %v4526, %v4532
        %vm4535 = vc.u32 %v4533, %v4529
        %v4536 = vsel %vm4535, 1, 0
        %v4537 = vadd.s32 %v4533, %v4529
        %v4538 = vadd.s32 %v4534, %v4536
        %v4539 = vadd.s32 %v4538, %v4528
        %v4540 = vadd.s32 %v4539, %v4530
        %v4541 = vand.u32 %v4518, 65535
        %v4542 = vshrl.u32 %v4518, 16
        %v4543 = vand.u32 %v4513, 65535
        %v4544 = vshrl.u32 %v4513, 16
        %v4545 = vmul.u32 %v4541, %v4543
        %v4546 = vmul.u32 %v4541, %v4544
        %v4547 = vmul.u32 %v4542, %v4543
        %v4548 = vmul.u32 %v4542, %v4544
        %v4549 = vshll.u32 %v4546, 16
        %v4550 = vshrl.u32 %v4546, 16
        %v4551 = vshll.u32 %v4547, 16
        %v4552 = vshrl.u32 %v4547, 16
        %vm4553 = vc.u32 %v4545, %v4549
        %v4554 = vsel %vm4553, 1, 0
        %v4555 = vadd.s32 %v4545, %v4549
        %v4556 = vadd.s32 %v4548, %v4554
        %vm4557 = vc.u32 %v4555, %v4551
        %v4558 = vsel %vm4557, 1, 0
        %v4559 = vadd.s32 %v4555, %v4551
        %v4560 = vadd.s32 %v4556, %v4558
        %v4561 = vadd.s32 %v4560, %v4550
        %v4562 = vadd.s32 %v4561, %v4552
        %v4563 = vmul.u32 %v4518, %v4509
        %v4564 = vadd.s32 %v4540, %v4559
        %vm4565 = vc.u32 %v4540, %v4559
        %v4566 = vadd.s32 %v4562, 1
        %v4567 = vsel %vm4565, %v4566, %v4562
        %v4568 = vadd.s32 %v4563, %v4567
        %v4569 = vadd.s32 %v4568, 536870912
        %v4570 = vshrl.u32 %v4569, 30
        %v4571 = vshll.u32 %v4570, 30
        %v4572 = vsub.s32 %v4568, %v4571
        %vm4573 = vcmp.lt.s32.totalorder %v4572, 0
        %v4574 = vsub.s32 0, %v4572
        %v4575 = vsel %vm4573, %v4574, %v4572
        %v4576 = vclz %v4575
        %v4577 = vsub.s32 %v4576, 2
        %vm4578 = vcmp.gt.s32.totalorder 0, %v4577
        %v4579 = vsel %vm4578, 0, %v4577
        %v4580 = vsub.s32 32, %v4579
        %v4581 = vshll.u32 %v4572, %v4579
        %v4582 = vshrl.u32 %v4564, %v4580
        %v4583 = vor.u32 %v4581, %v4582
        %v4584 = vsub.s32 4294967266, %v4579
        %v4585 = vadd.s32 %v4584, 127
        %v4586 = vshll.u32 %v4585, 23
        %v4587 = vor.u32 4788187, %v4586
        %v4588 = vand.u32 2147483647, %v4587
        %v4590 = vcvt.s32.f32 %v4583
        %v4591 = vmul.f32 %v4590, %v4588
        %v4592 = vxor.u32 %v4591, 2147483648
        %v4593 = vsel %vm4472, %v4592, %v4591
        %v4594 = vsub.s32 4, %v4570
        %v4595 = vsel %vm4472, %v4594, %v4570
        %v4596 = vsel %vm4471, %v588, %v4593
        %v4597 = vsel %vm4471, 0, %v4595
        %v4598 = vmul.f32 %v4596, %v4596
        %v4599 = vmul.f32 %v4598, -0.001358992
        %v4600 = vadd.f32 %v4599, 0.041655596
        %v4601 = vmul.f32 %v4598, %v4600
        %v4602 = vadd.f32 %v4601, -0.4999988
        %v4603 = vmul.f32 %v4598, %v4602
        %v4604 = vadd.f32 1.0, %v4603
        %v4605 = vmul.f32 %v4596, %v4596
        %v4606 = vmul.f32 %v4605, -0.00019511016
        %v4607 = vadd.f32 %v4606, 0.008332121
        %v4608 = vmul.f32 %v4605, %v4607
        %v4609 = vadd.f32 %v4608, -0.16666654
        %v4610 = vmul.f32 %v4605, %v4609
        %v4611 = vadd.f32 %v4610, 1.0
        %v4612 = vmul.f32 %v4611, %v4596
        %vm4613 = vweird.f32 %v588
        %v4614 = vadd.s32 %v4597, 3
        %v4615 = vand.u32 %v4614, 3
        %vm4616 = vcmp.lt.s32.totalorder %v4615, 2
        %vm4617 = vcmp.eq.s32.totalorder %v4615, 0
        %v4618 = vxor.u32 %v4612, 2147483648
        %v4619 = vsel %vm4617, %v4604, %v4618
        %vm4620 = vcmp.eq.s32.totalorder %v4615, 2
        %v4621 = vxor.u32 %v4604, 2147483648
        %v4622 = vsel %vm4620, %v4621, %v4612
        %v4623 = vsel %vm4616, %v4619, %v4622
        %v4624 = vsel %vm4613, nan, %v4623
        %v4625 = vand.u32 2147483647, %v589
        %vm4626 = vcmp.le.f32.partialorder %v4625, 0.7853982
        %vm4627 = vcmp.lt.s32.totalorder %v589, 0
        %v4628 = vand.u32 %v589, 2139095040
        %v4629 = vshrl.u32 %v4628, 23
        %v4630 = vsub.s32 %v4629, 127
        %v4631 = vand.u32 2147483647, %v589
        %v4632 = vand.u32 %v4631, 8388607
        %v4633 = vor.u32 %v4632, 8388608
        %v4634 = vsub.s32 0, %v4633
        %v4635 = vadd.s32 %v4630, 1
        %vm4636 = vcmp.gt.s32.totalorder %v4635, 0
        %v4637 = vsel %vm4636, %v4635, 0
        %v4638 = vshrl.u32 %v4637, 5
        %v4639 = vand.u32 %v4637, 31
        %v4640 = vsub.s32 32, %v4639
        %v4641 = vshrl.u32 683565275, %v4640
        %v4642 = vshll.u32 683565275, %v4639
        %v4643 = vshrl.u32 2475754826, %v4640
        %v4644 = vor.u32 %v4642, %v4643
        %v4645 = vshll.u32 2475754826, %v4639
        %v4646 = vshrl.u32 2131351028, %v4640
        %v4647 = vor.u32 %v4645, %v4646
        %v4648 = vshll.u32 2131351028, %v4639
        %v4649 = vshrl.u32 2102212464, %v4640
        %v4650 = vor.u32 %v4648, %v4649
        %v4651 = vshll.u32 2102212464, %v4639
        %v4652 = vshrl.u32 920167782, %v4640
        %v4653 = vor.u32 %v4651, %v4652
        %v4654 = vshll.u32 920167782, %v4639
        %v4655 = vshrl.u32 1326507024, %v4640
        %v4656 = vor.u32 %v4654, %v4655
        %vm4657 = vcmp.lt.s32.totalorder %v4638, 1
        %vm4658 = vcmp.lt.s32.totalorder %v4638, 2
        %vm4659 = vcmp.lt.s32.totalorder %v4638, 3
        %vm4660 = vcmp.lt.s32.totalorder %v4638, 4
        %v4661 = vsel %vm4657, %v4641, %v4644
        %v4662 = vsel %vm4660, %v4650, 2102212464
        %v4663 = vsel %vm4659, %v4647, %v4662
        %v4664 = vsel %vm4658, %v4661, %v4663
        %v4665 = vsel %vm4657, %v4644, %v4647
        %v4666 = vsel %vm4660, %v4653, 920167782
        %v4667 = vsel %vm4659, %v4650, %v4666
        %v4668 = vsel %vm4658, %v4665, %v4667
        %v4669 = vsel %vm4657, %v4647, %v4650
        %v4670 = vsel %vm4660, %v4656, 1326507024
        %v4671 = vsel %vm4659, %v4653, %v4670
        %v4672 = vsel %vm4658, %v4669, %v4671
        %v4673 = vshll.u32 %v4633, 8
        %v4674 = vand.u32 %v4673, 65535
        %v4675 = vshrl.u32 %v4673, 16
        %v4676 = vand.u32 %v4672, 65535
        %v4677 = vshrl.u32 %v4672, 16
        %v4678 = vmul.u32 %v4674, %v4676
        %v4679 = vmul.u32 %v4674, %v4677
        %v4680 = vmul.u32 %v4675, %v4676
        %v4681 = vmul.u32 %v4675, %v4677
        %v4682 = vshll.u32 %v4679, 16
        %v4683 = vshrl.u32 %v4679, 16
        %v4684 = vshll.u32 %v4680, 16
        %v4685 = vshrl.u32 %v4680, 16
        %vm4686 = vc.u32 %v4678, %v4682
        %v4687 = vsel %vm4686, 1, 0
        %v4688 = vadd.s32 %v4678, %v4682
        %v4689 = vadd.s32 %v4681, %v4687
        %vm4690 = vc.u32 %v4688, %v4684
        %v4691 = vsel %vm4690, 1, 0
        %v4692 = vadd.s32 %v4688, %v4684
        %v4693 = vadd.s32 %v4689, %v4691
        %v4694 = vadd.s32 %v4693, %v4683
        %v4695 = vadd.s32 %v4694, %v4685
        %v4696 = vand.u32 %v4673, 65535
        %v4697 = vshrl.u32 %v4673, 16
        %v4698 = vand.u32 %v4668, 65535
        %v4699 = vshrl.u32 %v4668, 16
        %v4700 = vmul.u32 %v4696, %v4698
        %v4701 = vmul.u32 %v4696, %v4699
        %v4702 = vmul.u32 %v4697, %v4698
        %v4703 = vmul.u32 %v4697, %v4699
        %v4704 = vshll.u32 %v4701, 16
        %v4705 = vshrl.u32 %v4701, 16
        %v4706 = vshll.u32 %v4702, 16
        %v4707 = vshrl.u32 %v4702, 16
        %vm4708 = vc.u32 %v4700, %v4704
        %v4709 = vsel %vm4708, 1, 0
        %v4710 = vadd.s32 %v4700, %v4704
        %v4711 = vadd.s32 %v4703, %v4709
        %vm4712 = vc.u32 %v4710, %v4706
        %v4713 = vsel %vm4712, 1, 0
        %v4714 = vadd.s32 %v4710, %v4706
        %v4715 = vadd.s32 %v4711, %v4713
        %v4716 = vadd.s32 %v4715, %v4705
        %v4717 = vadd.s32 %v4716, %v4707
        %v4718 = vmul.u32 %v4673, %v4664
        %v4719 = vadd.s32 %v4695, %v4714
        %vm4720 = vc.u32 %v4695, %v4714
        %v4721 = vadd.s32 %v4717, 1
        %v4722 = vsel %vm4720, %v4721, %v4717
        %v4723 = vadd.s32 %v4718, %v4722
        %v4724 = vadd.s32 %v4723, 536870912
        %v4725 = vshrl.u32 %v4724, 30
        %v4726 = vshll.u32 %v4725, 30
        %v4727 = vsub.s32 %v4723, %v4726
        %vm4728 = vcmp.lt.s32.totalorder %v4727, 0
        %v4729 = vsub.s32 0, %v4727
        %v4730 = vsel %vm4728, %v4729, %v4727
        %v4731 = vclz %v4730
        %v4732 = vsub.s32 %v4731, 2
        %vm4733 = vcmp.gt.s32.totalorder 0, %v4732
        %v4734 = vsel %vm4733, 0, %v4732
        %v4735 = vsub.s32 32, %v4734
        %v4736 = vshll.u32 %v4727, %v4734
        %v4737 = vshrl.u32 %v4719, %v4735
        %v4738 = vor.u32 %v4736, %v4737
        %v4739 = vsub.s32 4294967266, %v4734
        %v4740 = vadd.s32 %v4739, 127
        %v4741 = vshll.u32 %v4740, 23
        %v4742 = vor.u32 4788187, %v4741
        %v4743 = vand.u32 2147483647, %v4742
        %v4745 = vcvt.s32.f32 %v4738
        %v4746 = vmul.f32 %v4745, %v4743
        %v4747 = vxor.u32 %v4746, 2147483648
        %v4748 = vsel %vm4627, %v4747, %v4746
        %v4749 = vsub.s32 4, %v4725
        %v4750 = vsel %vm4627, %v4749, %v4725
        %v4751 = vsel %vm4626, %v589, %v4748
        %v4752 = vsel %vm4626, 0, %v4750
        %v4753 = vmul.f32 %v4751, %v4751
        %v4754 = vmul.f32 %v4753, -0.001358992
        %v4755 = vadd.f32 %v4754, 0.041655596
        %v4756 = vmul.f32 %v4753, %v4755
        %v4757 = vadd.f32 %v4756, -0.4999988
        %v4758 = vmul.f32 %v4753, %v4757
        %v4759 = vadd.f32 1.0, %v4758
        %v4760 = vmul.f32 %v4751, %v4751
        %v4761 = vmul.f32 %v4760, -0.00019511016
        %v4762 = vadd.f32 %v4761, 0.008332121
        %v4763 = vmul.f32 %v4760, %v4762
        %v4764 = vadd.f32 %v4763, -0.16666654
        %v4765 = vmul.f32 %v4760, %v4764
        %v4766 = vadd.f32 %v4765, 1.0
        %v4767 = vmul.f32 %v4766, %v4751
        %vm4768 = vweird.f32 %v589
        %v4769 = vadd.s32 %v4752, 3
        %v4770 = vand.u32 %v4769, 3
        %vm4771 = vcmp.lt.s32.totalorder %v4770, 2
        %vm4772 = vcmp.eq.s32.totalorder %v4770, 0
        %v4773 = vxor.u32 %v4767, 2147483648
        %v4774 = vsel %vm4772, %v4759, %v4773
        %vm4775 = vcmp.eq.s32.totalorder %v4770, 2
        %v4776 = vxor.u32 %v4759, 2147483648
        %v4777 = vsel %vm4775, %v4776, %v4767
        %v4778 = vsel %vm4771, %v4774, %v4777
        %v4779 = vsel %vm4768, nan, %v4778
        %v4780 = vand.u32 2147483647, %v590
        %vm4781 = vcmp.le.f32.partialorder %v4780, 0.7853982
        %vm4782 = vcmp.lt.s32.totalorder %v590, 0
        %v4783 = vand.u32 %v590, 2139095040
        %v4784 = vshrl.u32 %v4783, 23
        %v4785 = vsub.s32 %v4784, 127
        %v4786 = vand.u32 2147483647, %v590
        %v4787 = vand.u32 %v4786, 8388607
        %v4788 = vor.u32 %v4787, 8388608
        %v4789 = vsub.s32 0, %v4788
        %v4790 = vadd.s32 %v4785, 1
        %vm4791 = vcmp.gt.s32.totalorder %v4790, 0
        %v4792 = vsel %vm4791, %v4790, 0
        %v4793 = vshrl.u32 %v4792, 5
        %v4794 = vand.u32 %v4792, 31
        %v4795 = vsub.s32 32, %v4794
        %v4796 = vshrl.u32 683565275, %v4795
        %v4797 = vshll.u32 683565275, %v4794
        %v4798 = vshrl.u32 2475754826, %v4795
        %v4799 = vor.u32 %v4797, %v4798
        %v4800 = vshll.u32 2475754826, %v4794
        %v4801 = vshrl.u32 2131351028, %v4795
        %v4802 = vor.u32 %v4800, %v4801
        %v4803 = vshll.u32 2131351028, %v4794
        %v4804 = vshrl.u32 2102212464, %v4795
        %v4805 = vor.u32 %v4803, %v4804
        %v4806 = vshll.u32 2102212464, %v4794
        %v4807 = vshrl.u32 920167782, %v4795
        %v4808 = vor.u32 %v4806, %v4807
        %v4809 = vshll.u32 920167782, %v4794
        %v4810 = vshrl.u32 1326507024, %v4795
        %v4811 = vor.u32 %v4809, %v4810
        %vm4812 = vcmp.lt.s32.totalorder %v4793, 1
        %vm4813 = vcmp.lt.s32.totalorder %v4793, 2
        %vm4814 = vcmp.lt.s32.totalorder %v4793, 3
        %vm4815 = vcmp.lt.s32.totalorder %v4793, 4
        %v4816 = vsel %vm4812, %v4796, %v4799
        %v4817 = vsel %vm4815, %v4805, 2102212464
        %v4818 = vsel %vm4814, %v4802, %v4817
        %v4819 = vsel %vm4813, %v4816, %v4818
        %v4820 = vsel %vm4812, %v4799, %v4802
        %v4821 = vsel %vm4815, %v4808, 920167782
        %v4822 = vsel %vm4814, %v4805, %v4821
        %v4823 = vsel %vm4813, %v4820, %v4822
        %v4824 = vsel %vm4812, %v4802, %v4805
        %v4825 = vsel %vm4815, %v4811, 1326507024
        %v4826 = vsel %vm4814, %v4808, %v4825
        %v4827 = vsel %vm4813, %v4824, %v4826
        %v4828 = vshll.u32 %v4788, 8
        %v4829 = vand.u32 %v4828, 65535
        %v4830 = vshrl.u32 %v4828, 16
        %v4831 = vand.u32 %v4827, 65535
        %v4832 = vshrl.u32 %v4827, 16
        %v4833 = vmul.u32 %v4829, %v4831
        %v4834 = vmul.u32 %v4829, %v4832
        %v4835 = vmul.u32 %v4830, %v4831
        %v4836 = vmul.u32 %v4830, %v4832
        %v4837 = vshll.u32 %v4834, 16
        %v4838 = vshrl.u32 %v4834, 16
        %v4839 = vshll.u32 %v4835, 16
        %v4840 = vshrl.u32 %v4835, 16
        %vm4841 = vc.u32 %v4833, %v4837
        %v4842 = vsel %vm4841, 1, 0
        %v4843 = vadd.s32 %v4833, %v4837
        %v4844 = vadd.s32 %v4836, %v4842
        %vm4845 = vc.u32 %v4843, %v4839
        %v4846 = vsel %vm4845, 1, 0
        %v4847 = vadd.s32 %v4843, %v4839
        %v4848 = vadd.s32 %v4844, %v4846
        %v4849 = vadd.s32 %v4848, %v4838
        %v4850 = vadd.s32 %v4849, %v4840
        %v4851 = vand.u32 %v4828, 65535
        %v4852 = vshrl.u32 %v4828, 16
        %v4853 = vand.u32 %v4823, 65535
        %v4854 = vshrl.u32 %v4823, 16
        %v4855 = vmul.u32 %v4851, %v4853
        %v4856 = vmul.u32 %v4851, %v4854
        %v4857 = vmul.u32 %v4852, %v4853
        %v4858 = vmul.u32 %v4852, %v4854
        %v4859 = vshll.u32 %v4856, 16
        %v4860 = vshrl.u32 %v4856, 16
        %v4861 = vshll.u32 %v4857, 16
        %v4862 = vshrl.u32 %v4857, 16
        %vm4863 = vc.u32 %v4855, %v4859
        %v4864 = vsel %vm4863, 1, 0
        %v4865 = vadd.s32 %v4855, %v4859
        %v4866 = vadd.s32 %v4858, %v4864
        %vm4867 = vc.u32 %v4865, %v4861
        %v4868 = vsel %vm4867, 1, 0
        %v4869 = vadd.s32 %v4865, %v4861
        %v4870 = vadd.s32 %v4866, %v4868
        %v4871 = vadd.s32 %v4870, %v4860
        %v4872 = vadd.s32 %v4871, %v4862
        %v4873 = vmul.u32 %v4828, %v4819
        %v4874 = vadd.s32 %v4850, %v4869
        %vm4875 = vc.u32 %v4850, %v4869
        %v4876 = vadd.s32 %v4872, 1
        %v4877 = vsel %vm4875, %v4876, %v4872
        %v4878 = vadd.s32 %v4873, %v4877
        %v4879 = vadd.s32 %v4878, 536870912
        %v4880 = vshrl.u32 %v4879, 30
        %v4881 = vshll.u32 %v4880, 30
        %v4882 = vsub.s32 %v4878, %v4881
        %vm4883 = vcmp.lt.s32.totalorder %v4882, 0
        %v4884 = vsub.s32 0, %v4882
        %v4885 = vsel %vm4883, %v4884, %v4882
        %v4886 = vclz %v4885
        %v4887 = vsub.s32 %v4886, 2
        %vm4888 = vcmp.gt.s32.totalorder 0, %v4887
        %v4889 = vsel %vm4888, 0, %v4887
        %v4890 = vsub.s32 32, %v4889
        %v4891 = vshll.u32 %v4882, %v4889
        %v4892 = vshrl.u32 %v4874, %v4890
        %v4893 = vor.u32 %v4891, %v4892
        %v4894 = vsub.s32 4294967266, %v4889
        %v4895 = vadd.s32 %v4894, 127
        %v4896 = vshll.u32 %v4895, 23
        %v4897 = vor.u32 4788187, %v4896
        %v4898 = vand.u32 2147483647, %v4897
        %v4900 = vcvt.s32.f32 %v4893
        %v4901 = vmul.f32 %v4900, %v4898
        %v4902 = vxor.u32 %v4901, 2147483648
        %v4903 = vsel %vm4782, %v4902, %v4901
        %v4904 = vsub.s32 4, %v4880
        %v4905 = vsel %vm4782, %v4904, %v4880
        %v4906 = vsel %vm4781, %v590, %v4903
        %v4907 = vsel %vm4781, 0, %v4905
        %v4908 = vmul.f32 %v4906, %v4906
        %v4909 = vmul.f32 %v4908, -0.001358992
        %v4910 = vadd.f32 %v4909, 0.041655596
        %v4911 = vmul.f32 %v4908, %v4910
        %v4912 = vadd.f32 %v4911, -0.4999988
        %v4913 = vmul.f32 %v4908, %v4912
        %v4914 = vadd.f32 1.0, %v4913
        %v4915 = vmul.f32 %v4906, %v4906
        %v4916 = vmul.f32 %v4915, -0.00019511016
        %v4917 = vadd.f32 %v4916, 0.008332121
        %v4918 = vmul.f32 %v4915, %v4917
        %v4919 = vadd.f32 %v4918, -0.16666654
        %v4920 = vmul.f32 %v4915, %v4919
        %v4921 = vadd.f32 %v4920, 1.0
        %v4922 = vmul.f32 %v4921, %v4906
        %vm4923 = vweird.f32 %v590
        %v4924 = vadd.s32 %v4907, 3
        %v4925 = vand.u32 %v4924, 3
        %vm4926 = vcmp.lt.s32.totalorder %v4925, 2
        %vm4927 = vcmp.eq.s32.totalorder %v4925, 0
        %v4928 = vxor.u32 %v4922, 2147483648
        %v4929 = vsel %vm4927, %v4914, %v4928
        %vm4930 = vcmp.eq.s32.totalorder %v4925, 2
        %v4931 = vxor.u32 %v4914, 2147483648
        %v4932 = vsel %vm4930, %v4931, %v4922
        %v4933 = vsel %vm4926, %v4929, %v4932
        %v4934 = vsel %vm4923, nan, %v4933
        %v4935 = vand.u32 2147483647, %v591
        %vm4936 = vcmp.le.f32.partialorder %v4935, 0.7853982
        %vm4937 = vcmp.lt.s32.totalorder %v591, 0
        %v4938 = vand.u32 %v591, 2139095040
        %v4939 = vshrl.u32 %v4938, 23
        %v4940 = vsub.s32 %v4939, 127
        %v4941 = vand.u32 2147483647, %v591
        %v4942 = vand.u32 %v4941, 8388607
        %v4943 = vor.u32 %v4942, 8388608
        %v4944 = vsub.s32 0, %v4943
        %v4945 = vadd.s32 %v4940, 1
        %vm4946 = vcmp.gt.s32.totalorder %v4945, 0
        %v4947 = vsel %vm4946, %v4945, 0
        %v4948 = vshrl.u32 %v4947, 5
        %v4949 = vand.u32 %v4947, 31
        %v4950 = vsub.s32 32, %v4949
        %v4951 = vshrl.u32 683565275, %v4950
        %v4952 = vshll.u32 683565275, %v4949
        %v4953 = vshrl.u32 2475754826, %v4950
        %v4954 = vor.u32 %v4952, %v4953
        %v4955 = vshll.u32 2475754826, %v4949
        %v4956 = vshrl.u32 2131351028, %v4950
        %v4957 = vor.u32 %v4955, %v4956
        %v4958 = vshll.u32 2131351028, %v4949
        %v4959 = vshrl.u32 2102212464, %v4950
        %v4960 = vor.u32 %v4958, %v4959
        %v4961 = vshll.u32 2102212464, %v4949
        %v4962 = vshrl.u32 920167782, %v4950
        %v4963 = vor.u32 %v4961, %v4962
        %v4964 = vshll.u32 920167782, %v4949
        %v4965 = vshrl.u32 1326507024, %v4950
        %v4966 = vor.u32 %v4964, %v4965
        %vm4967 = vcmp.lt.s32.totalorder %v4948, 1
        %vm4968 = vcmp.lt.s32.totalorder %v4948, 2
        %vm4969 = vcmp.lt.s32.totalorder %v4948, 3
        %vm4970 = vcmp.lt.s32.totalorder %v4948, 4
        %v4971 = vsel %vm4967, %v4951, %v4954
        %v4972 = vsel %vm4970, %v4960, 2102212464
        %v4973 = vsel %vm4969, %v4957, %v4972
        %v4974 = vsel %vm4968, %v4971, %v4973
        %v4975 = vsel %vm4967, %v4954, %v4957
        %v4976 = vsel %vm4970, %v4963, 920167782
        %v4977 = vsel %vm4969, %v4960, %v4976
        %v4978 = vsel %vm4968, %v4975, %v4977
        %v4979 = vsel %vm4967, %v4957, %v4960
        %v4980 = vsel %vm4970, %v4966, 1326507024
        %v4981 = vsel %vm4969, %v4963, %v4980
        %v4982 = vsel %vm4968, %v4979, %v4981
        %v4983 = vshll.u32 %v4943, 8
        %v4984 = vand.u32 %v4983, 65535
        %v4985 = vshrl.u32 %v4983, 16
        %v4986 = vand.u32 %v4982, 65535
        %v4987 = vshrl.u32 %v4982, 16
        %v4988 = vmul.u32 %v4984, %v4986
        %v4989 = vmul.u32 %v4984, %v4987
        %v4990 = vmul.u32 %v4985, %v4986
        %v4991 = vmul.u32 %v4985, %v4987
        %v4992 = vshll.u32 %v4989, 16
        %v4993 = vshrl.u32 %v4989, 16
        %v4994 = vshll.u32 %v4990, 16
        %v4995 = vshrl.u32 %v4990, 16
        %vm4996 = vc.u32 %v4988, %v4992
        %v4997 = vsel %vm4996, 1, 0
        %v4998 = vadd.s32 %v4988, %v4992
        %v4999 = vadd.s32 %v4991, %v4997
        %vm5000 = vc.u32 %v4998, %v4994
        %v5001 = vsel %vm5000, 1, 0
        %v5002 = vadd.s32 %v4998, %v4994
        %v5003 = vadd.s32 %v4999, %v5001
        %v5004 = vadd.s32 %v5003, %v4993
        %v5005 = vadd.s32 %v5004, %v4995
        %v5006 = vand.u32 %v4983, 65535
        %v5007 = vshrl.u32 %v4983, 16
        %v5008 = vand.u32 %v4978, 65535
        %v5009 = vshrl.u32 %v4978, 16
        %v5010 = vmul.u32 %v5006, %v5008
        %v5011 = vmul.u32 %v5006, %v5009
        %v5012 = vmul.u32 %v5007, %v5008
        %v5013 = vmul.u32 %v5007, %v5009
        %v5014 = vshll.u32 %v5011, 16
        %v5015 = vshrl.u32 %v5011, 16
        %v5016 = vshll.u32 %v5012, 16
        %v5017 = vshrl.u32 %v5012, 16
        %vm5018 = vc.u32 %v5010, %v5014
        %v5019 = vsel %vm5018, 1, 0
        %v5020 = vadd.s32 %v5010, %v5014
        %v5021 = vadd.s32 %v5013, %v5019
        %vm5022 = vc.u32 %v5020, %v5016
        %v5023 = vsel %vm5022, 1, 0
        %v5024 = vadd.s32 %v5020, %v5016
        %v5025 = vadd.s32 %v5021, %v5023
        %v5026 = vadd.s32 %v5025, %v5015
        %v5027 = vadd.s32 %v5026, %v5017
        %v5028 = vmul.u32 %v4983, %v4974
        %v5029 = vadd.s32 %v5005, %v5024
        %vm5030 = vc.u32 %v5005, %v5024
        %v5031 = vadd.s32 %v5027, 1
        %v5032 = vsel %vm5030, %v5031, %v5027
        %v5033 = vadd.s32 %v5028, %v5032
        %v5034 = vadd.s32 %v5033, 536870912
        %v5035 = vshrl.u32 %v5034, 30
        %v5036 = vshll.u32 %v5035, 30
        %v5037 = vsub.s32 %v5033, %v5036
        %vm5038 = vcmp.lt.s32.totalorder %v5037, 0
        %v5039 = vsub.s32 0, %v5037
        %v5040 = vsel %vm5038, %v5039, %v5037
        %v5041 = vclz %v5040
        %v5042 = vsub.s32 %v5041, 2
        %vm5043 = vcmp.gt.s32.totalorder 0, %v5042
        %v5044 = vsel %vm5043, 0, %v5042
        %v5045 = vsub.s32 32, %v5044
        %v5046 = vshll.u32 %v5037, %v5044
        %v5047 = vshrl.u32 %v5029, %v5045
        %v5048 = vor.u32 %v5046, %v5047
        %v5049 = vsub.s32 4294967266, %v5044
        %v5050 = vadd.s32 %v5049, 127
        %v5051 = vshll.u32 %v5050, 23
        %v5052 = vor.u32 4788187, %v5051
        %v5053 = vand.u32 2147483647, %v5052
        %v5055 = vcvt.s32.f32 %v5048
        %v5056 = vmul.f32 %v5055, %v5053
        %v5057 = vxor.u32 %v5056, 2147483648
        %v5058 = vsel %vm4937, %v5057, %v5056
        %v5059 = vsub.s32 4, %v5035
        %v5060 = vsel %vm4937, %v5059, %v5035
        %v5061 = vsel %vm4936, %v591, %v5058
        %v5062 = vsel %vm4936, 0, %v5060
        %v5063 = vmul.f32 %v5061, %v5061
        %v5064 = vmul.f32 %v5063, -0.001358992
        %v5065 = vadd.f32 %v5064, 0.041655596
        %v5066 = vmul.f32 %v5063, %v5065
        %v5067 = vadd.f32 %v5066, -0.4999988
        %v5068 = vmul.f32 %v5063, %v5067
        %v5069 = vadd.f32 1.0, %v5068
        %v5070 = vmul.f32 %v5061, %v5061
        %v5071 = vmul.f32 %v5070, -0.00019511016
        %v5072 = vadd.f32 %v5071, 0.008332121
        %v5073 = vmul.f32 %v5070, %v5072
        %v5074 = vadd.f32 %v5073, -0.16666654
        %v5075 = vmul.f32 %v5070, %v5074
        %v5076 = vadd.f32 %v5075, 1.0
        %v5077 = vmul.f32 %v5076, %v5061
        %vm5078 = vweird.f32 %v591
        %v5079 = vadd.s32 %v5062, 3
        %v5080 = vand.u32 %v5079, 3
        %vm5081 = vcmp.lt.s32.totalorder %v5080, 2
        %vm5082 = vcmp.eq.s32.totalorder %v5080, 0
        %v5083 = vxor.u32 %v5077, 2147483648
        %v5084 = vsel %vm5082, %v5069, %v5083
        %vm5085 = vcmp.eq.s32.totalorder %v5080, 2
        %v5086 = vxor.u32 %v5069, 2147483648
        %v5087 = vsel %vm5085, %v5086, %v5077
        %v5088 = vsel %vm5081, %v5084, %v5087
        %v5089 = vsel %vm5078, nan, %v5088
        %v5090 = vand.u32 2147483647, %v592
        %vm5091 = vcmp.le.f32.partialorder %v5090, 0.7853982
        %vm5092 = vcmp.lt.s32.totalorder %v592, 0
        %v5093 = vand.u32 %v592, 2139095040
        %v5094 = vshrl.u32 %v5093, 23
        %v5095 = vsub.s32 %v5094, 127
        %v5096 = vand.u32 2147483647, %v592
        %v5097 = vand.u32 %v5096, 8388607
        %v5098 = vor.u32 %v5097, 8388608
        %v5099 = vsub.s32 0, %v5098
        %v5100 = vadd.s32 %v5095, 1
        %vm5101 = vcmp.gt.s32.totalorder %v5100, 0
        %v5102 = vsel %vm5101, %v5100, 0
        %v5103 = vshrl.u32 %v5102, 5
        %v5104 = vand.u32 %v5102, 31
        %v5105 = vsub.s32 32, %v5104
        %v5106 = vshrl.u32 683565275, %v5105
        %v5107 = vshll.u32 683565275, %v5104
        %v5108 = vshrl.u32 2475754826, %v5105
        %v5109 = vor.u32 %v5107, %v5108
        %v5110 = vshll.u32 2475754826, %v5104
        %v5111 = vshrl.u32 2131351028, %v5105
        %v5112 = vor.u32 %v5110, %v5111
        %v5113 = vshll.u32 2131351028, %v5104
        %v5114 = vshrl.u32 2102212464, %v5105
        %v5115 = vor.u32 %v5113, %v5114
        %v5116 = vshll.u32 2102212464, %v5104
        %v5117 = vshrl.u32 920167782, %v5105
        %v5118 = vor.u32 %v5116, %v5117
        %v5119 = vshll.u32 920167782, %v5104
        %v5120 = vshrl.u32 1326507024, %v5105
        %v5121 = vor.u32 %v5119, %v5120
        %vm5122 = vcmp.lt.s32.totalorder %v5103, 1
        %vm5123 = vcmp.lt.s32.totalorder %v5103, 2
        %vm5124 = vcmp.lt.s32.totalorder %v5103, 3
        %vm5125 = vcmp.lt.s32.totalorder %v5103, 4
        %v5126 = vsel %vm5122, %v5106, %v5109
        %v5127 = vsel %vm5125, %v5115, 2102212464
        %v5128 = vsel %vm5124, %v5112, %v5127
        %v5129 = vsel %vm5123, %v5126, %v5128
        %v5130 = vsel %vm5122, %v5109, %v5112
        %v5131 = vsel %vm5125, %v5118, 920167782
        %v5132 = vsel %vm5124, %v5115, %v5131
        %v5133 = vsel %vm5123, %v5130, %v5132
        %v5134 = vsel %vm5122, %v5112, %v5115
        %v5135 = vsel %vm5125, %v5121, 1326507024
        %v5136 = vsel %vm5124, %v5118, %v5135
        %v5137 = vsel %vm5123, %v5134, %v5136
        %v5138 = vshll.u32 %v5098, 8
        %v5139 = vand.u32 %v5138, 65535
        %v5140 = vshrl.u32 %v5138, 16
        %v5141 = vand.u32 %v5137, 65535
        %v5142 = vshrl.u32 %v5137, 16
        %v5143 = vmul.u32 %v5139, %v5141
        %v5144 = vmul.u32 %v5139, %v5142
        %v5145 = vmul.u32 %v5140, %v5141
        %v5146 = vmul.u32 %v5140, %v5142
        %v5147 = vshll.u32 %v5144, 16
        %v5148 = vshrl.u32 %v5144, 16
        %v5149 = vshll.u32 %v5145, 16
        %v5150 = vshrl.u32 %v5145, 16
        %vm5151 = vc.u32 %v5143, %v5147
        %v5152 = vsel %vm5151, 1, 0
        %v5153 = vadd.s32 %v5143, %v5147
        %v5154 = vadd.s32 %v5146, %v5152
        %vm5155 = vc.u32 %v5153, %v5149
        %v5156 = vsel %vm5155, 1, 0
        %v5157 = vadd.s32 %v5153, %v5149
        %v5158 = vadd.s32 %v5154, %v5156
        %v5159 = vadd.s32 %v5158, %v5148
        %v5160 = vadd.s32 %v5159, %v5150
        %v5161 = vand.u32 %v5138, 65535
        %v5162 = vshrl.u32 %v5138, 16
        %v5163 = vand.u32 %v5133, 65535
        %v5164 = vshrl.u32 %v5133, 16
        %v5165 = vmul.u32 %v5161, %v5163
        %v5166 = vmul.u32 %v5161, %v5164
        %v5167 = vmul.u32 %v5162, %v5163
        %v5168 = vmul.u32 %v5162, %v5164
        %v5169 = vshll.u32 %v5166, 16
        %v5170 = vshrl.u32 %v5166, 16
        %v5171 = vshll.u32 %v5167, 16
        %v5172 = vshrl.u32 %v5167, 16
        %vm5173 = vc.u32 %v5165, %v5169
        %v5174 = vsel %vm5173, 1, 0
        %v5175 = vadd.s32 %v5165, %v5169
        %v5176 = vadd.s32 %v5168, %v5174
        %vm5177 = vc.u32 %v5175, %v5171
        %v5178 = vsel %vm5177, 1, 0
        %v5179 = vadd.s32 %v5175, %v5171
        %v5180 = vadd.s32 %v5176, %v5178
        %v5181 = vadd.s32 %v5180, %v5170
        %v5182 = vadd.s32 %v5181, %v5172
        %v5183 = vmul.u32 %v5138, %v5129
        %v5184 = vadd.s32 %v5160, %v5179
        %vm5185 = vc.u32 %v5160, %v5179
        %v5186 = vadd.s32 %v5182, 1
        %v5187 = vsel %vm5185, %v5186, %v5182
        %v5188 = vadd.s32 %v5183, %v5187
        %v5189 = vadd.s32 %v5188, 536870912
        %v5190 = vshrl.u32 %v5189, 30
        %v5191 = vshll.u32 %v5190, 30
        %v5192 = vsub.s32 %v5188, %v5191
        %vm5193 = vcmp.lt.s32.totalorder %v5192, 0
        %v5194 = vsub.s32 0, %v5192
        %v5195 = vsel %vm5193, %v5194, %v5192
        %v5196 = vclz %v5195
        %v5197 = vsub.s32 %v5196, 2
        %vm5198 = vcmp.gt.s32.totalorder 0, %v5197
        %v5199 = vsel %vm5198, 0, %v5197
        %v5200 = vsub.s32 32, %v5199
        %v5201 = vshll.u32 %v5192, %v5199
        %v5202 = vshrl.u32 %v5184, %v5200
        %v5203 = vor.u32 %v5201, %v5202
        %v5204 = vsub.s32 4294967266, %v5199
        %v5205 = vadd.s32 %v5204, 127
        %v5206 = vshll.u32 %v5205, 23
        %v5207 = vor.u32 4788187, %v5206
        %v5208 = vand.u32 2147483647, %v5207
        %v5210 = vcvt.s32.f32 %v5203
        %v5211 = vmul.f32 %v5210, %v5208
        %v5212 = vxor.u32 %v5211, 2147483648
        %v5213 = vsel %vm5092, %v5212, %v5211
        %v5214 = vsub.s32 4, %v5190
        %v5215 = vsel %vm5092, %v5214, %v5190
        %v5216 = vsel %vm5091, %v592, %v5213
        %v5217 = vsel %vm5091, 0, %v5215
        %v5218 = vmul.f32 %v5216, %v5216
        %v5219 = vmul.f32 %v5218, -0.001358992
        %v5220 = vadd.f32 %v5219, 0.041655596
        %v5221 = vmul.f32 %v5218, %v5220
        %v5222 = vadd.f32 %v5221, -0.4999988
        %v5223 = vmul.f32 %v5218, %v5222
        %v5224 = vadd.f32 1.0, %v5223
        %v5225 = vmul.f32 %v5216, %v5216
        %v5226 = vmul.f32 %v5225, -0.00019511016
        %v5227 = vadd.f32 %v5226, 0.008332121
        %v5228 = vmul.f32 %v5225, %v5227
        %v5229 = vadd.f32 %v5228, -0.16666654
        %v5230 = vmul.f32 %v5225, %v5229
        %v5231 = vadd.f32 %v5230, 1.0
        %v5232 = vmul.f32 %v5231, %v5216
        %vm5233 = vweird.f32 %v592
        %v5234 = vadd.s32 %v5217, 3
        %v5235 = vand.u32 %v5234, 3
        %vm5236 = vcmp.lt.s32.totalorder %v5235, 2
        %vm5237 = vcmp.eq.s32.totalorder %v5235, 0
        %v5238 = vxor.u32 %v5232, 2147483648
        %v5239 = vsel %vm5237, %v5224, %v5238
        %vm5240 = vcmp.eq.s32.totalorder %v5235, 2
        %v5241 = vxor.u32 %v5224, 2147483648
        %v5242 = vsel %vm5240, %v5241, %v5232
        %v5243 = vsel %vm5236, %v5239, %v5242
        %v5244 = vsel %vm5233, nan, %v5243
        %v5245 = vand.u32 2147483647, %v593
        %vm5246 = vcmp.le.f32.partialorder %v5245, 0.7853982
        %vm5247 = vcmp.lt.s32.totalorder %v593, 0
        %v5248 = vand.u32 %v593, 2139095040
        %v5249 = vshrl.u32 %v5248, 23
        %v5250 = vsub.s32 %v5249, 127
        %v5251 = vand.u32 2147483647, %v593
        %v5252 = vand.u32 %v5251, 8388607
        %v5253 = vor.u32 %v5252, 8388608
        %v5254 = vsub.s32 0, %v5253
        %v5255 = vadd.s32 %v5250, 1
        %vm5256 = vcmp.gt.s32.totalorder %v5255, 0
        %v5257 = vsel %vm5256, %v5255, 0
        %v5258 = vshrl.u32 %v5257, 5
        %v5259 = vand.u32 %v5257, 31
        %v5260 = vsub.s32 32, %v5259
        %v5261 = vshrl.u32 683565275, %v5260
        %v5262 = vshll.u32 683565275, %v5259
        %v5263 = vshrl.u32 2475754826, %v5260
        %v5264 = vor.u32 %v5262, %v5263
        %v5265 = vshll.u32 2475754826, %v5259
        %v5266 = vshrl.u32 2131351028, %v5260
        %v5267 = vor.u32 %v5265, %v5266
        %v5268 = vshll.u32 2131351028, %v5259
        %v5269 = vshrl.u32 2102212464, %v5260
        %v5270 = vor.u32 %v5268, %v5269
        %v5271 = vshll.u32 2102212464, %v5259
        %v5272 = vshrl.u32 920167782, %v5260
        %v5273 = vor.u32 %v5271, %v5272
        %v5274 = vshll.u32 920167782, %v5259
        %v5275 = vshrl.u32 1326507024, %v5260
        %v5276 = vor.u32 %v5274, %v5275
        %vm5277 = vcmp.lt.s32.totalorder %v5258, 1
        %vm5278 = vcmp.lt.s32.totalorder %v5258, 2
        %vm5279 = vcmp.lt.s32.totalorder %v5258, 3
        %vm5280 = vcmp.lt.s32.totalorder %v5258, 4
        %v5281 = vsel %vm5277, %v5261, %v5264
        %v5282 = vsel %vm5280, %v5270, 2102212464
        %v5283 = vsel %vm5279, %v5267, %v5282
        %v5284 = vsel %vm5278, %v5281, %v5283
        %v5285 = vsel %vm5277, %v5264, %v5267
        %v5286 = vsel %vm5280, %v5273, 920167782
        %v5287 = vsel %vm5279, %v5270, %v5286
        %v5288 = vsel %vm5278, %v5285, %v5287
        %v5289 = vsel %vm5277, %v5267, %v5270
        %v5290 = vsel %vm5280, %v5276, 1326507024
        %v5291 = vsel %vm5279, %v5273, %v5290
        %v5292 = vsel %vm5278, %v5289, %v5291
        %v5293 = vshll.u32 %v5253, 8
        %v5294 = vand.u32 %v5293, 65535
        %v5295 = vshrl.u32 %v5293, 16
        %v5296 = vand.u32 %v5292, 65535
        %v5297 = vshrl.u32 %v5292, 16
        %v5298 = vmul.u32 %v5294, %v5296
        %v5299 = vmul.u32 %v5294, %v5297
        %v5300 = vmul.u32 %v5295, %v5296
        %v5301 = vmul.u32 %v5295, %v5297
        %v5302 = vshll.u32 %v5299, 16
        %v5303 = vshrl.u32 %v5299, 16
        %v5304 = vshll.u32 %v5300, 16
        %v5305 = vshrl.u32 %v5300, 16
        %vm5306 = vc.u32 %v5298, %v5302
        %v5307 = vsel %vm5306, 1, 0
        %v5308 = vadd.s32 %v5298, %v5302
        %v5309 = vadd.s32 %v5301, %v5307
        %vm5310 = vc.u32 %v5308, %v5304
        %v5311 = vsel %vm5310, 1, 0
        %v5312 = vadd.s32 %v5308, %v5304
        %v5313 = vadd.s32 %v5309, %v5311
        %v5314 = vadd.s32 %v5313, %v5303
        %v5315 = vadd.s32 %v5314, %v5305
        %v5316 = vand.u32 %v5293, 65535
        %v5317 = vshrl.u32 %v5293, 16
        %v5318 = vand.u32 %v5288, 65535
        %v5319 = vshrl.u32 %v5288, 16
        %v5320 = vmul.u32 %v5316, %v5318
        %v5321 = vmul.u32 %v5316, %v5319
        %v5322 = vmul.u32 %v5317, %v5318
        %v5323 = vmul.u32 %v5317, %v5319
        %v5324 = vshll.u32 %v5321, 16
        %v5325 = vshrl.u32 %v5321, 16
        %v5326 = vshll.u32 %v5322, 16
        %v5327 = vshrl.u32 %v5322, 16
        %vm5328 = vc.u32 %v5320, %v5324
        %v5329 = vsel %vm5328, 1, 0
        %v5330 = vadd.s32 %v5320, %v5324
        %v5331 = vadd.s32 %v5323, %v5329
        %vm5332 = vc.u32 %v5330, %v5326
        %v5333 = vsel %vm5332, 1, 0
        %v5334 = vadd.s32 %v5330, %v5326
        %v5335 = vadd.s32 %v5331, %v5333
        %v5336 = vadd.s32 %v5335, %v5325
        %v5337 = vadd.s32 %v5336, %v5327
        %v5338 = vmul.u32 %v5293, %v5284
        %v5339 = vadd.s32 %v5315, %v5334
        %vm5340 = vc.u32 %v5315, %v5334
        %v5341 = vadd.s32 %v5337, 1
        %v5342 = vsel %vm5340, %v5341, %v5337
        %v5343 = vadd.s32 %v5338, %v5342
        %v5344 = vadd.s32 %v5343, 536870912
        %v5345 = vshrl.u32 %v5344, 30
        %v5346 = vshll.u32 %v5345, 30
        %v5347 = vsub.s32 %v5343, %v5346
        %vm5348 = vcmp.lt.s32.totalorder %v5347, 0
        %v5349 = vsub.s32 0, %v5347
        %v5350 = vsel %vm5348, %v5349, %v5347
        %v5351 = vclz %v5350
        %v5352 = vsub.s32 %v5351, 2
        %vm5353 = vcmp.gt.s32.totalorder 0, %v5352
        %v5354 = vsel %vm5353, 0, %v5352
        %v5355 = vsub.s32 32, %v5354
        %v5356 = vshll.u32 %v5347, %v5354
        %v5357 = vshrl.u32 %v5339, %v5355
        %v5358 = vor.u32 %v5356, %v5357
        %v5359 = vsub.s32 4294967266, %v5354
        %v5360 = vadd.s32 %v5359, 127
        %v5361 = vshll.u32 %v5360, 23
        %v5362 = vor.u32 4788187, %v5361
        %v5363 = vand.u32 2147483647, %v5362
        %v5365 = vcvt.s32.f32 %v5358
        %v5366 = vmul.f32 %v5365, %v5363
        %v5367 = vxor.u32 %v5366, 2147483648
        %v5368 = vsel %vm5247, %v5367, %v5366
        %v5369 = vsub.s32 4, %v5345
        %v5370 = vsel %vm5247, %v5369, %v5345
        %v5371 = vsel %vm5246, %v593, %v5368
        %v5372 = vsel %vm5246, 0, %v5370
        %v5373 = vmul.f32 %v5371, %v5371
        %v5374 = vmul.f32 %v5373, -0.001358992
        %v5375 = vadd.f32 %v5374, 0.041655596
        %v5376 = vmul.f32 %v5373, %v5375
        %v5377 = vadd.f32 %v5376, -0.4999988
        %v5378 = vmul.f32 %v5373, %v5377
        %v5379 = vadd.f32 1.0, %v5378
        %v5380 = vmul.f32 %v5371, %v5371
        %v5381 = vmul.f32 %v5380, -0.00019511016
        %v5382 = vadd.f32 %v5381, 0.008332121
        %v5383 = vmul.f32 %v5380, %v5382
        %v5384 = vadd.f32 %v5383, -0.16666654
        %v5385 = vmul.f32 %v5380, %v5384
        %v5386 = vadd.f32 %v5385, 1.0
        %v5387 = vmul.f32 %v5386, %v5371
        %vm5388 = vweird.f32 %v593
        %v5389 = vadd.s32 %v5372, 3
        %v5390 = vand.u32 %v5389, 3
        %vm5391 = vcmp.lt.s32.totalorder %v5390, 2
        %vm5392 = vcmp.eq.s32.totalorder %v5390, 0
        %v5393 = vxor.u32 %v5387, 2147483648
        %v5394 = vsel %vm5392, %v5379, %v5393
        %vm5395 = vcmp.eq.s32.totalorder %v5390, 2
        %v5396 = vxor.u32 %v5379, 2147483648
        %v5397 = vsel %vm5395, %v5396, %v5387
        %v5398 = vsel %vm5391, %v5394, %v5397
        %v5399 = vsel %vm5388, nan, %v5398
        %v5400 = vand.u32 2147483647, %v594
        %vm5401 = vcmp.le.f32.partialorder %v5400, 0.7853982
        %vm5402 = vcmp.lt.s32.totalorder %v594, 0
        %v5403 = vand.u32 %v594, 2139095040
        %v5404 = vshrl.u32 %v5403, 23
        %v5405 = vsub.s32 %v5404, 127
        %v5406 = vand.u32 2147483647, %v594
        %v5407 = vand.u32 %v5406, 8388607
        %v5408 = vor.u32 %v5407, 8388608
        %v5409 = vsub.s32 0, %v5408
        %v5410 = vadd.s32 %v5405, 1
        %vm5411 = vcmp.gt.s32.totalorder %v5410, 0
        %v5412 = vsel %vm5411, %v5410, 0
        %v5413 = vshrl.u32 %v5412, 5
        %v5414 = vand.u32 %v5412, 31
        %v5415 = vsub.s32 32, %v5414
        %v5416 = vshrl.u32 683565275, %v5415
        %v5417 = vshll.u32 683565275, %v5414
        %v5418 = vshrl.u32 2475754826, %v5415
        %v5419 = vor.u32 %v5417, %v5418
        %v5420 = vshll.u32 2475754826, %v5414
        %v5421 = vshrl.u32 2131351028, %v5415
        %v5422 = vor.u32 %v5420, %v5421
        %v5423 = vshll.u32 2131351028, %v5414
        %v5424 = vshrl.u32 2102212464, %v5415
        %v5425 = vor.u32 %v5423, %v5424
        %v5426 = vshll.u32 2102212464, %v5414
        %v5427 = vshrl.u32 920167782, %v5415
        %v5428 = vor.u32 %v5426, %v5427
        %v5429 = vshll.u32 920167782, %v5414
        %v5430 = vshrl.u32 1326507024, %v5415
        %v5431 = vor.u32 %v5429, %v5430
        %vm5432 = vcmp.lt.s32.totalorder %v5413, 1
        %vm5433 = vcmp.lt.s32.totalorder %v5413, 2
        %vm5434 = vcmp.lt.s32.totalorder %v5413, 3
        %vm5435 = vcmp.lt.s32.totalorder %v5413, 4
        %v5436 = vsel %vm5432, %v5416, %v5419
        %v5437 = vsel %vm5435, %v5425, 2102212464
        %v5438 = vsel %vm5434, %v5422, %v5437
        %v5439 = vsel %vm5433, %v5436, %v5438
        %v5440 = vsel %vm5432, %v5419, %v5422
        %v5441 = vsel %vm5435, %v5428, 920167782
        %v5442 = vsel %vm5434, %v5425, %v5441
        %v5443 = vsel %vm5433, %v5440, %v5442
        %v5444 = vsel %vm5432, %v5422, %v5425
        %v5445 = vsel %vm5435, %v5431, 1326507024
        %v5446 = vsel %vm5434, %v5428, %v5445
        %v5447 = vsel %vm5433, %v5444, %v5446
        %v5448 = vshll.u32 %v5408, 8
        %v5449 = vand.u32 %v5448, 65535
        %v5450 = vshrl.u32 %v5448, 16
        %v5451 = vand.u32 %v5447, 65535
        %v5452 = vshrl.u32 %v5447, 16
        %v5453 = vmul.u32 %v5449, %v5451
        %v5454 = vmul.u32 %v5449, %v5452
        %v5455 = vmul.u32 %v5450, %v5451
        %v5456 = vmul.u32 %v5450, %v5452
        %v5457 = vshll.u32 %v5454, 16
        %v5458 = vshrl.u32 %v5454, 16
        %v5459 = vshll.u32 %v5455, 16
        %v5460 = vshrl.u32 %v5455, 16
        %vm5461 = vc.u32 %v5453, %v5457
        %v5462 = vsel %vm5461, 1, 0
        %v5463 = vadd.s32 %v5453, %v5457
        %v5464 = vadd.s32 %v5456, %v5462
        %vm5465 = vc.u32 %v5463, %v5459
        %v5466 = vsel %vm5465, 1, 0
        %v5467 = vadd.s32 %v5463, %v5459
        %v5468 = vadd.s32 %v5464, %v5466
        %v5469 = vadd.s32 %v5468, %v5458
        %v5470 = vadd.s32 %v5469, %v5460
        %v5471 = vand.u32 %v5448, 65535
        %v5472 = vshrl.u32 %v5448, 16
        %v5473 = vand.u32 %v5443, 65535
        %v5474 = vshrl.u32 %v5443, 16
        %v5475 = vmul.u32 %v5471, %v5473
        %v5476 = vmul.u32 %v5471, %v5474
        %v5477 = vmul.u32 %v5472, %v5473
        %v5478 = vmul.u32 %v5472, %v5474
        %v5479 = vshll.u32 %v5476, 16
        %v5480 = vshrl.u32 %v5476, 16
        %v5481 = vshll.u32 %v5477, 16
        %v5482 = vshrl.u32 %v5477, 16
        %vm5483 = vc.u32 %v5475, %v5479
        %v5484 = vsel %vm5483, 1, 0
        %v5485 = vadd.s32 %v5475, %v5479
        %v5486 = vadd.s32 %v5478, %v5484
        %vm5487 = vc.u32 %v5485, %v5481
        %v5488 = vsel %vm5487, 1, 0
        %v5489 = vadd.s32 %v5485, %v5481
        %v5490 = vadd.s32 %v5486, %v5488
        %v5491 = vadd.s32 %v5490, %v5480
        %v5492 = vadd.s32 %v5491, %v5482
        %v5493 = vmul.u32 %v5448, %v5439
        %v5494 = vadd.s32 %v5470, %v5489
        %vm5495 = vc.u32 %v5470, %v5489
        %v5496 = vadd.s32 %v5492, 1
        %v5497 = vsel %vm5495, %v5496, %v5492
        %v5498 = vadd.s32 %v5493, %v5497
        %v5499 = vadd.s32 %v5498, 536870912
        %v5500 = vshrl.u32 %v5499, 30
        %v5501 = vshll.u32 %v5500, 30
        %v5502 = vsub.s32 %v5498, %v5501
        %vm5503 = vcmp.lt.s32.totalorder %v5502, 0
        %v5504 = vsub.s32 0, %v5502
        %v5505 = vsel %vm5503, %v5504, %v5502
        %v5506 = vclz %v5505
        %v5507 = vsub.s32 %v5506, 2
        %vm5508 = vcmp.gt.s32.totalorder 0, %v5507
        %v5509 = vsel %vm5508, 0, %v5507
        %v5510 = vsub.s32 32, %v5509
        %v5511 = vshll.u32 %v5502, %v5509
        %v5512 = vshrl.u32 %v5494, %v5510
        %v5513 = vor.u32 %v5511, %v5512
        %v5514 = vsub.s32 4294967266, %v5509
        %v5515 = vadd.s32 %v5514, 127
        %v5516 = vshll.u32 %v5515, 23
        %v5517 = vor.u32 4788187, %v5516
        %v5518 = vand.u32 2147483647, %v5517
        %v5520 = vcvt.s32.f32 %v5513
        %v5521 = vmul.f32 %v5520, %v5518
        %v5522 = vxor.u32 %v5521, 2147483648
        %v5523 = vsel %vm5402, %v5522, %v5521
        %v5524 = vsub.s32 4, %v5500
        %v5525 = vsel %vm5402, %v5524, %v5500
        %v5526 = vsel %vm5401, %v594, %v5523
        %v5527 = vsel %vm5401, 0, %v5525
        %v5528 = vmul.f32 %v5526, %v5526
        %v5529 = vmul.f32 %v5528, -0.001358992
        %v5530 = vadd.f32 %v5529, 0.041655596
        %v5531 = vmul.f32 %v5528, %v5530
        %v5532 = vadd.f32 %v5531, -0.4999988
        %v5533 = vmul.f32 %v5528, %v5532
        %v5534 = vadd.f32 1.0, %v5533
        %v5535 = vmul.f32 %v5526, %v5526
        %v5536 = vmul.f32 %v5535, -0.00019511016
        %v5537 = vadd.f32 %v5536, 0.008332121
        %v5538 = vmul.f32 %v5535, %v5537
        %v5539 = vadd.f32 %v5538, -0.16666654
        %v5540 = vmul.f32 %v5535, %v5539
        %v5541 = vadd.f32 %v5540, 1.0
        %v5542 = vmul.f32 %v5541, %v5526
        %vm5543 = vweird.f32 %v594
        %v5544 = vadd.s32 %v5527, 3
        %v5545 = vand.u32 %v5544, 3
        %vm5546 = vcmp.lt.s32.totalorder %v5545, 2
        %vm5547 = vcmp.eq.s32.totalorder %v5545, 0
        %v5548 = vxor.u32 %v5542, 2147483648
        %v5549 = vsel %vm5547, %v5534, %v5548
        %vm5550 = vcmp.eq.s32.totalorder %v5545, 2
        %v5551 = vxor.u32 %v5534, 2147483648
        %v5552 = vsel %vm5550, %v5551, %v5542
        %v5553 = vsel %vm5546, %v5549, %v5552
        %v5554 = vsel %vm5543, nan, %v5553
        %v5555 = vld [vmem:[%s4] sm:$0x1]
        %v5557 = vperm.slane %v5555, 0
        %v5559 = vmul.f32 %v749, %v5557
        %v5560 = vmul.f32 %v904, %v5557
        %v5561 = vmul.f32 %v1059, %v5557
        %v5562 = vmul.f32 %v1214, %v5557
        %v5563 = vmul.f32 %v1369, %v5557
        %v5564 = vmul.f32 %v1524, %v5557
        %v5565 = vmul.f32 %v1679, %v5557
        %v5566 = vmul.f32 %v1834, %v5557
        %v5567 = vmul.f32 %v1989, %v5557
        %v5568 = vmul.f32 %v2144, %v5557
        %v5569 = vmul.f32 %v2299, %v5557
        %v5570 = vmul.f32 %v2454, %v5557
        %v5571 = vmul.f32 %v2609, %v5557
        %v5572 = vmul.f32 %v2764, %v5557
        %v5573 = vmul.f32 %v2919, %v5557
        %v5574 = vmul.f32 %v3074, %v5557
        %v5575 = vmul.f32 %v3229, %v5557
        %v5576 = vmul.f32 %v3384, %v5557
        %v5577 = vmul.f32 %v3539, %v5557
        %v5578 = vmul.f32 %v3694, %v5557
        %v5579 = vmul.f32 %v3849, %v5557
        %v5580 = vmul.f32 %v4004, %v5557
        %v5581 = vmul.f32 %v4159, %v5557
        %v5582 = vmul.f32 %v4314, %v5557
        %v5583 = vmul.f32 %v4469, %v5557
        %v5584 = vmul.f32 %v4624, %v5557
        %v5585 = vmul.f32 %v4779, %v5557
        %v5586 = vmul.f32 %v4934, %v5557
        %v5587 = vmul.f32 %v5089, %v5557
        %v5588 = vmul.f32 %v5244, %v5557
        %v5589 = vmul.f32 %v5399, %v5557
        %v5590 = vmul.f32 %v5554, %v5557
        %v5591 = vpack.c.bf16 %v5560, %v5559
        %v5592 = vpack.c.bf16 %v5562, %v5561
        %v5593 = vpack.c.bf16 %v5564, %v5563
        %v5594 = vpack.c.bf16 %v5566, %v5565
        %v5595 = vpack.c.bf16 %v5568, %v5567
        %v5596 = vpack.c.bf16 %v5570, %v5569
        %v5597 = vpack.c.bf16 %v5572, %v5571
        %v5598 = vpack.c.bf16 %v5574, %v5573
        %v5599 = vpack.c.bf16 %v5576, %v5575
        %v5600 = vpack.c.bf16 %v5578, %v5577
        %v5601 = vpack.c.bf16 %v5580, %v5579
        %v5602 = vpack.c.bf16 %v5582, %v5581
        %v5603 = vpack.c.bf16 %v5584, %v5583
        %v5604 = vpack.c.bf16 %v5586, %v5585
        %v5605 = vpack.c.bf16 %v5588, %v5587
        %v5606 = vpack.c.bf16 %v5590, %v5589
        %v5607 = vld [vmem:[%s5] sm:$0xf]
        %v5608 = vld [vmem:[%s5 + $0x4] sm:$0xf]
        %v5609 = vld [vmem:[%s5 + $0x8] sm:$0xf]
        %v5610 = vld [vmem:[%s5 + $0xc] sm:$0xf]
        %v5611 = vld [vmem:[%s5 + $0x10] sm:$0xf]
        %v5612 = vld [vmem:[%s5 + $0x14] sm:$0xf]
        %v5613 = vld [vmem:[%s5 + $0x18] sm:$0xf]
        %v5614 = vld [vmem:[%s5 + $0x1c] sm:$0xf]
        %v5615 = vld [vmem:[%s5 + $0x20] sm:$0xf]
        %v5616 = vld [vmem:[%s5 + $0x24] sm:$0xf]
        %v5617 = vld [vmem:[%s5 + $0x28] sm:$0xf]
        %v5618 = vld [vmem:[%s5 + $0x2c] sm:$0xf]
        %v5619 = vld [vmem:[%s5 + $0x30] sm:$0xf]
        %v5620 = vld [vmem:[%s5 + $0x34] sm:$0xf]
        %v5621 = vld [vmem:[%s5 + $0x38] sm:$0xf]
        %v5622 = vld [vmem:[%s5 + $0x3c] sm:$0xf]
        %v5623 = vld [vmem:[%s6] sm:$0x1]
        %v5625 = vperm.slane %v5623, 0
        %v5643 = vunpack.c.l.b16 %v5607
        %v5644 = vunpack.c.l.b16 %v5608
        %v5645 = vunpack.c.l.b16 %v5609
        %v5646 = vunpack.c.l.b16 %v5610
        %v5647 = vunpack.c.l.b16 %v5611
        %v5648 = vunpack.c.l.b16 %v5612
        %v5649 = vunpack.c.l.b16 %v5613
        %v5650 = vunpack.c.l.b16 %v5614
        %v5651 = vunpack.c.l.b16 %v5615
        %v5652 = vunpack.c.l.b16 %v5616
        %v5653 = vunpack.c.l.b16 %v5617
        %v5654 = vunpack.c.l.b16 %v5618
        %v5655 = vunpack.c.l.b16 %v5619
        %v5656 = vunpack.c.l.b16 %v5620
        %v5657 = vunpack.c.l.b16 %v5621
        %v5658 = vunpack.c.l.b16 %v5622
        %v5659 = vpack.c.b16 %v5644, %v5643
        %v5660 = vpack.c.b16 %v5646, %v5645
        %v5661 = vpack.c.b16 %v5648, %v5647
        %v5662 = vpack.c.b16 %v5650, %v5649
        %v5663 = vpack.c.b16 %v5652, %v5651
        %v5664 = vpack.c.b16 %v5654, %v5653
        %v5665 = vpack.c.b16 %v5656, %v5655
        %v5666 = vpack.c.b16 %v5658, %v5657
        %5675 = vmatpush.bf16.msra.mxu0 %v5666
        %5676 = vmatpush.bf16.msra.mxu0 %v5665
        %5677 = vmatpush.bf16.msra.mxu0 %v5664
        %5678 = vmatpush.bf16.msra.mxu0 %v5663
        %5679 = vmatpush.bf16.msra.mxu0 %v5662
        %5680 = vmatpush.bf16.msra.mxu0 %v5661
        %5681 = vmatpush.bf16.msra.mxu0 %v5660
        %5682 = vmatpush.bf16.msra.mxu0 %v5659
        %5683 = vmatmul.bf16.gmra.mxu0 %v5591
        %v5684 = vpop.f32.mrf.mxu0
        %v5685 = vadd.f32 %v5625, %v5684
        %v5686 = vpop.f32.mrf.mxu0
        %v5687 = vadd.f32 %v5625, %v5686
        %5688 = vmatmul.bf16.gmra.mxu0 %v5592
        %v5689 = vpop.f32.mrf.mxu0
        %v5690 = vadd.f32 %v5625, %v5689
        %v5691 = vpop.f32.mrf.mxu0
        %v5692 = vadd.f32 %v5625, %v5691
        %5693 = vmatmul.bf16.gmra.mxu0 %v5593
        %v5694 = vpop.f32.mrf.mxu0
        %v5695 = vadd.f32 %v5625, %v5694
        %v5696 = vpop.f32.mrf.mxu0
        %v5697 = vadd.f32 %v5625, %v5696
        %5698 = vmatmul.bf16.gmra.mxu0 %v5594
        %v5699 = vpop.f32.mrf.mxu0
        %v5700 = vadd.f32 %v5625, %v5699
        %v5701 = vpop.f32.mrf.mxu0
        %v5702 = vadd.f32 %v5625, %v5701
        %5703 = vmatmul.bf16.gmra.mxu0 %v5595
        %v5704 = vpop.f32.mrf.mxu0
        %v5705 = vadd.f32 %v5625, %v5704
        %v5706 = vpop.f32.mrf.mxu0
        %v5707 = vadd.f32 %v5625, %v5706
        %5708 = vmatmul.bf16.gmra.mxu0 %v5596
        %v5709 = vpop.f32.mrf.mxu0
        %v5710 = vadd.f32 %v5625, %v5709
        %v5711 = vpop.f32.mrf.mxu0
        %v5712 = vadd.f32 %v5625, %v5711
        %5713 = vmatmul.bf16.gmra.mxu0 %v5597
        %v5714 = vpop.f32.mrf.mxu0
        %v5715 = vadd.f32 %v5625, %v5714
        %v5716 = vpop.f32.mrf.mxu0
        %v5717 = vadd.f32 %v5625, %v5716
        %5718 = vmatmul.bf16.gmra.mxu0 %v5598
        %v5719 = vpop.f32.mrf.mxu0
        %v5720 = vadd.f32 %v5625, %v5719
        %v5721 = vpop.f32.mrf.mxu0
        %v5722 = vadd.f32 %v5625, %v5721
        %5723 = vmatmul.bf16.gmra.mxu0 %v5599
        %v5724 = vpop.f32.mrf.mxu0
        %v5725 = vadd.f32 %v5625, %v5724
        %v5726 = vpop.f32.mrf.mxu0
        %v5727 = vadd.f32 %v5625, %v5726
        %5728 = vmatmul.bf16.gmra.mxu0 %v5600
        %v5729 = vpop.f32.mrf.mxu0
        %v5730 = vadd.f32 %v5625, %v5729
        %v5731 = vpop.f32.mrf.mxu0
        %v5732 = vadd.f32 %v5625, %v5731
        %5733 = vmatmul.bf16.gmra.mxu0 %v5601
        %v5734 = vpop.f32.mrf.mxu0
        %v5735 = vadd.f32 %v5625, %v5734
        %v5736 = vpop.f32.mrf.mxu0
        %v5737 = vadd.f32 %v5625, %v5736
        %5738 = vmatmul.bf16.gmra.mxu0 %v5602
        %v5739 = vpop.f32.mrf.mxu0
        %v5740 = vadd.f32 %v5625, %v5739
        %v5741 = vpop.f32.mrf.mxu0
        %v5742 = vadd.f32 %v5625, %v5741
        %5743 = vmatmul.bf16.gmra.mxu0 %v5603
        %v5744 = vpop.f32.mrf.mxu0
        %v5745 = vadd.f32 %v5625, %v5744
        %v5746 = vpop.f32.mrf.mxu0
        %v5747 = vadd.f32 %v5625, %v5746
        %5748 = vmatmul.bf16.gmra.mxu0 %v5604
        %v5749 = vpop.f32.mrf.mxu0
        %v5750 = vadd.f32 %v5625, %v5749
        %v5751 = vpop.f32.mrf.mxu0
        %v5752 = vadd.f32 %v5625, %v5751
        %5753 = vmatmul.bf16.gmra.mxu0 %v5605
        %v5754 = vpop.f32.mrf.mxu0
        %v5755 = vadd.f32 %v5625, %v5754
        %v5756 = vpop.f32.mrf.mxu0
        %v5757 = vadd.f32 %v5625, %v5756
        %5758 = vmatmul.bf16.gmra.mxu0 %v5606
        %v5759 = vpop.f32.mrf.mxu0
        %v5760 = vadd.f32 %v5625, %v5759
        %v5761 = vpop.f32.mrf.mxu0
        %v5762 = vadd.f32 %v5625, %v5761
        %5763 = vdwg.mxu0
        %5764 = vst [vmem:[%s272] sm:$0xff] %v5685
        %5765 = vst [vmem:[%s272 + $0x8] sm:$0xff] %v5687
        %5766 = vst [vmem:[%s272 + $0x10] sm:$0xff] %v5690
        %5767 = vst [vmem:[%s272 + $0x18] sm:$0xff] %v5692
        %5768 = vst [vmem:[%s272 + $0x20] sm:$0xff] %v5695
        %5769 = vst [vmem:[%s272 + $0x28] sm:$0xff] %v5697
        %5770 = vst [vmem:[%s272 + $0x30] sm:$0xff] %v5700
        %5771 = vst [vmem:[%s272 + $0x38] sm:$0xff] %v5702
        %5772 = vst [vmem:[%s272 + $0x40] sm:$0xff] %v5705
        %5773 = vst [vmem:[%s272 + $0x48] sm:$0xff] %v5707
        %5774 = vst [vmem:[%s272 + $0x50] sm:$0xff] %v5710
        %5775 = vst [vmem:[%s272 + $0x58] sm:$0xff] %v5712
        %5776 = vst [vmem:[%s272 + $0x60] sm:$0xff] %v5715
        %5777 = vst [vmem:[%s272 + $0x68] sm:$0xff] %v5717
        %5778 = vst [vmem:[%s272 + $0x70] sm:$0xff] %v5720
        %5779 = vst [vmem:[%s272 + $0x78] sm:$0xff] %v5722
        %5780 = vst [vmem:[%s272 + $0x80] sm:$0xff] %v5725
        %5781 = vst [vmem:[%s272 + $0x88] sm:$0xff] %v5727
        %5782 = vst [vmem:[%s272 + $0x90] sm:$0xff] %v5730
        %5783 = vst [vmem:[%s272 + $0x98] sm:$0xff] %v5732
        %5784 = vst [vmem:[%s272 + $0xa0] sm:$0xff] %v5735
        %5785 = vst [vmem:[%s272 + $0xa8] sm:$0xff] %v5737
        %5786 = vst [vmem:[%s272 + $0xb0] sm:$0xff] %v5740
        %5787 = vst [vmem:[%s272 + $0xb8] sm:$0xff] %v5742
        %5788 = vst [vmem:[%s272 + $0xc0] sm:$0xff] %v5745
        %5789 = vst [vmem:[%s272 + $0xc8] sm:$0xff] %v5747
        %5790 = vst [vmem:[%s272 + $0xd0] sm:$0xff] %v5750
        %5791 = vst [vmem:[%s272 + $0xd8] sm:$0xff] %v5752
        %5792 = vst [vmem:[%s272 + $0xe0] sm:$0xff] %v5755
        %5793 = vst [vmem:[%s272 + $0xe8] sm:$0xff] %v5757
        %5794 = vst [vmem:[%s272 + $0xf0] sm:$0xff] %v5760
        %5795 = vst [vmem:[%s272 + $0xf8] sm:$0xff] %v5762
        %s5796 = sand.u32 %s181, 1
        %s5797 = scalar_lea.sflag [#allocation3], %s5796
        %s5798 = sand.u32 %s181, 1
        %s5799 = smul.addr %s5798, 256
        %s5800 = scalar_lea.vmem [#allocation2], %s5799
        // Predicated region
        $region49: #{tpu_custom_call.1} parent=47 // pred_check
          %p5801 = pneg %p191
        $region50: #{tpu_custom_call.1} parent=47 // pred_check_branch
          %5803 = sbr.rel (%p5801) target = $region52
        $region51: #{tpu_custom_call.1} parent=47 // pred_region
          %s5804 = smul.u32 32, %s21
          %5806 = vsyncadd %s5797, 0
          %s5807 = smul.addr %s5804, 8
          %s5808 = scalar_lea.hbm %s7, %s5807
          %s5809 = sshll.u32 %s5800, 4
          %s5810 = int_to_ptr.vmem [resolvable:$true] %s5809
          %s5811 = sshll.u32 %s5808, 4
          %s5812 = int_to_ptr.hbm [resolvable:$true] %s5811
          %5817 = dma.vmem_to_hbm [thread:$0]  %s5810, 4096, %s5812, %s5797, 128, 128, 8
        $region52: #{tpu_custom_call.1} parent=47 // pred_fallthru
          _
      $region48: #{tpu_custom_call.1} parent=5 // pred_fallthru
        _
      %p5818 = scmp.le.s32.totalorder 2, %s16
      // Predicated region
      $region53: #{tpu_custom_call.1} parent=5 // pred_check
        %p5819 = pneg %p5818
      $region54: #{tpu_custom_call.1} parent=5 // pred_check_branch
        %5821 = sbr.rel (%p5819) target = $region56
      $region55: #{tpu_custom_call.1} parent=5 // pred_region
        %s5822 = ssub.s32 %s16, 2
        // Predicated region
        $region57: #{tpu_custom_call.1} parent=55 // pred_check
          %p5823 = pneg %p197
        $region58: #{tpu_custom_call.1} parent=55 // pred_check_branch
          %5825 = sbr.rel (%p5823) target = $region60
        $region59: #{tpu_custom_call.1} parent=55 // pred_region
          %s5826 = sand.u32 %s182, 1
          %s5827 = scalar_lea.sflag [#allocation3], %s5826
          %s5828 = sand.u32 %s182, 1
          %s5829 = smul.addr %s5828, 256
          %s5830 = scalar_lea.vmem [#allocation2], %s5829
          %5832 = dma.done %s5827, 4096
        $region60: #{tpu_custom_call.1} parent=55 // pred_fallthru
          _
      $region56: #{tpu_custom_call.1} parent=5 // pred_fallthru
        _
    $region6: #{tpu_custom_call.1} parent=1 // loop_footer
      %s20 = sadd.s32 1, %s16
    $region7: #{tpu_custom_call.1} parent=1 // loop_footer_branch
      %15 = sbr.rel target = $region3
    $region8: #{tpu_custom_call.1} parent=1 // loop_exit
      _
    %5833 = vsyncpa [#allocation3], 1
    %s5834 = scalar_lea.sflag [#allocation3], 1
    %5835 = vsyncpa %s5834, 1

</llo_original>
